<compile_context>
chip_gen: v5e
topology: v5e:2x2
jax: 0.10.0
libtpu: 0.0.40
codegen_flags: <defaults>
</compile_context>

<pallas_src>
import math

import jax
import jax.numpy as jnp
from jax.experimental import pallas as pl
from jax.experimental.pallas import tpu as pltpu  # noqa: F401 (kept for TPU-specific tuning hooks)

# ----------------------- model hyperparameters (small) -----------------------
B = 2            # batch
S = 8            # max_length (seq len, padded)
H = 32           # hidden size
NH = 4           # attention heads
DH = H // NH     # head dim
I = 64           # FFN intermediate size
V = 100          # vocab size
VP = 128         # vocab padded to lane width for the in-kernel one-hot gather
NLAYERS = 2
LN_EPS = 1e-12
BS = B * S


# ------------------------------ kernel helpers -------------------------------
def _layer_norm(x, gamma, beta):
    # x: (BS, H) f32, gamma/beta: (1, H) f32
    mu = jnp.mean(x, axis=-1, keepdims=True)
    xc = x - mu
    var = jnp.mean(xc * xc, axis=-1, keepdims=True)
    return xc * jax.lax.rsqrt(var + LN_EPS) * gamma + beta


# ------------------------------ fused Pallas kernel ---------------------------
def bert_fwd_kernel(ids_ref, wemb_ref, pos_type_ref, eg_ref, eb_ref,
                    wqkv_ref, bqkv_ref, wo_ref, bo_ref,
                    g1_ref, be1_ref, w1_ref, bf1_ref, w2_ref, bf2_ref,
                    g2_ref, be2_ref, o_ref):
    """Entire BERT forward for all B*S tokens in one invocation.

    Shapes (all VMEM-resident, whole-array blocks):
      ids_ref      (BS, 1)  int32
      wemb_ref     (VP, H)  f32      (vocab table, lane-padded to 128 rows)
      pos_type_ref (BS, H)  f32      (positional + token-type embeddings)
      eg/eb        (1, H)   f32
      wqkv_ref     (L, 3*NH, H, DH)  bf16   (scale folded into the q block)
      bqkv_ref     (L, 3*NH, 1, DH)  f32
      wo_ref       (L, NH, DH, H)    bf16
      bo/g1/be1/bf2/g2/be2 (L, 1, H) f32
      w1_ref       (L, H, I) bf16,  bf1_ref (L, 1, I) f32
      w2_ref       (L, I, H) bf16
      o_ref        (BS, H)  f32
    """
    # ---- embedding: one-hot gather on the MXU + pos/type add + LayerNorm ----
    ids = ids_ref[...]                                               # (BS, 1)
    vocab_iota = jax.lax.broadcasted_iota(jnp.int32, (BS, VP), 1)
    onehot = (vocab_iota == ids).astype(jnp.float32)                 # (BS, VP)
    emb = jnp.dot(onehot, wemb_ref[...],
                  preferred_element_type=jnp.float32)                # (BS, H)
    emb = emb + pos_type_ref[...]
    x = _layer_norm(emb, eg_ref[...], eb_ref[...])                   # (BS, H) f32

    # ---- encoder layers (static in-kernel loop, weights already resident) ---
    for l in range(NLAYERS):
        wqkv = wqkv_ref[l]                                           # (3NH, H, DH) bf16
        bqkv = bqkv_ref[l]                                           # (3NH, 1, DH) f32
        wo = wo_ref[l]                                               # (NH, DH, H) bf16

        # --- multi-head self-attention (per batch element; no mask, matching
        #     bert_model(input_ids=tokens) with no attention_mask) ---
        attn_parts = []
        for b in range(B):                                           # static, B=2
            xb = x[b * S:(b + 1) * S, :].astype(jnp.bfloat16)        # (S, H) sublane slice
            xh = jnp.broadcast_to(xb[None, :, :], (3 * NH, S, H))    # head-batched lhs
            qkv = jnp.einsum('hsd,hde->hse', xh, wqkv,
                             preferred_element_type=jnp.float32) + bqkv
            q = qkv[:NH]                  # (NH, S, DH); 1/sqrt(DH) folded into wq/bq
            k = qkv[NH:2 * NH]
            v = qkv[2 * NH:]

            s = jnp.einsum('hqd,hkd->hqk',
                           q.astype(jnp.bfloat16), k.astype(jnp.bfloat16),
                           preferred_element_type=jnp.float32)       # (NH, S, S)
            s = s - jnp.max(s, axis=-1, keepdims=True)
            p = jnp.exp(s)
            p = p * pl.reciprocal(jnp.sum(p, axis=-1, keepdims=True), approx=True)

            ctx = jnp.einsum('hqk,hkd->hqd',
                             p.astype(jnp.bfloat16), v.astype(jnp.bfloat16),
                             preferred_element_type=jnp.float32)     # (NH, S, DH)
            ab = jnp.einsum('hqd,hde->hqe',
                            ctx.astype(jnp.bfloat16), wo,
                            preferred_element_type=jnp.float32).sum(axis=0)  # (S, H)
            attn_parts.append(ab)

        attn = jnp.concatenate(attn_parts, axis=0) + bo_ref[l]       # (BS, H)
        x = _layer_norm(x + attn, g1_ref[l], be1_ref[l])

        # --- feed-forward network ---
        h1 = jnp.dot(x.astype(jnp.bfloat16), w1_ref[l],
                     preferred_element_type=jnp.float32) + bf1_ref[l]
        h1 = jax.nn.gelu(h1, approximate=True)   # TODO(synk): HF uses exact erf GELU
        h2 = jnp.dot(h1.astype(jnp.bfloat16), w2_ref[l],
                     preferred_element_type=jnp.float32) + bf2_ref[l]
        x = _layer_norm(x + h2, g2_ref[l], be2_ref[l])

    o_ref[...] = x.astype(o_ref.dtype)


# ----------------------------- parameter creation -----------------------------
def init_params(key):
    """Natural BERT layout, f32 (same as the original module's weight shapes)."""
    std = 0.02
    ks = iter(jax.random.split(key, 8 + NLAYERS * 16))

    def nrm(shape):
        return (std * jax.random.normal(next(ks), shape)).astype(jnp.float32)

    params = {
        "word_emb": nrm((V, H)),
        "pos_emb": nrm((S, H)),
        "type_emb": nrm((2, H)),
        "emb_ln_g": jnp.ones((1, H), jnp.float32),
        "emb_ln_b": jnp.zeros((1, H), jnp.float32),
        "layers": [],
    }
    for _ in range(NLAYERS):
        layer = {
            "wq": nrm((H, H)), "bq": jnp.zeros((1, H), jnp.float32),
            "wk": nrm((H, H)), "bk": jnp.zeros((1, H), jnp.float32),
            "wv": nrm((H, H)), "bv": jnp.zeros((1, H), jnp.float32),
            "wo": nrm((H, H)), "bo": jnp.zeros((1, H), jnp.float32),
            "g1": jnp.ones((1, H), jnp.float32), "be1": jnp.zeros((1, H), jnp.float32),
            "w1": nrm((H, I)), "bf1": jnp.zeros((1, I), jnp.float32),
            "w2": nrm((I, H)), "bf2": jnp.zeros((1, H), jnp.float32),
            "g2": jnp.ones((1, H), jnp.float32), "be2": jnp.zeros((1, H), jnp.float32),
        }
        params["layers"].append(layer)
    return params


def _pack_params(params):
    """Trace-time repack into the fused-kernel layout: head-batched, scale-folded,
    layer-stacked, matmul weights cast to bf16.  Runs under jit outside the kernel."""
    scale = 1.0 / math.sqrt(DH)

    def heads_w(w):                      # (H, NH*DH) -> (NH, H, DH)
        return jnp.transpose(w.reshape(H, NH, DH), (1, 0, 2))

    def heads_b(bias):                   # (1, NH*DH) -> (NH, 1, DH)
        return jnp.transpose(bias.reshape(1, NH, DH), (1, 0, 2))

    wqkv, bqkv, wo, bo = [], [], [], []
    g1, be1, w1, bf1, w2, bf2, g2, be2 = ([] for _ in range(8))
    for lp in params["layers"]:
        wqkv.append(jnp.concatenate(
            [heads_w(lp["wq"]) * scale, heads_w(lp["wk"]), heads_w(lp["wv"])],
            axis=0).astype(jnp.bfloat16))                           # (3NH, H, DH)
        bqkv.append(jnp.concatenate(
            [heads_b(lp["bq"]) * scale, heads_b(lp["bk"]), heads_b(lp["bv"])],
            axis=0).astype(jnp.float32))                            # (3NH, 1, DH)
        wo.append(lp["wo"].reshape(NH, DH, H).astype(jnp.bfloat16))
        bo.append(lp["bo"])
        g1.append(lp["g1"]); be1.append(lp["be1"])
        w1.append(lp["w1"].astype(jnp.bfloat16)); bf1.append(lp["bf1"])
        w2.append(lp["w2"].astype(jnp.bfloat16)); bf2.append(lp["bf2"])
        g2.append(lp["g2"]); be2.append(lp["be2"])

    stk = lambda xs: jnp.stack(xs, axis=0)
    wemb = jnp.zeros((VP, H), jnp.float32).at[:V].set(params["word_emb"])
    pos_type = (jnp.tile(params["pos_emb"], (B, 1))
                + params["type_emb"][0][None, :]).astype(jnp.float32)   # (BS, H)
    return dict(
        wemb=wemb, pos_type=pos_type,
        eg=params["emb_ln_g"], eb=params["emb_ln_b"],
        wqkv=stk(wqkv), bqkv=stk(bqkv), wo=stk(wo), bo=stk(bo),
        g1=stk(g1), be1=stk(be1), w1=stk(w1), bf1=stk(bf1),
        w2=stk(w2), bf2=stk(bf2), g2=stk(g2), be2=stk(be2))


# ------------------------------ full forward pass ------------------------------
@jax.jit
def bert_embedder_forward(token_ids, params):
    """token_ids: (B, S) int32 -> last_hidden_state (B, S, H) float32."""
    p = _pack_params(params)
    ids = token_ids.reshape(BS, 1).astype(jnp.int32)

    # Single fused kernel, no grid: every operand fits in VMEM whole on
    # v5e/v6e/v7x (total footprint << 1 MiB), so whole-array blocks are used.
    # (For v7x one could add grid=(B,) with dimension_semantics=("parallel",)
    #  to split batch across the two TensorCores once per-call overhead is
    #  amortized; at B=2 / this size a single step is fastest.)
    out = pl.pallas_call(
        bert_fwd_kernel,
        out_shape=jax.ShapeDtypeStruct((BS, H), jnp.float32),
    )(ids, p["wemb"], p["pos_type"], p["eg"], p["eb"],
      p["wqkv"], p["bqkv"], p["wo"], p["bo"],
      p["g1"], p["be1"], p["w1"], p["bf1"],
      p["w2"], p["bf2"], p["g2"], p["be2"])

    return out.reshape(B, S, H)                                     # last_hidden_state


# ------------------------------------ main ------------------------------------
if __name__ == "__main__":
    key = jax.random.PRNGKey(0)
    k_tok, k_par = jax.random.split(key)

    # "tokenized text": deterministic token ids padded to max_length S
    token_ids = jax.random.randint(k_tok, (B, S), minval=0, maxval=V, dtype=jnp.int32)
    params = init_params(k_par)

    z = bert_embedder_forward(token_ids, params)
    z = jax.block_until_ready(z)

    assert z.shape == (B, S, H), z.shape
    assert z.dtype == jnp.float32
    assert bool(jnp.all(jnp.isfinite(z)))
    print("KERNEL_OK")
</pallas_src>

<mosaic_0001>
module attributes {stable_mosaic.version = 11 : i64} {
  func.func @bert_fwd_kernel(%arg0: memref<16x1xi32, #tpu.memory_space<vmem>>, %arg1: memref<128x32xf32, #tpu.memory_space<vmem>>, %arg2: memref<16x32xf32, #tpu.memory_space<vmem>>, %arg3: memref<1x32xf32, #tpu.memory_space<vmem>>, %arg4: memref<1x32xf32, #tpu.memory_space<vmem>>, %arg5: memref<2x12x32x8xbf16, #tpu.memory_space<vmem>>, %arg6: memref<2x12x1x8xf32, #tpu.memory_space<vmem>>, %arg7: memref<2x4x8x32xbf16, #tpu.memory_space<vmem>>, %arg8: memref<2x1x32xf32, #tpu.memory_space<vmem>>, %arg9: memref<2x1x32xf32, #tpu.memory_space<vmem>>, %arg10: memref<2x1x32xf32, #tpu.memory_space<vmem>>, %arg11: memref<2x32x64xbf16, #tpu.memory_space<vmem>>, %arg12: memref<2x1x64xf32, #tpu.memory_space<vmem>>, %arg13: memref<2x64x32xbf16, #tpu.memory_space<vmem>>, %arg14: memref<2x1x32xf32, #tpu.memory_space<vmem>>, %arg15: memref<2x1x32xf32, #tpu.memory_space<vmem>>, %arg16: memref<2x1x32xf32, #tpu.memory_space<vmem>>, %arg17: memref<16x32xf32, #tpu.memory_space<vmem>>) attributes {dimension_semantics = [], scalar_prefetch = 0 : i64, scratch_operands = 0 : i64, tpu.core_type = #tpu.core_type<tc>} {
    %c0 = arith.constant 0 : index
    %c0_0 = arith.constant 0 : index
    %0 = vector.load %arg0[%c0, %c0_0] : memref<16x1xi32, #tpu.memory_space<vmem>>, vector<16x1xi32>
    %1 = tpu.iota {dimensions = array<i32: 1>} : vector<16x128xi32>
    %2 = vector.broadcast %0 : vector<16x1xi32> to vector<16x128xi32>
    %3 = arith.cmpi eq, %1, %2 : vector<16x128xi32>
    %4 = arith.extui %3 : vector<16x128xi1> to vector<16x128xi32>
    %5 = arith.sitofp %4 : vector<16x128xi32> to vector<16x128xf32>
    %c0_1 = arith.constant 0 : index
    %c0_2 = arith.constant 0 : index
    %6 = vector.load %arg1[%c0_1, %c0_2] : memref<128x32xf32, #tpu.memory_space<vmem>>, vector<128x32xf32>
    %cst = arith.constant dense<0.000000e+00> : vector<16x32xf32>
    %7 = tpu.matmul %5, %6, %cst {dimension_numbers = #tpu.dot_dimension_numbers<[1], [0], [0], [1], [0, 0, 1, 1], [], []>} : vector<16x128xf32>, vector<128x32xf32>, vector<16x32xf32> -> vector<16x32xf32>
    %c0_3 = arith.constant 0 : index
    %c0_4 = arith.constant 0 : index
    %8 = vector.load %arg2[%c0_3, %c0_4] : memref<16x32xf32, #tpu.memory_space<vmem>>, vector<16x32xf32>
    %9 = arith.addf %7, %8 : vector<16x32xf32>
    %c0_5 = arith.constant 0 : index
    %c0_6 = arith.constant 0 : index
    %10 = vector.load %arg3[%c0_5, %c0_6] : memref<1x32xf32, #tpu.memory_space<vmem>>, vector<1x32xf32>
    %c0_7 = arith.constant 0 : index
    %c0_8 = arith.constant 0 : index
    %11 = vector.load %arg4[%c0_7, %c0_8] : memref<1x32xf32, #tpu.memory_space<vmem>>, vector<1x32xf32>
    %cst_9 = arith.constant dense<0.000000e+00> : vector<16xf32>
    %12 = vector.multi_reduction <add>, %9, %cst_9 [1] : vector<16x32xf32> to vector<16xf32>
    %13 = vector.shape_cast %12 : vector<16xf32> to vector<16x1xf32>
    %cst_10 = arith.constant 3.200000e+01 : f32
    %14 = vector.broadcast %cst_10 : f32 to vector<16x1xf32>
    %15 = arith.divf %13, %14 : vector<16x1xf32>
    %16 = vector.broadcast %15 : vector<16x1xf32> to vector<16x32xf32>
    %17 = arith.subf %9, %16 : vector<16x32xf32>
    %18 = arith.mulf %17, %17 : vector<16x32xf32>
    %cst_11 = arith.constant dense<0.000000e+00> : vector<16xf32>
    %19 = vector.multi_reduction <add>, %18, %cst_11 [1] : vector<16x32xf32> to vector<16xf32>
    %20 = vector.shape_cast %19 : vector<16xf32> to vector<16x1xf32>
    %cst_12 = arith.constant 3.200000e+01 : f32
    %21 = vector.broadcast %cst_12 : f32 to vector<16x1xf32>
    %22 = arith.divf %20, %21 : vector<16x1xf32>
    %cst_13 = arith.constant 9.99999996E-13 : f32
    %23 = vector.broadcast %cst_13 : f32 to vector<16x1xf32>
    %24 = arith.addf %22, %23 : vector<16x1xf32>
    %25 = math.rsqrt %24 : vector<16x1xf32>
    %26 = vector.broadcast %25 : vector<16x1xf32> to vector<16x32xf32>
    %27 = arith.mulf %17, %26 : vector<16x32xf32>
    %28 = vector.broadcast %10 : vector<1x32xf32> to vector<16x32xf32>
    %29 = arith.mulf %27, %28 : vector<16x32xf32>
    %30 = vector.broadcast %11 : vector<1x32xf32> to vector<16x32xf32>
    %31 = arith.addf %29, %30 : vector<16x32xf32>
    %c0_14 = arith.constant 0 : index
    %c0_15 = arith.constant 0 : index
    %c0_16 = arith.constant 0 : index
    %c0_17 = arith.constant 0 : index
    %32 = vector.load %arg5[%c0_14, %c0_15, %c0_16, %c0_17] : memref<2x12x32x8xbf16, #tpu.memory_space<vmem>>, vector<1x12x32x8xbf16>
    %33 = vector.shape_cast %32 : vector<1x12x32x8xbf16> to vector<12x32x8xbf16>
    %c0_18 = arith.constant 0 : index
    %c0_19 = arith.constant 0 : index
    %c0_20 = arith.constant 0 : index
    %c0_21 = arith.constant 0 : index
    %34 = vector.load %arg6[%c0_18, %c0_19, %c0_20, %c0_21] : memref<2x12x1x8xf32, #tpu.memory_space<vmem>>, vector<1x12x1x8xf32>
    %35 = vector.shape_cast %34 : vector<1x12x1x8xf32> to vector<12x1x8xf32>
    %c0_22 = arith.constant 0 : index
    %c0_23 = arith.constant 0 : index
    %c0_24 = arith.constant 0 : index
    %c0_25 = arith.constant 0 : index
    %36 = vector.load %arg7[%c0_22, %c0_23, %c0_24, %c0_25] : memref<2x4x8x32xbf16, #tpu.memory_space<vmem>>, vector<1x4x8x32xbf16>
    %37 = vector.shape_cast %36 : vector<1x4x8x32xbf16> to vector<4x8x32xbf16>
    %38 = vector.extract_strided_slice %31 {offsets = [0, 0], sizes = [8, 32], strides = [1, 1]} : vector<16x32xf32> to vector<8x32xf32>
    %39 = arith.truncf %38 : vector<8x32xf32> to vector<8x32xbf16>
    %40 = vector.shape_cast %39 : vector<8x32xbf16> to vector<1x8x32xbf16>
    %41 = vector.shape_cast %40 : vector<1x8x32xbf16> to vector<1x8x32xbf16>
    %42 = vector.broadcast %41 : vector<1x8x32xbf16> to vector<12x8x32xbf16>
    "tpu.trace_start"() <{level = 10 : i32, message = "hsd,hde->hse"}> : () -> ()
    %cst_26 = arith.constant dense<0.000000e+00> : vector<12x8x8xf32>
    %43 = tpu.matmul %42, %33, %cst_26 {dimension_numbers = #tpu.dot_dimension_numbers<[2], [1], [1], [2], [0, 0, 0, 1, 1, 2], [0], [0]>} : vector<12x8x32xbf16>, vector<12x32x8xbf16>, vector<12x8x8xf32> -> vector<12x8x8xf32>
    "tpu.trace_stop"() : () -> ()
    %44 = vector.broadcast %35 : vector<12x1x8xf32> to vector<12x8x8xf32>
    %45 = arith.addf %43, %44 : vector<12x8x8xf32>
    %46 = vector.extract_strided_slice %45 {offsets = [0, 0, 0], sizes = [4, 8, 8], strides = [1, 1, 1]} : vector<12x8x8xf32> to vector<4x8x8xf32>
    %47 = vector.extract_strided_slice %45 {offsets = [4, 0, 0], sizes = [4, 8, 8], strides = [1, 1, 1]} : vector<12x8x8xf32> to vector<4x8x8xf32>
    %48 = vector.extract_strided_slice %45 {offsets = [8, 0, 0], sizes = [4, 8, 8], strides = [1, 1, 1]} : vector<12x8x8xf32> to vector<4x8x8xf32>
    %49 = arith.truncf %46 : vector<4x8x8xf32> to vector<4x8x8xbf16>
    %50 = arith.truncf %47 : vector<4x8x8xf32> to vector<4x8x8xbf16>
    "tpu.trace_start"() <{level = 10 : i32, message = "hqd,hkd->hqk"}> : () -> ()
    %cst_27 = arith.constant dense<0.000000e+00> : vector<4x8x8xf32>
    %51 = tpu.matmul %49, %50, %cst_27 {dimension_numbers = #tpu.dot_dimension_numbers<[2], [2], [1], [1], [0, 0, 0, 1, 1, 1], [0], [0]>} : vector<4x8x8xbf16>, vector<4x8x8xbf16>, vector<4x8x8xf32> -> vector<4x8x8xf32>
    "tpu.trace_stop"() : () -> ()
    %cst_28 = arith.constant dense<0xFF800000> : vector<4x8xf32>
    %52 = vector.multi_reduction <maximumf>, %51, %cst_28 [2] : vector<4x8x8xf32> to vector<4x8xf32>
    %53 = vector.shape_cast %52 : vector<4x8xf32> to vector<4x8x1xf32>
    %54 = vector.broadcast %53 : vector<4x8x1xf32> to vector<4x8x8xf32>
    %55 = arith.subf %51, %54 : vector<4x8x8xf32>
    %56 = math.exp %55 : vector<4x8x8xf32>
    %cst_29 = arith.constant dense<0.000000e+00> : vector<4x8xf32>
    %57 = vector.multi_reduction <add>, %56, %cst_29 [2] : vector<4x8x8xf32> to vector<4x8xf32>
    %58 = vector.shape_cast %57 : vector<4x8xf32> to vector<4x8x1xf32>
    %59 = tpu.reciprocal %58 {approx = true} : vector<4x8x1xf32> -> vector<4x8x1xf32>
    %60 = vector.broadcast %59 : vector<4x8x1xf32> to vector<4x8x8xf32>
    %61 = arith.mulf %56, %60 : vector<4x8x8xf32>
    %62 = arith.truncf %61 : vector<4x8x8xf32> to vector<4x8x8xbf16>
    %63 = arith.truncf %48 : vector<4x8x8xf32> to vector<4x8x8xbf16>
    "tpu.trace_start"() <{level = 10 : i32, message = "hqk,hkd->hqd"}> : () -> ()
    %cst_30 = arith.constant dense<0.000000e+00> : vector<4x8x8xf32>
    %64 = tpu.matmul %62, %63, %cst_30 {dimension_numbers = #tpu.dot_dimension_numbers<[2], [1], [1], [2], [0, 0, 0, 1, 1, 2], [0], [0]>} : vector<4x8x8xbf16>, vector<4x8x8xbf16>, vector<4x8x8xf32> -> vector<4x8x8xf32>
    "tpu.trace_stop"() : () -> ()
    %65 = arith.truncf %64 : vector<4x8x8xf32> to vector<4x8x8xbf16>
    "tpu.trace_start"() <{level = 10 : i32, message = "hqd,hde->hqe"}> : () -> ()
    %cst_31 = arith.constant dense<0.000000e+00> : vector<4x8x32xf32>
    %66 = tpu.matmul %65, %37, %cst_31 {dimension_numbers = #tpu.dot_dimension_numbers<[2], [1], [1], [2], [0, 0, 0, 1, 1, 2], [0], [0]>} : vector<4x8x8xbf16>, vector<4x8x32xbf16>, vector<4x8x32xf32> -> vector<4x8x32xf32>
    "tpu.trace_stop"() : () -> ()
    %cst_32 = arith.constant dense<0.000000e+00> : vector<8x32xf32>
    %67 = vector.multi_reduction <add>, %66, %cst_32 [0] : vector<4x8x32xf32> to vector<8x32xf32>
    %68 = vector.extract_strided_slice %31 {offsets = [8, 0], sizes = [8, 32], strides = [1, 1]} : vector<16x32xf32> to vector<8x32xf32>
    %69 = arith.truncf %68 : vector<8x32xf32> to vector<8x32xbf16>
    %70 = vector.shape_cast %69 : vector<8x32xbf16> to vector<1x8x32xbf16>
    %71 = vector.shape_cast %70 : vector<1x8x32xbf16> to vector<1x8x32xbf16>
    %72 = vector.broadcast %71 : vector<1x8x32xbf16> to vector<12x8x32xbf16>
    "tpu.trace_start"() <{level = 10 : i32, message = "hsd,hde->hse"}> : () -> ()
    %cst_33 = arith.constant dense<0.000000e+00> : vector<12x8x8xf32>
    %73 = tpu.matmul %72, %33, %cst_33 {dimension_numbers = #tpu.dot_dimension_numbers<[2], [1], [1], [2], [0, 0, 0, 1, 1, 2], [0], [0]>} : vector<12x8x32xbf16>, vector<12x32x8xbf16>, vector<12x8x8xf32> -> vector<12x8x8xf32>
    "tpu.trace_stop"() : () -> ()
    %74 = vector.broadcast %35 : vector<12x1x8xf32> to vector<12x8x8xf32>
    %75 = arith.addf %73, %74 : vector<12x8x8xf32>
    %76 = vector.extract_strided_slice %75 {offsets = [0, 0, 0], sizes = [4, 8, 8], strides = [1, 1, 1]} : vector<12x8x8xf32> to vector<4x8x8xf32>
    %77 = vector.extract_strided_slice %75 {offsets = [4, 0, 0], sizes = [4, 8, 8], strides = [1, 1, 1]} : vector<12x8x8xf32> to vector<4x8x8xf32>
    %78 = vector.extract_strided_slice %75 {offsets = [8, 0, 0], sizes = [4, 8, 8], strides = [1, 1, 1]} : vector<12x8x8xf32> to vector<4x8x8xf32>
    %79 = arith.truncf %76 : vector<4x8x8xf32> to vector<4x8x8xbf16>
    %80 = arith.truncf %77 : vector<4x8x8xf32> to vector<4x8x8xbf16>
    "tpu.trace_start"() <{level = 10 : i32, message = "hqd,hkd->hqk"}> : () -> ()
    %cst_34 = arith.constant dense<0.000000e+00> : vector<4x8x8xf32>
    %81 = tpu.matmul %79, %80, %cst_34 {dimension_numbers = #tpu.dot_dimension_numbers<[2], [2], [1], [1], [0, 0, 0, 1, 1, 1], [0], [0]>} : vector<4x8x8xbf16>, vector<4x8x8xbf16>, vector<4x8x8xf32> -> vector<4x8x8xf32>
    "tpu.trace_stop"() : () -> ()
    %cst_35 = arith.constant dense<0xFF800000> : vector<4x8xf32>
    %82 = vector.multi_reduction <maximumf>, %81, %cst_35 [2] : vector<4x8x8xf32> to vector<4x8xf32>
    %83 = vector.shape_cast %82 : vector<4x8xf32> to vector<4x8x1xf32>
    %84 = vector.broadcast %83 : vector<4x8x1xf32> to vector<4x8x8xf32>
    %85 = arith.subf %81, %84 : vector<4x8x8xf32>
    %86 = math.exp %85 : vector<4x8x8xf32>
    %cst_36 = arith.constant dense<0.000000e+00> : vector<4x8xf32>
    %87 = vector.multi_reduction <add>, %86, %cst_36 [2] : vector<4x8x8xf32> to vector<4x8xf32>
    %88 = vector.shape_cast %87 : vector<4x8xf32> to vector<4x8x1xf32>
    %89 = tpu.reciprocal %88 {approx = true} : vector<4x8x1xf32> -> vector<4x8x1xf32>
    %90 = vector.broadcast %89 : vector<4x8x1xf32> to vector<4x8x8xf32>
    %91 = arith.mulf %86, %90 : vector<4x8x8xf32>
    %92 = arith.truncf %91 : vector<4x8x8xf32> to vector<4x8x8xbf16>
    %93 = arith.truncf %78 : vector<4x8x8xf32> to vector<4x8x8xbf16>
    "tpu.trace_start"() <{level = 10 : i32, message = "hqk,hkd->hqd"}> : () -> ()
    %cst_37 = arith.constant dense<0.000000e+00> : vector<4x8x8xf32>
    %94 = tpu.matmul %92, %93, %cst_37 {dimension_numbers = #tpu.dot_dimension_numbers<[2], [1], [1], [2], [0, 0, 0, 1, 1, 2], [0], [0]>} : vector<4x8x8xbf16>, vector<4x8x8xbf16>, vector<4x8x8xf32> -> vector<4x8x8xf32>
    "tpu.trace_stop"() : () -> ()
    %95 = arith.truncf %94 : vector<4x8x8xf32> to vector<4x8x8xbf16>
    "tpu.trace_start"() <{level = 10 : i32, message = "hqd,hde->hqe"}> : () -> ()
    %cst_38 = arith.constant dense<0.000000e+00> : vector<4x8x32xf32>
    %96 = tpu.matmul %95, %37, %cst_38 {dimension_numbers = #tpu.dot_dimension_numbers<[2], [1], [1], [2], [0, 0, 0, 1, 1, 2], [0], [0]>} : vector<4x8x8xbf16>, vector<4x8x32xbf16>, vector<4x8x32xf32> -> vector<4x8x32xf32>
    "tpu.trace_stop"() : () -> ()
    %cst_39 = arith.constant dense<0.000000e+00> : vector<8x32xf32>
    %97 = vector.multi_reduction <add>, %96, %cst_39 [0] : vector<4x8x32xf32> to vector<8x32xf32>
    %98 = tpu.concatenate %67, %97 in 0 : vector<8x32xf32>, vector<8x32xf32> -> vector<16x32xf32>
    %c0_40 = arith.constant 0 : index
    %c0_41 = arith.constant 0 : index
    %c0_42 = arith.constant 0 : index
    %99 = vector.load %arg8[%c0_40, %c0_41, %c0_42] : memref<2x1x32xf32, #tpu.memory_space<vmem>>, vector<1x1x32xf32>
    %100 = vector.shape_cast %99 : vector<1x1x32xf32> to vector<1x32xf32>
    %101 = vector.broadcast %100 : vector<1x32xf32> to vector<16x32xf32>
    %102 = arith.addf %98, %101 : vector<16x32xf32>
    %103 = arith.addf %31, %102 : vector<16x32xf32>
    %c0_43 = arith.constant 0 : index
    %c0_44 = arith.constant 0 : index
    %c0_45 = arith.constant 0 : index
    %104 = vector.load %arg9[%c0_43, %c0_44, %c0_45] : memref<2x1x32xf32, #tpu.memory_space<vmem>>, vector<1x1x32xf32>
    %105 = vector.shape_cast %104 : vector<1x1x32xf32> to vector<1x32xf32>
    %c0_46 = arith.constant 0 : index
    %c0_47 = arith.constant 0 : index
    %c0_48 = arith.constant 0 : index
    %106 = vector.load %arg10[%c0_46, %c0_47, %c0_48] : memref<2x1x32xf32, #tpu.memory_space<vmem>>, vector<1x1x32xf32>
    %107 = vector.shape_cast %106 : vector<1x1x32xf32> to vector<1x32xf32>
    %cst_49 = arith.constant dense<0.000000e+00> : vector<16xf32>
    %108 = vector.multi_reduction <add>, %103, %cst_49 [1] : vector<16x32xf32> to vector<16xf32>
    %109 = vector.shape_cast %108 : vector<16xf32> to vector<16x1xf32>
    %cst_50 = arith.constant 3.200000e+01 : f32
    %110 = vector.broadcast %cst_50 : f32 to vector<16x1xf32>
    %111 = arith.divf %109, %110 : vector<16x1xf32>
    %112 = vector.broadcast %111 : vector<16x1xf32> to vector<16x32xf32>
    %113 = arith.subf %103, %112 : vector<16x32xf32>
    %114 = arith.mulf %113, %113 : vector<16x32xf32>
    %cst_51 = arith.constant dense<0.000000e+00> : vector<16xf32>
    %115 = vector.multi_reduction <add>, %114, %cst_51 [1] : vector<16x32xf32> to vector<16xf32>
    %116 = vector.shape_cast %115 : vector<16xf32> to vector<16x1xf32>
    %cst_52 = arith.constant 3.200000e+01 : f32
    %117 = vector.broadcast %cst_52 : f32 to vector<16x1xf32>
    %118 = arith.divf %116, %117 : vector<16x1xf32>
    %cst_53 = arith.constant 9.99999996E-13 : f32
    %119 = vector.broadcast %cst_53 : f32 to vector<16x1xf32>
    %120 = arith.addf %118, %119 : vector<16x1xf32>
    %121 = math.rsqrt %120 : vector<16x1xf32>
    %122 = vector.broadcast %121 : vector<16x1xf32> to vector<16x32xf32>
    %123 = arith.mulf %113, %122 : vector<16x32xf32>
    %124 = vector.broadcast %105 : vector<1x32xf32> to vector<16x32xf32>
    %125 = arith.mulf %123, %124 : vector<16x32xf32>
    %126 = vector.broadcast %107 : vector<1x32xf32> to vector<16x32xf32>
    %127 = arith.addf %125, %126 : vector<16x32xf32>
    %128 = arith.truncf %127 : vector<16x32xf32> to vector<16x32xbf16>
    %c0_54 = arith.constant 0 : index
    %c0_55 = arith.constant 0 : index
    %c0_56 = arith.constant 0 : index
    %129 = vector.load %arg11[%c0_54, %c0_55, %c0_56] : memref<2x32x64xbf16, #tpu.memory_space<vmem>>, vector<1x32x64xbf16>
    %130 = vector.shape_cast %129 : vector<1x32x64xbf16> to vector<32x64xbf16>
    %cst_57 = arith.constant dense<0.000000e+00> : vector<16x64xf32>
    %131 = tpu.matmul %128, %130, %cst_57 {dimension_numbers = #tpu.dot_dimension_numbers<[1], [0], [0], [1], [0, 0, 1, 1], [], []>} : vector<16x32xbf16>, vector<32x64xbf16>, vector<16x64xf32> -> vector<16x64xf32>
    %c0_58 = arith.constant 0 : index
    %c0_59 = arith.constant 0 : index
    %c0_60 = arith.constant 0 : index
    %132 = vector.load %arg12[%c0_58, %c0_59, %c0_60] : memref<2x1x64xf32, #tpu.memory_space<vmem>>, vector<1x1x64xf32>
    %133 = vector.shape_cast %132 : vector<1x1x64xf32> to vector<1x64xf32>
    %134 = vector.broadcast %133 : vector<1x64xf32> to vector<16x64xf32>
    %135 = arith.addf %131, %134 : vector<16x64xf32>
    %136 = arith.mulf %135, %135 : vector<16x64xf32>
    %137 = arith.mulf %135, %136 : vector<16x64xf32>
    %cst_61 = arith.constant 4.471500e-02 : f32
    %138 = vector.broadcast %cst_61 : f32 to vector<16x64xf32>
    %139 = arith.mulf %138, %137 : vector<16x64xf32>
    %140 = arith.addf %135, %139 : vector<16x64xf32>
    %cst_62 = arith.constant 0.797884583 : f32
    %141 = vector.broadcast %cst_62 : f32 to vector<16x64xf32>
    %142 = arith.mulf %141, %140 : vector<16x64xf32>
    %143 = math.tanh %142 : vector<16x64xf32>
    %cst_63 = arith.constant 1.000000e+00 : f32
    %144 = vector.broadcast %cst_63 : f32 to vector<16x64xf32>
    %145 = arith.addf %144, %143 : vector<16x64xf32>
    %cst_64 = arith.constant 5.000000e-01 : f32
    %146 = vector.broadcast %cst_64 : f32 to vector<16x64xf32>
    %147 = arith.mulf %146, %145 : vector<16x64xf32>
    %148 = arith.mulf %135, %147 : vector<16x64xf32>
    %149 = arith.truncf %148 : vector<16x64xf32> to vector<16x64xbf16>
    %c0_65 = arith.constant 0 : index
    %c0_66 = arith.constant 0 : index
    %c0_67 = arith.constant 0 : index
    %150 = vector.load %arg13[%c0_65, %c0_66, %c0_67] : memref<2x64x32xbf16, #tpu.memory_space<vmem>>, vector<1x64x32xbf16>
    %151 = vector.shape_cast %150 : vector<1x64x32xbf16> to vector<64x32xbf16>
    %cst_68 = arith.constant dense<0.000000e+00> : vector<16x32xf32>
    %152 = tpu.matmul %149, %151, %cst_68 {dimension_numbers = #tpu.dot_dimension_numbers<[1], [0], [0], [1], [0, 0, 1, 1], [], []>} : vector<16x64xbf16>, vector<64x32xbf16>, vector<16x32xf32> -> vector<16x32xf32>
    %c0_69 = arith.constant 0 : index
    %c0_70 = arith.constant 0 : index
    %c0_71 = arith.constant 0 : index
    %153 = vector.load %arg14[%c0_69, %c0_70, %c0_71] : memref<2x1x32xf32, #tpu.memory_space<vmem>>, vector<1x1x32xf32>
    %154 = vector.shape_cast %153 : vector<1x1x32xf32> to vector<1x32xf32>
    %155 = vector.broadcast %154 : vector<1x32xf32> to vector<16x32xf32>
    %156 = arith.addf %152, %155 : vector<16x32xf32>
    %157 = arith.addf %127, %156 : vector<16x32xf32>
    %c0_72 = arith.constant 0 : index
    %c0_73 = arith.constant 0 : index
    %c0_74 = arith.constant 0 : index
    %158 = vector.load %arg15[%c0_72, %c0_73, %c0_74] : memref<2x1x32xf32, #tpu.memory_space<vmem>>, vector<1x1x32xf32>
    %159 = vector.shape_cast %158 : vector<1x1x32xf32> to vector<1x32xf32>
    %c0_75 = arith.constant 0 : index
    %c0_76 = arith.constant 0 : index
    %c0_77 = arith.constant 0 : index
    %160 = vector.load %arg16[%c0_75, %c0_76, %c0_77] : memref<2x1x32xf32, #tpu.memory_space<vmem>>, vector<1x1x32xf32>
    %161 = vector.shape_cast %160 : vector<1x1x32xf32> to vector<1x32xf32>
    %cst_78 = arith.constant dense<0.000000e+00> : vector<16xf32>
    %162 = vector.multi_reduction <add>, %157, %cst_78 [1] : vector<16x32xf32> to vector<16xf32>
    %163 = vector.shape_cast %162 : vector<16xf32> to vector<16x1xf32>
    %cst_79 = arith.constant 3.200000e+01 : f32
    %164 = vector.broadcast %cst_79 : f32 to vector<16x1xf32>
    %165 = arith.divf %163, %164 : vector<16x1xf32>
    %166 = vector.broadcast %165 : vector<16x1xf32> to vector<16x32xf32>
    %167 = arith.subf %157, %166 : vector<16x32xf32>
    %168 = arith.mulf %167, %167 : vector<16x32xf32>
    %cst_80 = arith.constant dense<0.000000e+00> : vector<16xf32>
    %169 = vector.multi_reduction <add>, %168, %cst_80 [1] : vector<16x32xf32> to vector<16xf32>
    %170 = vector.shape_cast %169 : vector<16xf32> to vector<16x1xf32>
    %cst_81 = arith.constant 3.200000e+01 : f32
    %171 = vector.broadcast %cst_81 : f32 to vector<16x1xf32>
    %172 = arith.divf %170, %171 : vector<16x1xf32>
    %cst_82 = arith.constant 9.99999996E-13 : f32
    %173 = vector.broadcast %cst_82 : f32 to vector<16x1xf32>
    %174 = arith.addf %172, %173 : vector<16x1xf32>
    %175 = math.rsqrt %174 : vector<16x1xf32>
    %176 = vector.broadcast %175 : vector<16x1xf32> to vector<16x32xf32>
    %177 = arith.mulf %167, %176 : vector<16x32xf32>
    %178 = vector.broadcast %159 : vector<1x32xf32> to vector<16x32xf32>
    %179 = arith.mulf %177, %178 : vector<16x32xf32>
    %180 = vector.broadcast %161 : vector<1x32xf32> to vector<16x32xf32>
    %181 = arith.addf %179, %180 : vector<16x32xf32>
    %c1 = arith.constant 1 : index
    %c0_83 = arith.constant 0 : index
    %c0_84 = arith.constant 0 : index
    %c0_85 = arith.constant 0 : index
    %182 = vector.load %arg5[%c1, %c0_83, %c0_84, %c0_85] : memref<2x12x32x8xbf16, #tpu.memory_space<vmem>>, vector<1x12x32x8xbf16>
    %183 = vector.shape_cast %182 : vector<1x12x32x8xbf16> to vector<12x32x8xbf16>
    %c1_86 = arith.constant 1 : index
    %c0_87 = arith.constant 0 : index
    %c0_88 = arith.constant 0 : index
    %c0_89 = arith.constant 0 : index
    %184 = vector.load %arg6[%c1_86, %c0_87, %c0_88, %c0_89] : memref<2x12x1x8xf32, #tpu.memory_space<vmem>>, vector<1x12x1x8xf32>
    %185 = vector.shape_cast %184 : vector<1x12x1x8xf32> to vector<12x1x8xf32>
    %c1_90 = arith.constant 1 : index
    %c0_91 = arith.constant 0 : index
    %c0_92 = arith.constant 0 : index
    %c0_93 = arith.constant 0 : index
    %186 = vector.load %arg7[%c1_90, %c0_91, %c0_92, %c0_93] : memref<2x4x8x32xbf16, #tpu.memory_space<vmem>>, vector<1x4x8x32xbf16>
    %187 = vector.shape_cast %186 : vector<1x4x8x32xbf16> to vector<4x8x32xbf16>
    %188 = vector.extract_strided_slice %181 {offsets = [0, 0], sizes = [8, 32], strides = [1, 1]} : vector<16x32xf32> to vector<8x32xf32>
    %189 = arith.truncf %188 : vector<8x32xf32> to vector<8x32xbf16>
    %190 = vector.shape_cast %189 : vector<8x32xbf16> to vector<1x8x32xbf16>
    %191 = vector.shape_cast %190 : vector<1x8x32xbf16> to vector<1x8x32xbf16>
    %192 = vector.broadcast %191 : vector<1x8x32xbf16> to vector<12x8x32xbf16>
    "tpu.trace_start"() <{level = 10 : i32, message = "hsd,hde->hse"}> : () -> ()
    %cst_94 = arith.constant dense<0.000000e+00> : vector<12x8x8xf32>
    %193 = tpu.matmul %192, %183, %cst_94 {dimension_numbers = #tpu.dot_dimension_numbers<[2], [1], [1], [2], [0, 0, 0, 1, 1, 2], [0], [0]>} : vector<12x8x32xbf16>, vector<12x32x8xbf16>, vector<12x8x8xf32> -> vector<12x8x8xf32>
    "tpu.trace_stop"() : () -> ()
    %194 = vector.broadcast %185 : vector<12x1x8xf32> to vector<12x8x8xf32>
    %195 = arith.addf %193, %194 : vector<12x8x8xf32>
    %196 = vector.extract_strided_slice %195 {offsets = [0, 0, 0], sizes = [4, 8, 8], strides = [1, 1, 1]} : vector<12x8x8xf32> to vector<4x8x8xf32>
    %197 = vector.extract_strided_slice %195 {offsets = [4, 0, 0], sizes = [4, 8, 8], strides = [1, 1, 1]} : vector<12x8x8xf32> to vector<4x8x8xf32>
    %198 = vector.extract_strided_slice %195 {offsets = [8, 0, 0], sizes = [4, 8, 8], strides = [1, 1, 1]} : vector<12x8x8xf32> to vector<4x8x8xf32>
    %199 = arith.truncf %196 : vector<4x8x8xf32> to vector<4x8x8xbf16>
    %200 = arith.truncf %197 : vector<4x8x8xf32> to vector<4x8x8xbf16>
    "tpu.trace_start"() <{level = 10 : i32, message = "hqd,hkd->hqk"}> : () -> ()
    %cst_95 = arith.constant dense<0.000000e+00> : vector<4x8x8xf32>
    %201 = tpu.matmul %199, %200, %cst_95 {dimension_numbers = #tpu.dot_dimension_numbers<[2], [2], [1], [1], [0, 0, 0, 1, 1, 1], [0], [0]>} : vector<4x8x8xbf16>, vector<4x8x8xbf16>, vector<4x8x8xf32> -> vector<4x8x8xf32>
    "tpu.trace_stop"() : () -> ()
    %cst_96 = arith.constant dense<0xFF800000> : vector<4x8xf32>
    %202 = vector.multi_reduction <maximumf>, %201, %cst_96 [2] : vector<4x8x8xf32> to vector<4x8xf32>
    %203 = vector.shape_cast %202 : vector<4x8xf32> to vector<4x8x1xf32>
    %204 = vector.broadcast %203 : vector<4x8x1xf32> to vector<4x8x8xf32>
    %205 = arith.subf %201, %204 : vector<4x8x8xf32>
    %206 = math.exp %205 : vector<4x8x8xf32>
    %cst_97 = arith.constant dense<0.000000e+00> : vector<4x8xf32>
    %207 = vector.multi_reduction <add>, %206, %cst_97 [2] : vector<4x8x8xf32> to vector<4x8xf32>
    %208 = vector.shape_cast %207 : vector<4x8xf32> to vector<4x8x1xf32>
    %209 = tpu.reciprocal %208 {approx = true} : vector<4x8x1xf32> -> vector<4x8x1xf32>
    %210 = vector.broadcast %209 : vector<4x8x1xf32> to vector<4x8x8xf32>
    %211 = arith.mulf %206, %210 : vector<4x8x8xf32>
    %212 = arith.truncf %211 : vector<4x8x8xf32> to vector<4x8x8xbf16>
    %213 = arith.truncf %198 : vector<4x8x8xf32> to vector<4x8x8xbf16>
    "tpu.trace_start"() <{level = 10 : i32, message = "hqk,hkd->hqd"}> : () -> ()
    %cst_98 = arith.constant dense<0.000000e+00> : vector<4x8x8xf32>
    %214 = tpu.matmul %212, %213, %cst_98 {dimension_numbers = #tpu.dot_dimension_numbers<[2], [1], [1], [2], [0, 0, 0, 1, 1, 2], [0], [0]>} : vector<4x8x8xbf16>, vector<4x8x8xbf16>, vector<4x8x8xf32> -> vector<4x8x8xf32>
    "tpu.trace_stop"() : () -> ()
    %215 = arith.truncf %214 : vector<4x8x8xf32> to vector<4x8x8xbf16>
    "tpu.trace_start"() <{level = 10 : i32, message = "hqd,hde->hqe"}> : () -> ()
    %cst_99 = arith.constant dense<0.000000e+00> : vector<4x8x32xf32>
    %216 = tpu.matmul %215, %187, %cst_99 {dimension_numbers = #tpu.dot_dimension_numbers<[2], [1], [1], [2], [0, 0, 0, 1, 1, 2], [0], [0]>} : vector<4x8x8xbf16>, vector<4x8x32xbf16>, vector<4x8x32xf32> -> vector<4x8x32xf32>
    "tpu.trace_stop"() : () -> ()
    %cst_100 = arith.constant dense<0.000000e+00> : vector<8x32xf32>
    %217 = vector.multi_reduction <add>, %216, %cst_100 [0] : vector<4x8x32xf32> to vector<8x32xf32>
    %218 = vector.extract_strided_slice %181 {offsets = [8, 0], sizes = [8, 32], strides = [1, 1]} : vector<16x32xf32> to vector<8x32xf32>
    %219 = arith.truncf %218 : vector<8x32xf32> to vector<8x32xbf16>
    %220 = vector.shape_cast %219 : vector<8x32xbf16> to vector<1x8x32xbf16>
    %221 = vector.shape_cast %220 : vector<1x8x32xbf16> to vector<1x8x32xbf16>
    %222 = vector.broadcast %221 : vector<1x8x32xbf16> to vector<12x8x32xbf16>
    "tpu.trace_start"() <{level = 10 : i32, message = "hsd,hde->hse"}> : () -> ()
    %cst_101 = arith.constant dense<0.000000e+00> : vector<12x8x8xf32>
    %223 = tpu.matmul %222, %183, %cst_101 {dimension_numbers = #tpu.dot_dimension_numbers<[2], [1], [1], [2], [0, 0, 0, 1, 1, 2], [0], [0]>} : vector<12x8x32xbf16>, vector<12x32x8xbf16>, vector<12x8x8xf32> -> vector<12x8x8xf32>
    "tpu.trace_stop"() : () -> ()
    %224 = vector.broadcast %185 : vector<12x1x8xf32> to vector<12x8x8xf32>
    %225 = arith.addf %223, %224 : vector<12x8x8xf32>
    %226 = vector.extract_strided_slice %225 {offsets = [0, 0, 0], sizes = [4, 8, 8], strides = [1, 1, 1]} : vector<12x8x8xf32> to vector<4x8x8xf32>
    %227 = vector.extract_strided_slice %225 {offsets = [4, 0, 0], sizes = [4, 8, 8], strides = [1, 1, 1]} : vector<12x8x8xf32> to vector<4x8x8xf32>
    %228 = vector.extract_strided_slice %225 {offsets = [8, 0, 0], sizes = [4, 8, 8], strides = [1, 1, 1]} : vector<12x8x8xf32> to vector<4x8x8xf32>
    %229 = arith.truncf %226 : vector<4x8x8xf32> to vector<4x8x8xbf16>
    %230 = arith.truncf %227 : vector<4x8x8xf32> to vector<4x8x8xbf16>
    "tpu.trace_start"() <{level = 10 : i32, message = "hqd,hkd->hqk"}> : () -> ()
    %cst_102 = arith.constant dense<0.000000e+00> : vector<4x8x8xf32>
    %231 = tpu.matmul %229, %230, %cst_102 {dimension_numbers = #tpu.dot_dimension_numbers<[2], [2], [1], [1], [0, 0, 0, 1, 1, 1], [0], [0]>} : vector<4x8x8xbf16>, vector<4x8x8xbf16>, vector<4x8x8xf32> -> vector<4x8x8xf32>
    "tpu.trace_stop"() : () -> ()
    %cst_103 = arith.constant dense<0xFF800000> : vector<4x8xf32>
    %232 = vector.multi_reduction <maximumf>, %231, %cst_103 [2] : vector<4x8x8xf32> to vector<4x8xf32>
    %233 = vector.shape_cast %232 : vector<4x8xf32> to vector<4x8x1xf32>
    %234 = vector.broadcast %233 : vector<4x8x1xf32> to vector<4x8x8xf32>
    %235 = arith.subf %231, %234 : vector<4x8x8xf32>
    %236 = math.exp %235 : vector<4x8x8xf32>
    %cst_104 = arith.constant dense<0.000000e+00> : vector<4x8xf32>
    %237 = vector.multi_reduction <add>, %236, %cst_104 [2] : vector<4x8x8xf32> to vector<4x8xf32>
    %238 = vector.shape_cast %237 : vector<4x8xf32> to vector<4x8x1xf32>
    %239 = tpu.reciprocal %238 {approx = true} : vector<4x8x1xf32> -> vector<4x8x1xf32>
    %240 = vector.broadcast %239 : vector<4x8x1xf32> to vector<4x8x8xf32>
    %241 = arith.mulf %236, %240 : vector<4x8x8xf32>
    %242 = arith.truncf %241 : vector<4x8x8xf32> to vector<4x8x8xbf16>
    %243 = arith.truncf %228 : vector<4x8x8xf32> to vector<4x8x8xbf16>
    "tpu.trace_start"() <{level = 10 : i32, message = "hqk,hkd->hqd"}> : () -> ()
    %cst_105 = arith.constant dense<0.000000e+00> : vector<4x8x8xf32>
    %244 = tpu.matmul %242, %243, %cst_105 {dimension_numbers = #tpu.dot_dimension_numbers<[2], [1], [1], [2], [0, 0, 0, 1, 1, 2], [0], [0]>} : vector<4x8x8xbf16>, vector<4x8x8xbf16>, vector<4x8x8xf32> -> vector<4x8x8xf32>
    "tpu.trace_stop"() : () -> ()
    %245 = arith.truncf %244 : vector<4x8x8xf32> to vector<4x8x8xbf16>
    "tpu.trace_start"() <{level = 10 : i32, message = "hqd,hde->hqe"}> : () -> ()
    %cst_106 = arith.constant dense<0.000000e+00> : vector<4x8x32xf32>
    %246 = tpu.matmul %245, %187, %cst_106 {dimension_numbers = #tpu.dot_dimension_numbers<[2], [1], [1], [2], [0, 0, 0, 1, 1, 2], [0], [0]>} : vector<4x8x8xbf16>, vector<4x8x32xbf16>, vector<4x8x32xf32> -> vector<4x8x32xf32>
    "tpu.trace_stop"() : () -> ()
    %cst_107 = arith.constant dense<0.000000e+00> : vector<8x32xf32>
    %247 = vector.multi_reduction <add>, %246, %cst_107 [0] : vector<4x8x32xf32> to vector<8x32xf32>
    %248 = tpu.concatenate %217, %247 in 0 : vector<8x32xf32>, vector<8x32xf32> -> vector<16x32xf32>
    %c1_108 = arith.constant 1 : index
    %c0_109 = arith.constant 0 : index
    %c0_110 = arith.constant 0 : index
    %249 = vector.load %arg8[%c1_108, %c0_109, %c0_110] : memref<2x1x32xf32, #tpu.memory_space<vmem>>, vector<1x1x32xf32>
    %250 = vector.shape_cast %249 : vector<1x1x32xf32> to vector<1x32xf32>
    %251 = vector.broadcast %250 : vector<1x32xf32> to vector<16x32xf32>
    %252 = arith.addf %248, %251 : vector<16x32xf32>
    %253 = arith.addf %181, %252 : vector<16x32xf32>
    %c1_111 = arith.constant 1 : index
    %c0_112 = arith.constant 0 : index
    %c0_113 = arith.constant 0 : index
    %254 = vector.load %arg9[%c1_111, %c0_112, %c0_113] : memref<2x1x32xf32, #tpu.memory_space<vmem>>, vector<1x1x32xf32>
    %255 = vector.shape_cast %254 : vector<1x1x32xf32> to vector<1x32xf32>
    %c1_114 = arith.constant 1 : index
    %c0_115 = arith.constant 0 : index
    %c0_116 = arith.constant 0 : index
    %256 = vector.load %arg10[%c1_114, %c0_115, %c0_116] : memref<2x1x32xf32, #tpu.memory_space<vmem>>, vector<1x1x32xf32>
    %257 = vector.shape_cast %256 : vector<1x1x32xf32> to vector<1x32xf32>
    %cst_117 = arith.constant dense<0.000000e+00> : vector<16xf32>
    %258 = vector.multi_reduction <add>, %253, %cst_117 [1] : vector<16x32xf32> to vector<16xf32>
    %259 = vector.shape_cast %258 : vector<16xf32> to vector<16x1xf32>
    %cst_118 = arith.constant 3.200000e+01 : f32
    %260 = vector.broadcast %cst_118 : f32 to vector<16x1xf32>
    %261 = arith.divf %259, %260 : vector<16x1xf32>
    %262 = vector.broadcast %261 : vector<16x1xf32> to vector<16x32xf32>
    %263 = arith.subf %253, %262 : vector<16x32xf32>
    %264 = arith.mulf %263, %263 : vector<16x32xf32>
    %cst_119 = arith.constant dense<0.000000e+00> : vector<16xf32>
    %265 = vector.multi_reduction <add>, %264, %cst_119 [1] : vector<16x32xf32> to vector<16xf32>
    %266 = vector.shape_cast %265 : vector<16xf32> to vector<16x1xf32>
    %cst_120 = arith.constant 3.200000e+01 : f32
    %267 = vector.broadcast %cst_120 : f32 to vector<16x1xf32>
    %268 = arith.divf %266, %267 : vector<16x1xf32>
    %cst_121 = arith.constant 9.99999996E-13 : f32
    %269 = vector.broadcast %cst_121 : f32 to vector<16x1xf32>
    %270 = arith.addf %268, %269 : vector<16x1xf32>
    %271 = math.rsqrt %270 : vector<16x1xf32>
    %272 = vector.broadcast %271 : vector<16x1xf32> to vector<16x32xf32>
    %273 = arith.mulf %263, %272 : vector<16x32xf32>
    %274 = vector.broadcast %255 : vector<1x32xf32> to vector<16x32xf32>
    %275 = arith.mulf %273, %274 : vector<16x32xf32>
    %276 = vector.broadcast %257 : vector<1x32xf32> to vector<16x32xf32>
    %277 = arith.addf %275, %276 : vector<16x32xf32>
    %278 = arith.truncf %277 : vector<16x32xf32> to vector<16x32xbf16>
    %c1_122 = arith.constant 1 : index
    %c0_123 = arith.constant 0 : index
    %c0_124 = arith.constant 0 : index
    %279 = vector.load %arg11[%c1_122, %c0_123, %c0_124] : memref<2x32x64xbf16, #tpu.memory_space<vmem>>, vector<1x32x64xbf16>
    %280 = vector.shape_cast %279 : vector<1x32x64xbf16> to vector<32x64xbf16>
    %cst_125 = arith.constant dense<0.000000e+00> : vector<16x64xf32>
    %281 = tpu.matmul %278, %280, %cst_125 {dimension_numbers = #tpu.dot_dimension_numbers<[1], [0], [0], [1], [0, 0, 1, 1], [], []>} : vector<16x32xbf16>, vector<32x64xbf16>, vector<16x64xf32> -> vector<16x64xf32>
    %c1_126 = arith.constant 1 : index
    %c0_127 = arith.constant 0 : index
    %c0_128 = arith.constant 0 : index
    %282 = vector.load %arg12[%c1_126, %c0_127, %c0_128] : memref<2x1x64xf32, #tpu.memory_space<vmem>>, vector<1x1x64xf32>
    %283 = vector.shape_cast %282 : vector<1x1x64xf32> to vector<1x64xf32>
    %284 = vector.broadcast %283 : vector<1x64xf32> to vector<16x64xf32>
    %285 = arith.addf %281, %284 : vector<16x64xf32>
    %286 = arith.mulf %285, %285 : vector<16x64xf32>
    %287 = arith.mulf %285, %286 : vector<16x64xf32>
    %cst_129 = arith.constant 4.471500e-02 : f32
    %288 = vector.broadcast %cst_129 : f32 to vector<16x64xf32>
    %289 = arith.mulf %288, %287 : vector<16x64xf32>
    %290 = arith.addf %285, %289 : vector<16x64xf32>
    %cst_130 = arith.constant 0.797884583 : f32
    %291 = vector.broadcast %cst_130 : f32 to vector<16x64xf32>
    %292 = arith.mulf %291, %290 : vector<16x64xf32>
    %293 = math.tanh %292 : vector<16x64xf32>
    %cst_131 = arith.constant 1.000000e+00 : f32
    %294 = vector.broadcast %cst_131 : f32 to vector<16x64xf32>
    %295 = arith.addf %294, %293 : vector<16x64xf32>
    %cst_132 = arith.constant 5.000000e-01 : f32
    %296 = vector.broadcast %cst_132 : f32 to vector<16x64xf32>
    %297 = arith.mulf %296, %295 : vector<16x64xf32>
    %298 = arith.mulf %285, %297 : vector<16x64xf32>
    %299 = arith.truncf %298 : vector<16x64xf32> to vector<16x64xbf16>
    %c1_133 = arith.constant 1 : index
    %c0_134 = arith.constant 0 : index
    %c0_135 = arith.constant 0 : index
    %300 = vector.load %arg13[%c1_133, %c0_134, %c0_135] : memref<2x64x32xbf16, #tpu.memory_space<vmem>>, vector<1x64x32xbf16>
    %301 = vector.shape_cast %300 : vector<1x64x32xbf16> to vector<64x32xbf16>
    %cst_136 = arith.constant dense<0.000000e+00> : vector<16x32xf32>
    %302 = tpu.matmul %299, %301, %cst_136 {dimension_numbers = #tpu.dot_dimension_numbers<[1], [0], [0], [1], [0, 0, 1, 1], [], []>} : vector<16x64xbf16>, vector<64x32xbf16>, vector<16x32xf32> -> vector<16x32xf32>
    %c1_137 = arith.constant 1 : index
    %c0_138 = arith.constant 0 : index
    %c0_139 = arith.constant 0 : index
    %303 = vector.load %arg14[%c1_137, %c0_138, %c0_139] : memref<2x1x32xf32, #tpu.memory_space<vmem>>, vector<1x1x32xf32>
    %304 = vector.shape_cast %303 : vector<1x1x32xf32> to vector<1x32xf32>
    %305 = vector.broadcast %304 : vector<1x32xf32> to vector<16x32xf32>
    %306 = arith.addf %302, %305 : vector<16x32xf32>
    %307 = arith.addf %277, %306 : vector<16x32xf32>
    %c1_140 = arith.constant 1 : index
    %c0_141 = arith.constant 0 : index
    %c0_142 = arith.constant 0 : index
    %308 = vector.load %arg15[%c1_140, %c0_141, %c0_142] : memref<2x1x32xf32, #tpu.memory_space<vmem>>, vector<1x1x32xf32>
    %309 = vector.shape_cast %308 : vector<1x1x32xf32> to vector<1x32xf32>
    %c1_143 = arith.constant 1 : index
    %c0_144 = arith.constant 0 : index
    %c0_145 = arith.constant 0 : index
    %310 = vector.load %arg16[%c1_143, %c0_144, %c0_145] : memref<2x1x32xf32, #tpu.memory_space<vmem>>, vector<1x1x32xf32>
    %311 = vector.shape_cast %310 : vector<1x1x32xf32> to vector<1x32xf32>
    %cst_146 = arith.constant dense<0.000000e+00> : vector<16xf32>
    %312 = vector.multi_reduction <add>, %307, %cst_146 [1] : vector<16x32xf32> to vector<16xf32>
    %313 = vector.shape_cast %312 : vector<16xf32> to vector<16x1xf32>
    %cst_147 = arith.constant 3.200000e+01 : f32
    %314 = vector.broadcast %cst_147 : f32 to vector<16x1xf32>
    %315 = arith.divf %313, %314 : vector<16x1xf32>
    %316 = vector.broadcast %315 : vector<16x1xf32> to vector<16x32xf32>
    %317 = arith.subf %307, %316 : vector<16x32xf32>
    %318 = arith.mulf %317, %317 : vector<16x32xf32>
    %cst_148 = arith.constant dense<0.000000e+00> : vector<16xf32>
    %319 = vector.multi_reduction <add>, %318, %cst_148 [1] : vector<16x32xf32> to vector<16xf32>
    %320 = vector.shape_cast %319 : vector<16xf32> to vector<16x1xf32>
    %cst_149 = arith.constant 3.200000e+01 : f32
    %321 = vector.broadcast %cst_149 : f32 to vector<16x1xf32>
    %322 = arith.divf %320, %321 : vector<16x1xf32>
    %cst_150 = arith.constant 9.99999996E-13 : f32
    %323 = vector.broadcast %cst_150 : f32 to vector<16x1xf32>
    %324 = arith.addf %322, %323 : vector<16x1xf32>
    %325 = math.rsqrt %324 : vector<16x1xf32>
    %326 = vector.broadcast %325 : vector<16x1xf32> to vector<16x32xf32>
    %327 = arith.mulf %317, %326 : vector<16x32xf32>
    %328 = vector.broadcast %309 : vector<1x32xf32> to vector<16x32xf32>
    %329 = arith.mulf %327, %328 : vector<16x32xf32>
    %330 = vector.broadcast %311 : vector<1x32xf32> to vector<16x32xf32>
    %331 = arith.addf %329, %330 : vector<16x32xf32>
    %c0_151 = arith.constant 0 : index
    %c0_152 = arith.constant 0 : index
    %332 = vector.load %arg17[%c0_151, %c0_152] : memref<16x32xf32, #tpu.memory_space<vmem>>, vector<16x32xf32>
    tpu.vector_store %arg17[%c0_151, %c0_152], %331 {strides = array<i32>} : memref<16x32xf32, #tpu.memory_space<vmem>>, vector<16x32xf32>,
    return
  }
}

</mosaic_0001>

<llo_original>
// kernel: bert_embedder_forward.1
$region0: #{bert_embedder_forward.1}
  #allocation0 [shape = 'u32[]', space=smem, size = 0x4, offset = 0x4, fixed_abs, tag = 'smem constant byte address 0x4 - core index']
  #allocation1 [shape = 'u32[72,128]{1,0:T(1,128)}', space=vmem, size = 0x9000, scoped, tag = 'internal scratch']
  %s0 = inlined_call_operand.vmem [shape: s32[16,1], index: 0, kind: input, shape index: {}]
  %s1 = inlined_call_operand.vmem [shape: f32[128,32], index: 1, kind: input, shape index: {}]
  %s2 = inlined_call_operand.vmem [shape: f32[16,32], index: 2, kind: input, shape index: {}]
  %s3 = inlined_call_operand.vmem [shape: f32[1,32], index: 3, kind: input, shape index: {}]
  %s4 = inlined_call_operand.vmem [shape: f32[1,32], index: 4, kind: input, shape index: {}]
  %s5 = inlined_call_operand.vmem [shape: bf16[2,12,32,8], index: 5, kind: input, shape index: {}]
  %s6 = inlined_call_operand.vmem [shape: f32[2,12,1,8], index: 6, kind: input, shape index: {}]
  %s7 = inlined_call_operand.vmem [shape: bf16[2,4,8,32], index: 7, kind: input, shape index: {}]
  %s8 = inlined_call_operand.vmem [shape: f32[2,1,32], index: 8, kind: input, shape index: {}]
  %s9 = inlined_call_operand.vmem [shape: f32[2,1,32], index: 9, kind: input, shape index: {}]
  %s10 = inlined_call_operand.vmem [shape: f32[2,1,32], index: 10, kind: input, shape index: {}]
  %s11 = inlined_call_operand.vmem [shape: bf16[2,32,64], index: 11, kind: input, shape index: {}]
  %s12 = inlined_call_operand.vmem [shape: f32[2,1,64], index: 12, kind: input, shape index: {}]
  %s13 = inlined_call_operand.vmem [shape: bf16[2,64,32], index: 13, kind: input, shape index: {}]
  %s14 = inlined_call_operand.vmem [shape: f32[2,1,32], index: 14, kind: input, shape index: {}]
  %s15 = inlined_call_operand.vmem [shape: f32[2,1,32], index: 15, kind: input, shape index: {}]
  %s16 = inlined_call_operand.vmem [shape: f32[2,1,32], index: 16, kind: input, shape index: {}]
  %s17 = inlined_call_operand.hbm [shape: f32[16,32], index: 17, kind: output, shape index: {}]
  %s18 = sld [smem:[#allocation0]]
  $region78: #{bert_embedder_forward.1} parent=0
    _
  %s20 = ssub.s32 1, %s18
  %s21 = scalar_select 0, %s20, %s18
  $region1: #{bert_embedder_forward.1} parent=0
    #allocation2 [shape = 'u8[8192]{0}', space=vmem, size = 0x2000, scoped, tag = 'output window, operand 0, single buffered']
    #allocation3 [shape = 's32[1]{0}', space=sflag, size = 0x4, scoped, tag = 'scoped memory for bert_embedder_forward.1']
    %22 = vsyncpa [#allocation3], 0
    // Predicated region
    $region2: #{bert_embedder_forward.1} parent=1 // pred_check
      _
    $region3: #{bert_embedder_forward.1} parent=1 // pred_check_branch
      %24 = sbr.rel (0) target = $region5
    $region4: #{bert_embedder_forward.1} parent=1 // pred_region
      _
    $region5: #{bert_embedder_forward.1} parent=1 // pred_fallthru
      _
    // Predicated region
    $region6: #{bert_embedder_forward.1} parent=1 // pred_check
      _
    $region7: #{bert_embedder_forward.1} parent=1 // pred_check_branch
      %26 = sbr.rel (0) target = $region9
    $region8: #{bert_embedder_forward.1} parent=1 // pred_region
      _
    $region9: #{bert_embedder_forward.1} parent=1 // pred_fallthru
      _
    // Predicated region
    $region10: #{bert_embedder_forward.1} parent=1 // pred_check
      _
    $region11: #{bert_embedder_forward.1} parent=1 // pred_check_branch
      %28 = sbr.rel (0) target = $region13
    $region12: #{bert_embedder_forward.1} parent=1 // pred_region
      _
    $region13: #{bert_embedder_forward.1} parent=1 // pred_fallthru
      _
    // Predicated region
    $region14: #{bert_embedder_forward.1} parent=1 // pred_check
      _
    $region15: #{bert_embedder_forward.1} parent=1 // pred_check_branch
      %30 = sbr.rel (0) target = $region17
    $region16: #{bert_embedder_forward.1} parent=1 // pred_region
      _
    $region17: #{bert_embedder_forward.1} parent=1 // pred_fallthru
      _
    // Predicated region
    $region18: #{bert_embedder_forward.1} parent=1 // pred_check
      _
    $region19: #{bert_embedder_forward.1} parent=1 // pred_check_branch
      %32 = sbr.rel (0) target = $region21
    $region20: #{bert_embedder_forward.1} parent=1 // pred_region
      _
    $region21: #{bert_embedder_forward.1} parent=1 // pred_fallthru
      _
    // Predicated region
    $region22: #{bert_embedder_forward.1} parent=1 // pred_check
      _
    $region23: #{bert_embedder_forward.1} parent=1 // pred_check_branch
      %34 = sbr.rel (0) target = $region25
    $region24: #{bert_embedder_forward.1} parent=1 // pred_region
      _
    $region25: #{bert_embedder_forward.1} parent=1 // pred_fallthru
      _
    // Predicated region
    $region26: #{bert_embedder_forward.1} parent=1 // pred_check
      _
    $region27: #{bert_embedder_forward.1} parent=1 // pred_check_branch
      %36 = sbr.rel (0) target = $region29
    $region28: #{bert_embedder_forward.1} parent=1 // pred_region
      _
    $region29: #{bert_embedder_forward.1} parent=1 // pred_fallthru
      _
    // Predicated region
    $region30: #{bert_embedder_forward.1} parent=1 // pred_check
      _
    $region31: #{bert_embedder_forward.1} parent=1 // pred_check_branch
      %38 = sbr.rel (0) target = $region33
    $region32: #{bert_embedder_forward.1} parent=1 // pred_region
      _
    $region33: #{bert_embedder_forward.1} parent=1 // pred_fallthru
      _
    // Predicated region
    $region34: #{bert_embedder_forward.1} parent=1 // pred_check
      _
    $region35: #{bert_embedder_forward.1} parent=1 // pred_check_branch
      %40 = sbr.rel (0) target = $region37
    $region36: #{bert_embedder_forward.1} parent=1 // pred_region
      _
    $region37: #{bert_embedder_forward.1} parent=1 // pred_fallthru
      _
    // Predicated region
    $region38: #{bert_embedder_forward.1} parent=1 // pred_check
      _
    $region39: #{bert_embedder_forward.1} parent=1 // pred_check_branch
      %42 = sbr.rel (0) target = $region41
    $region40: #{bert_embedder_forward.1} parent=1 // pred_region
      _
    $region41: #{bert_embedder_forward.1} parent=1 // pred_fallthru
      _
    // Predicated region
    $region42: #{bert_embedder_forward.1} parent=1 // pred_check
      _
    $region43: #{bert_embedder_forward.1} parent=1 // pred_check_branch
      %44 = sbr.rel (0) target = $region45
    $region44: #{bert_embedder_forward.1} parent=1 // pred_region
      _
    $region45: #{bert_embedder_forward.1} parent=1 // pred_fallthru
      _
    // Predicated region
    $region46: #{bert_embedder_forward.1} parent=1 // pred_check
      _
    $region47: #{bert_embedder_forward.1} parent=1 // pred_check_branch
      %46 = sbr.rel (0) target = $region49
    $region48: #{bert_embedder_forward.1} parent=1 // pred_region
      _
    $region49: #{bert_embedder_forward.1} parent=1 // pred_fallthru
      _
    // Predicated region
    $region50: #{bert_embedder_forward.1} parent=1 // pred_check
      _
    $region51: #{bert_embedder_forward.1} parent=1 // pred_check_branch
      %48 = sbr.rel (0) target = $region53
    $region52: #{bert_embedder_forward.1} parent=1 // pred_region
      _
    $region53: #{bert_embedder_forward.1} parent=1 // pred_fallthru
      _
    // Predicated region
    $region54: #{bert_embedder_forward.1} parent=1 // pred_check
      _
    $region55: #{bert_embedder_forward.1} parent=1 // pred_check_branch
      %50 = sbr.rel (0) target = $region57
    $region56: #{bert_embedder_forward.1} parent=1 // pred_region
      _
    $region57: #{bert_embedder_forward.1} parent=1 // pred_fallthru
      _
    // Predicated region
    $region58: #{bert_embedder_forward.1} parent=1 // pred_check
      _
    $region59: #{bert_embedder_forward.1} parent=1 // pred_check_branch
      %52 = sbr.rel (0) target = $region61
    $region60: #{bert_embedder_forward.1} parent=1 // pred_region
      _
    $region61: #{bert_embedder_forward.1} parent=1 // pred_fallthru
      _
    // Predicated region
    $region62: #{bert_embedder_forward.1} parent=1 // pred_check
      _
    $region63: #{bert_embedder_forward.1} parent=1 // pred_check_branch
      %54 = sbr.rel (0) target = $region65
    $region64: #{bert_embedder_forward.1} parent=1 // pred_region
      _
    $region65: #{bert_embedder_forward.1} parent=1 // pred_fallthru
      _
    // Predicated region
    $region66: #{bert_embedder_forward.1} parent=1 // pred_check
      _
    $region67: #{bert_embedder_forward.1} parent=1 // pred_check_branch
      %56 = sbr.rel (0) target = $region69
    $region68: #{bert_embedder_forward.1} parent=1 // pred_region
      _
    $region69: #{bert_embedder_forward.1} parent=1 // pred_fallthru
      _
    %v58 = vld [vmem:[%s0] sm:$0xff]
    %v59 = vld [vmem:[%s0 + $0x8] sm:$0xff]
    %v60 = vlaneseq
    %v61 = vand.u32 %v60, 127
    %62 = vset.pattern.permute.xlu0 0
    %63 = vperm.xlu0 %62, %v58
    %v64 = vpop.permute.xlu0 %63
    %65 = vset.pattern.permute.xlu0 0
    %66 = vperm.xlu0 %65, %v59
    %v67 = vpop.permute.xlu0 %66
    %vm68 = vcmp.eq.s32.totalorder %v61, %v64
    %vm69 = vcmp.eq.s32.totalorder %v61, %v67
    %v70 = vsel %vm68, 1, 0
    %v71 = vsel %vm69, 1, 0
    %v72 = vcvt.s32.f32 %v70
    %v73 = vcvt.s32.f32 %v71
    %v74 = vld [vmem:[%s1] sm:$0xff]
    %v75 = vld [vmem:[%s1 + $0x8] sm:$0xff]
    %v76 = vld [vmem:[%s1 + $0x10] sm:$0xff]
    %v77 = vld [vmem:[%s1 + $0x18] sm:$0xff]
    %v78 = vld [vmem:[%s1 + $0x20] sm:$0xff]
    %v79 = vld [vmem:[%s1 + $0x28] sm:$0xff]
    %v80 = vld [vmem:[%s1 + $0x30] sm:$0xff]
    %v81 = vld [vmem:[%s1 + $0x38] sm:$0xff]
    %v82 = vld [vmem:[%s1 + $0x40] sm:$0xff]
    %v83 = vld [vmem:[%s1 + $0x48] sm:$0xff]
    %v84 = vld [vmem:[%s1 + $0x50] sm:$0xff]
    %v85 = vld [vmem:[%s1 + $0x58] sm:$0xff]
    %v86 = vld [vmem:[%s1 + $0x60] sm:$0xff]
    %v87 = vld [vmem:[%s1 + $0x68] sm:$0xff]
    %v88 = vld [vmem:[%s1 + $0x70] sm:$0xff]
    %v89 = vld [vmem:[%s1 + $0x78] sm:$0xff]
    %v90 = vld [vmem:[%s2] sm:$0xff]
    %v91 = vld [vmem:[%s2 + $0x8] sm:$0xff]
    %92 = vmatpush.msra.mxu0 %v89
    %93 = vmatpush.msra.mxu0 %v88
    %94 = vmatpush.msra.mxu0 %v87
    %95 = vmatpush.msra.mxu0 %v86
    %96 = vmatpush.msra.mxu0 %v85
    %97 = vmatpush.msra.mxu0 %v84
    %98 = vmatpush.msra.mxu0 %v83
    %99 = vmatpush.msra.mxu0 %v82
    %100 = vmatpush.msra.mxu0 %v81
    %101 = vmatpush.msra.mxu0 %v80
    %102 = vmatpush.msra.mxu0 %v79
    %103 = vmatpush.msra.mxu0 %v78
    %104 = vmatpush.msra.mxu0 %v77
    %105 = vmatpush.msra.mxu0 %v76
    %106 = vmatpush.msra.mxu0 %v75
    %107 = vmatpush.msra.mxu0 %v74
    %108 = vmatmul.f32.gmra.mxu0 %v72
    %v109 = vpop.f32.mrf.mxu0
    %v110 = vadd.f32 %v90, %v109
    %111 = vmatmul.f32.gmra.mxu0 %v73
    %v112 = vpop.f32.mrf.mxu0
    %v113 = vadd.f32 %v91, %v112
    %114 = vdwg.mxu0
    %v115 = vld [vmem:[%s3] sm:$0x1]
    %v116 = vld [vmem:[%s4] sm:$0x1]
    %vm117 = vcmask 261120
    %v118 = vsel %vm117, %v110, 0.0
    %119 = vadd.xlane.f32.xlu0 %v118
    %v120 = vpop.xlane.xlu0 %119
    %v121 = vsel %vm117, %v113, 0.0
    %122 = vadd.xlane.f32.xlu0 %v121
    %v123 = vpop.xlane.xlu0 %122
    %v124 = vrcp.pop 32.0
    %v125 = vmul.f32 32.0, %v124
    %v126 = vsub.f32 1.0, %v125
    %v127 = vmul.f32 %v124, %v126
    %v128 = vadd.f32 %v124, %v127
    %vm129 = vweird.f32 %v124
    %v130 = vsel %vm129, %v124, %v128
    %v131 = vmul.f32 %v120, %v130
    %v132 = vmul.f32 %v123, %v130
    %v133 = vsub.f32 %v110, %v131
    %v134 = vsub.f32 %v113, %v132
    %v135 = vmul.f32 %v133, %v133
    %v136 = vmul.f32 %v134, %v134
    %v137 = vsel %vm117, %v135, 0.0
    %138 = vadd.xlane.f32.xlu0 %v137
    %v139 = vpop.xlane.xlu0 %138
    %v140 = vsel %vm117, %v136, 0.0
    %141 = vadd.xlane.f32.xlu0 %v140
    %v142 = vpop.xlane.xlu0 %141
    %v143 = vmul.f32 %v139, %v130
    %v144 = vmul.f32 %v142, %v130
    %v145 = vadd.f32 %v143, 1e-12
    %v146 = vadd.f32 %v144, 1e-12
    %v147 = vrsqrt.pop %v145
    %v148 = vmul.f32 %v147, %v145
    %v149 = vmul.f32 %v148, %v147
    %v150 = vmul.f32 0.5, %v149
    %v151 = vsub.f32 1.5, %v150
    %v152 = vmul.f32 %v147, %v151
    %vm153 = vweird.f32 %v145
    %vm154 = vweird.f32 %v147
    %vm155 = vmor %vm153, %vm154
    %v156 = vsel %vm155, %v147, %v152
    %v157 = vrsqrt.pop %v146
    %v158 = vmul.f32 %v157, %v146
    %v159 = vmul.f32 %v158, %v157
    %v160 = vmul.f32 0.5, %v159
    %v161 = vsub.f32 1.5, %v160
    %v162 = vmul.f32 %v157, %v161
    %vm163 = vweird.f32 %v146
    %vm164 = vweird.f32 %v157
    %vm165 = vmor %vm163, %vm164
    %v166 = vsel %vm165, %v157, %v162
    %v167 = vmul.f32 %v133, %v156
    %v168 = vmul.f32 %v134, %v166
    %v170 = vperm.slane %v115, 0
    %v172 = vmul.f32 %v167, %v170
    %v173 = vmul.f32 %v168, %v170
    %v175 = vperm.slane %v116, 0
    %v177 = vadd.f32 %v172, %v175
    %v178 = vadd.f32 %v173, %v175
    %v179 = vld [vmem:[%s5] sm:$0xf]
    %v180 = vld [vmem:[%s5 + $0x4] sm:$0xf]
    %v181 = vld [vmem:[%s5 + $0x8] sm:$0xf]
    %v182 = vld [vmem:[%s5 + $0xc] sm:$0xf]
    %v183 = vld [vmem:[%s5 + $0x10] sm:$0xf]
    %v184 = vld [vmem:[%s5 + $0x14] sm:$0xf]
    %v185 = vld [vmem:[%s5 + $0x18] sm:$0xf]
    %v186 = vld [vmem:[%s5 + $0x1c] sm:$0xf]
    %v187 = vld [vmem:[%s5 + $0x20] sm:$0xf]
    %v188 = vld [vmem:[%s5 + $0x24] sm:$0xf]
    %v189 = vld [vmem:[%s5 + $0x28] sm:$0xf]
    %v190 = vld [vmem:[%s5 + $0x2c] sm:$0xf]
    %v191 = vld [vmem:[%s5 + $0x30] sm:$0xf]
    %v192 = vld [vmem:[%s5 + $0x34] sm:$0xf]
    %v193 = vld [vmem:[%s5 + $0x38] sm:$0xf]
    %v194 = vld [vmem:[%s5 + $0x3c] sm:$0xf]
    %v195 = vld [vmem:[%s5 + $0x40] sm:$0xf]
    %v196 = vld [vmem:[%s5 + $0x44] sm:$0xf]
    %v197 = vld [vmem:[%s5 + $0x48] sm:$0xf]
    %v198 = vld [vmem:[%s5 + $0x4c] sm:$0xf]
    %v199 = vld [vmem:[%s5 + $0x50] sm:$0xf]
    %v200 = vld [vmem:[%s5 + $0x54] sm:$0xf]
    %v201 = vld [vmem:[%s5 + $0x58] sm:$0xf]
    %v202 = vld [vmem:[%s5 + $0x5c] sm:$0xf]
    %v203 = vld [vmem:[%s5 + $0x60] sm:$0xf]
    %v204 = vld [vmem:[%s5 + $0x64] sm:$0xf]
    %v205 = vld [vmem:[%s5 + $0x68] sm:$0xf]
    %v206 = vld [vmem:[%s5 + $0x6c] sm:$0xf]
    %v207 = vld [vmem:[%s5 + $0x70] sm:$0xf]
    %v208 = vld [vmem:[%s5 + $0x74] sm:$0xf]
    %v209 = vld [vmem:[%s5 + $0x78] sm:$0xf]
    %v210 = vld [vmem:[%s5 + $0x7c] sm:$0xf]
    %v211 = vld [vmem:[%s5 + $0x80] sm:$0xf]
    %v212 = vld [vmem:[%s5 + $0x84] sm:$0xf]
    %v213 = vld [vmem:[%s5 + $0x88] sm:$0xf]
    %v214 = vld [vmem:[%s5 + $0x8c] sm:$0xf]
    %v215 = vld [vmem:[%s5 + $0x90] sm:$0xf]
    %v216 = vld [vmem:[%s5 + $0x94] sm:$0xf]
    %v217 = vld [vmem:[%s5 + $0x98] sm:$0xf]
    %v218 = vld [vmem:[%s5 + $0x9c] sm:$0xf]
    %v219 = vld [vmem:[%s5 + $0xa0] sm:$0xf]
    %v220 = vld [vmem:[%s5 + $0xa4] sm:$0xf]
    %v221 = vld [vmem:[%s5 + $0xa8] sm:$0xf]
    %v222 = vld [vmem:[%s5 + $0xac] sm:$0xf]
    %v223 = vld [vmem:[%s5 + $0xb0] sm:$0xf]
    %v224 = vld [vmem:[%s5 + $0xb4] sm:$0xf]
    %v225 = vld [vmem:[%s5 + $0xb8] sm:$0xf]
    %v226 = vld [vmem:[%s5 + $0xbc] sm:$0xf]
    %v227 = vld [vmem:[%s6] sm:$0x1]
    %v228 = vld [vmem:[%s6 + $0x1] sm:$0x1]
    %v229 = vld [vmem:[%s6 + $0x2] sm:$0x1]
    %v230 = vld [vmem:[%s6 + $0x3] sm:$0x1]
    %v231 = vld [vmem:[%s6 + $0x4] sm:$0x1]
    %v232 = vld [vmem:[%s6 + $0x5] sm:$0x1]
    %v233 = vld [vmem:[%s6 + $0x6] sm:$0x1]
    %v234 = vld [vmem:[%s6 + $0x7] sm:$0x1]
    %v235 = vld [vmem:[%s6 + $0x8] sm:$0x1]
    %v236 = vld [vmem:[%s6 + $0x9] sm:$0x1]
    %v237 = vld [vmem:[%s6 + $0xa] sm:$0x1]
    %v238 = vld [vmem:[%s6 + $0xb] sm:$0x1]
    %v239 = vld [vmem:[%s7] sm:$0xf]
    %v240 = vld [vmem:[%s7 + $0x4] sm:$0xf]
    %v241 = vld [vmem:[%s7 + $0x8] sm:$0xf]
    %v242 = vld [vmem:[%s7 + $0xc] sm:$0xf]
    %v243 = vpack.c.bf16 %v177, %v177
    %v256 = vperm.slane %v227, 0
    %v257 = vperm.slane %v228, 0
    %v258 = vperm.slane %v229, 0
    %v259 = vperm.slane %v230, 0
    %v260 = vperm.slane %v231, 0
    %v261 = vperm.slane %v232, 0
    %v262 = vperm.slane %v233, 0
    %v263 = vperm.slane %v234, 0
    %v264 = vperm.slane %v235, 0
    %v265 = vperm.slane %v236, 0
    %v266 = vperm.slane %v237, 0
    %v267 = vperm.slane %v238, 0
    %v284 = vunpack.c.l.b16 %v179
    %v285 = vunpack.c.l.b16 %v180
    %v286 = vunpack.c.l.b16 %v181
    %v287 = vunpack.c.l.b16 %v182
    %v288 = vpack.c.b16 %v285, %v284
    %v289 = vpack.c.b16 %v287, %v286
    %v293 = vsel %vm117, %v243, 0
    %295 = vmatpush.bf16.msra.mxu0 0
    %296 = vmatpush.bf16.msra.mxu0 0
    %297 = vmatpush.bf16.msra.mxu0 0
    %298 = vmatpush.bf16.msra.mxu0 0
    %299 = vmatpush.bf16.msra.mxu0 0
    %300 = vmatpush.bf16.msra.mxu0 0
    %301 = vmatpush.bf16.msra.mxu0 %v289
    %302 = vmatpush.bf16.msra.mxu0 %v288
    %303 = vmatmul.bf16.gmra.mxu0 %v293
    %v304 = vpop.f32.mrf.mxu0
    %v305 = vadd.f32 %v256, %v304
    %v306 = vpop.f32.mrf.mxu0
    %307 = vdwg.mxu0
    %v312 = vunpack.c.l.b16 %v183
    %v313 = vunpack.c.l.b16 %v184
    %v314 = vunpack.c.l.b16 %v185
    %v315 = vunpack.c.l.b16 %v186
    %v316 = vpack.c.b16 %v313, %v312
    %v317 = vpack.c.b16 %v315, %v314
    %320 = vmatpush.bf16.msra.mxu0 0
    %321 = vmatpush.bf16.msra.mxu0 0
    %322 = vmatpush.bf16.msra.mxu0 0
    %323 = vmatpush.bf16.msra.mxu0 0
    %324 = vmatpush.bf16.msra.mxu0 0
    %325 = vmatpush.bf16.msra.mxu0 0
    %326 = vmatpush.bf16.msra.mxu0 %v317
    %327 = vmatpush.bf16.msra.mxu0 %v316
    %328 = vmatmul.bf16.gmra.mxu0 %v293
    %v329 = vpop.f32.mrf.mxu0
    %v330 = vadd.f32 %v257, %v329
    %v331 = vpop.f32.mrf.mxu0
    %332 = vdwg.mxu0
    %v337 = vunpack.c.l.b16 %v187
    %v338 = vunpack.c.l.b16 %v188
    %v339 = vunpack.c.l.b16 %v189
    %v340 = vunpack.c.l.b16 %v190
    %v341 = vpack.c.b16 %v338, %v337
    %v342 = vpack.c.b16 %v340, %v339
    %345 = vmatpush.bf16.msra.mxu0 0
    %346 = vmatpush.bf16.msra.mxu0 0
    %347 = vmatpush.bf16.msra.mxu0 0
    %348 = vmatpush.bf16.msra.mxu0 0
    %349 = vmatpush.bf16.msra.mxu0 0
    %350 = vmatpush.bf16.msra.mxu0 0
    %351 = vmatpush.bf16.msra.mxu0 %v342
    %352 = vmatpush.bf16.msra.mxu0 %v341
    %353 = vmatmul.bf16.gmra.mxu0 %v293
    %v354 = vpop.f32.mrf.mxu0
    %v355 = vadd.f32 %v258, %v354
    %v356 = vpop.f32.mrf.mxu0
    %357 = vdwg.mxu0
    %v362 = vunpack.c.l.b16 %v191
    %v363 = vunpack.c.l.b16 %v192
    %v364 = vunpack.c.l.b16 %v193
    %v365 = vunpack.c.l.b16 %v194
    %v366 = vpack.c.b16 %v363, %v362
    %v367 = vpack.c.b16 %v365, %v364
    %370 = vmatpush.bf16.msra.mxu0 0
    %371 = vmatpush.bf16.msra.mxu0 0
    %372 = vmatpush.bf16.msra.mxu0 0
    %373 = vmatpush.bf16.msra.mxu0 0
    %374 = vmatpush.bf16.msra.mxu0 0
    %375 = vmatpush.bf16.msra.mxu0 0
    %376 = vmatpush.bf16.msra.mxu0 %v367
    %377 = vmatpush.bf16.msra.mxu0 %v366
    %378 = vmatmul.bf16.gmra.mxu0 %v293
    %v379 = vpop.f32.mrf.mxu0
    %v380 = vadd.f32 %v259, %v379
    %v381 = vpop.f32.mrf.mxu0
    %382 = vdwg.mxu0
    %v387 = vunpack.c.l.b16 %v195
    %v388 = vunpack.c.l.b16 %v196
    %v389 = vunpack.c.l.b16 %v197
    %v390 = vunpack.c.l.b16 %v198
    %v391 = vpack.c.b16 %v388, %v387
    %v392 = vpack.c.b16 %v390, %v389
    %395 = vmatpush.bf16.msra.mxu0 0
    %396 = vmatpush.bf16.msra.mxu0 0
    %397 = vmatpush.bf16.msra.mxu0 0
    %398 = vmatpush.bf16.msra.mxu0 0
    %399 = vmatpush.bf16.msra.mxu0 0
    %400 = vmatpush.bf16.msra.mxu0 0
    %401 = vmatpush.bf16.msra.mxu0 %v392
    %402 = vmatpush.bf16.msra.mxu0 %v391
    %403 = vmatmul.bf16.gmra.mxu0 %v293
    %v404 = vpop.f32.mrf.mxu0
    %v405 = vadd.f32 %v260, %v404
    %v406 = vpop.f32.mrf.mxu0
    %407 = vdwg.mxu0
    %v412 = vunpack.c.l.b16 %v199
    %v413 = vunpack.c.l.b16 %v200
    %v414 = vunpack.c.l.b16 %v201
    %v415 = vunpack.c.l.b16 %v202
    %v416 = vpack.c.b16 %v413, %v412
    %v417 = vpack.c.b16 %v415, %v414
    %420 = vmatpush.bf16.msra.mxu0 0
    %421 = vmatpush.bf16.msra.mxu0 0
    %422 = vmatpush.bf16.msra.mxu0 0
    %423 = vmatpush.bf16.msra.mxu0 0
    %424 = vmatpush.bf16.msra.mxu0 0
    %425 = vmatpush.bf16.msra.mxu0 0
    %426 = vmatpush.bf16.msra.mxu0 %v417
    %427 = vmatpush.bf16.msra.mxu0 %v416
    %428 = vmatmul.bf16.gmra.mxu0 %v293
    %v429 = vpop.f32.mrf.mxu0
    %v430 = vadd.f32 %v261, %v429
    %v431 = vpop.f32.mrf.mxu0
    %432 = vdwg.mxu0
    %v437 = vunpack.c.l.b16 %v203
    %v438 = vunpack.c.l.b16 %v204
    %v439 = vunpack.c.l.b16 %v205
    %v440 = vunpack.c.l.b16 %v206
    %v441 = vpack.c.b16 %v438, %v437
    %v442 = vpack.c.b16 %v440, %v439
    %445 = vmatpush.bf16.msra.mxu0 0
    %446 = vmatpush.bf16.msra.mxu0 0
    %447 = vmatpush.bf16.msra.mxu0 0
    %448 = vmatpush.bf16.msra.mxu0 0
    %449 = vmatpush.bf16.msra.mxu0 0
    %450 = vmatpush.bf16.msra.mxu0 0
    %451 = vmatpush.bf16.msra.mxu0 %v442
    %452 = vmatpush.bf16.msra.mxu0 %v441
    %453 = vmatmul.bf16.gmra.mxu0 %v293
    %v454 = vpop.f32.mrf.mxu0
    %v455 = vadd.f32 %v262, %v454
    %v456 = vpop.f32.mrf.mxu0
    %457 = vdwg.mxu0
    %v462 = vunpack.c.l.b16 %v207
    %v463 = vunpack.c.l.b16 %v208
    %v464 = vunpack.c.l.b16 %v209
    %v465 = vunpack.c.l.b16 %v210
    %v466 = vpack.c.b16 %v463, %v462
    %v467 = vpack.c.b16 %v465, %v464
    %470 = vmatpush.bf16.msra.mxu0 0
    %471 = vmatpush.bf16.msra.mxu0 0
    %472 = vmatpush.bf16.msra.mxu0 0
    %473 = vmatpush.bf16.msra.mxu0 0
    %474 = vmatpush.bf16.msra.mxu0 0
    %475 = vmatpush.bf16.msra.mxu0 0
    %476 = vmatpush.bf16.msra.mxu0 %v467
    %477 = vmatpush.bf16.msra.mxu0 %v466
    %478 = vmatmul.bf16.gmra.mxu0 %v293
    %v479 = vpop.f32.mrf.mxu0
    %v480 = vadd.f32 %v263, %v479
    %v481 = vpop.f32.mrf.mxu0
    %482 = vdwg.mxu0
    %v487 = vunpack.c.l.b16 %v211
    %v488 = vunpack.c.l.b16 %v212
    %v489 = vunpack.c.l.b16 %v213
    %v490 = vunpack.c.l.b16 %v214
    %v491 = vpack.c.b16 %v488, %v487
    %v492 = vpack.c.b16 %v490, %v489
    %495 = vmatpush.bf16.msra.mxu0 0
    %496 = vmatpush.bf16.msra.mxu0 0
    %497 = vmatpush.bf16.msra.mxu0 0
    %498 = vmatpush.bf16.msra.mxu0 0
    %499 = vmatpush.bf16.msra.mxu0 0
    %500 = vmatpush.bf16.msra.mxu0 0
    %501 = vmatpush.bf16.msra.mxu0 %v492
    %502 = vmatpush.bf16.msra.mxu0 %v491
    %503 = vmatmul.bf16.gmra.mxu0 %v293
    %v504 = vpop.f32.mrf.mxu0
    %v505 = vadd.f32 %v264, %v504
    %v506 = vpop.f32.mrf.mxu0
    %507 = vdwg.mxu0
    %v512 = vunpack.c.l.b16 %v215
    %v513 = vunpack.c.l.b16 %v216
    %v514 = vunpack.c.l.b16 %v217
    %v515 = vunpack.c.l.b16 %v218
    %v516 = vpack.c.b16 %v513, %v512
    %v517 = vpack.c.b16 %v515, %v514
    %520 = vmatpush.bf16.msra.mxu0 0
    %521 = vmatpush.bf16.msra.mxu0 0
    %522 = vmatpush.bf16.msra.mxu0 0
    %523 = vmatpush.bf16.msra.mxu0 0
    %524 = vmatpush.bf16.msra.mxu0 0
    %525 = vmatpush.bf16.msra.mxu0 0
    %526 = vmatpush.bf16.msra.mxu0 %v517
    %527 = vmatpush.bf16.msra.mxu0 %v516
    %528 = vmatmul.bf16.gmra.mxu0 %v293
    %v529 = vpop.f32.mrf.mxu0
    %v530 = vadd.f32 %v265, %v529
    %v531 = vpop.f32.mrf.mxu0
    %532 = vdwg.mxu0
    %v537 = vunpack.c.l.b16 %v219
    %v538 = vunpack.c.l.b16 %v220
    %v539 = vunpack.c.l.b16 %v221
    %v540 = vunpack.c.l.b16 %v222
    %v541 = vpack.c.b16 %v538, %v537
    %v542 = vpack.c.b16 %v540, %v539
    %545 = vmatpush.bf16.msra.mxu0 0
    %546 = vmatpush.bf16.msra.mxu0 0
    %547 = vmatpush.bf16.msra.mxu0 0
    %548 = vmatpush.bf16.msra.mxu0 0
    %549 = vmatpush.bf16.msra.mxu0 0
    %550 = vmatpush.bf16.msra.mxu0 0
    %551 = vmatpush.bf16.msra.mxu0 %v542
    %552 = vmatpush.bf16.msra.mxu0 %v541
    %553 = vmatmul.bf16.gmra.mxu0 %v293
    %v554 = vpop.f32.mrf.mxu0
    %v555 = vadd.f32 %v266, %v554
    %v556 = vpop.f32.mrf.mxu0
    %557 = vdwg.mxu0
    %v562 = vunpack.c.l.b16 %v223
    %v563 = vunpack.c.l.b16 %v224
    %v564 = vunpack.c.l.b16 %v225
    %v565 = vunpack.c.l.b16 %v226
    %v566 = vpack.c.b16 %v563, %v562
    %v567 = vpack.c.b16 %v565, %v564
    %570 = vmatpush.bf16.msra.mxu0 0
    %571 = vmatpush.bf16.msra.mxu0 0
    %572 = vmatpush.bf16.msra.mxu0 0
    %573 = vmatpush.bf16.msra.mxu0 0
    %574 = vmatpush.bf16.msra.mxu0 0
    %575 = vmatpush.bf16.msra.mxu0 0
    %576 = vmatpush.bf16.msra.mxu0 %v567
    %577 = vmatpush.bf16.msra.mxu0 %v566
    %578 = vmatmul.bf16.gmra.mxu0 %v293
    %v579 = vpop.f32.mrf.mxu0
    %v580 = vadd.f32 %v267, %v579
    %v581 = vpop.f32.mrf.mxu0
    %582 = vdwg.mxu0
    %v583 = vpack.c.bf16 %v305, %v305
    %v584 = vpack.c.bf16 %v330, %v330
    %v585 = vpack.c.bf16 %v355, %v355
    %v586 = vpack.c.bf16 %v380, %v380
    %v587 = vpack.c.bf16 %v405, %v405
    %v588 = vpack.c.bf16 %v430, %v430
    %v589 = vpack.c.bf16 %v455, %v455
    %v590 = vpack.c.bf16 %v480, %v480
    %vm591 = vcmask 64512
    %v593 = vsel %vm591, %v583, 0
    %v596 = vsel %vm591, %v587, 0
    %598 = vmatpush.bf16.xpose.msra.mxu0 0
    %599 = vmatpush.bf16.xpose.msra.mxu0 0
    %600 = vmatpush.bf16.xpose.msra.mxu0 0
    %601 = vmatpush.bf16.xpose.msra.mxu0 0
    %602 = vmatpush.bf16.xpose.msra.mxu0 0
    %603 = vmatpush.bf16.xpose.msra.mxu0 0
    %604 = vmatpush.bf16.xpose.msra.mxu0 0
    %605 = vmatpush.bf16.xpose.msra.mxu0 %v596
    %606 = vmatmul.bf16.gmra.mxu0 %v593
    %v607 = vpop.f32.mrf.mxu0
    %v608 = vadd.f32 0.0, %v607
    %v609 = vpop.f32.mrf.mxu0
    %610 = vdwg.mxu0
    %v612 = vsel %vm591, %v584, 0
    %v615 = vsel %vm591, %v588, 0
    %617 = vmatpush.bf16.xpose.msra.mxu0 0
    %618 = vmatpush.bf16.xpose.msra.mxu0 0
    %619 = vmatpush.bf16.xpose.msra.mxu0 0
    %620 = vmatpush.bf16.xpose.msra.mxu0 0
    %621 = vmatpush.bf16.xpose.msra.mxu0 0
    %622 = vmatpush.bf16.xpose.msra.mxu0 0
    %623 = vmatpush.bf16.xpose.msra.mxu0 0
    %624 = vmatpush.bf16.xpose.msra.mxu0 %v615
    %625 = vmatmul.bf16.gmra.mxu0 %v612
    %v626 = vpop.f32.mrf.mxu0
    %v627 = vadd.f32 0.0, %v626
    %v628 = vpop.f32.mrf.mxu0
    %629 = vdwg.mxu0
    %v631 = vsel %vm591, %v585, 0
    %v634 = vsel %vm591, %v589, 0
    %636 = vmatpush.bf16.xpose.msra.mxu0 0
    %637 = vmatpush.bf16.xpose.msra.mxu0 0
    %638 = vmatpush.bf16.xpose.msra.mxu0 0
    %639 = vmatpush.bf16.xpose.msra.mxu0 0
    %640 = vmatpush.bf16.xpose.msra.mxu0 0
    %641 = vmatpush.bf16.xpose.msra.mxu0 0
    %642 = vmatpush.bf16.xpose.msra.mxu0 0
    %643 = vmatpush.bf16.xpose.msra.mxu0 %v634
    %644 = vmatmul.bf16.gmra.mxu0 %v631
    %v645 = vpop.f32.mrf.mxu0
    %v646 = vadd.f32 0.0, %v645
    %v647 = vpop.f32.mrf.mxu0
    %648 = vdwg.mxu0
    %v650 = vsel %vm591, %v586, 0
    %v653 = vsel %vm591, %v590, 0
    %655 = vmatpush.bf16.xpose.msra.mxu0 0
    %656 = vmatpush.bf16.xpose.msra.mxu0 0
    %657 = vmatpush.bf16.xpose.msra.mxu0 0
    %658 = vmatpush.bf16.xpose.msra.mxu0 0
    %659 = vmatpush.bf16.xpose.msra.mxu0 0
    %660 = vmatpush.bf16.xpose.msra.mxu0 0
    %661 = vmatpush.bf16.xpose.msra.mxu0 0
    %662 = vmatpush.bf16.xpose.msra.mxu0 %v653
    %663 = vmatmul.bf16.gmra.mxu0 %v650
    %v664 = vpop.f32.mrf.mxu0
    %v665 = vadd.f32 0.0, %v664
    %v666 = vpop.f32.mrf.mxu0
    %667 = vdwg.mxu0
    %v668 = vsel %vm591, %v608, -inf
    %669 = vmax.xlane.f32.xlu0 %v668
    %v670 = vpop.xlane.xlu0 %669
    %v671 = vsel %vm591, %v627, -inf
    %672 = vmax.xlane.f32.xlu0 %v671
    %v673 = vpop.xlane.xlu0 %672
    %v674 = vsel %vm591, %v646, -inf
    %675 = vmax.xlane.f32.xlu0 %v674
    %v676 = vpop.xlane.xlu0 %675
    %v677 = vsel %vm591, %v665, -inf
    %678 = vmax.xlane.f32.xlu0 %v677
    %v679 = vpop.xlane.xlu0 %678
    %v680 = vsub.f32 %v608, %v670
    %v681 = vsub.f32 %v627, %v673
    %v682 = vsub.f32 %v646, %v676
    %v683 = vsub.f32 %v665, %v679
    %v684 = vmul.f32 %v680, 1.442695
    %v685 = vpow.pop %v684
    %v686 = vmul.f32 %v681, 1.442695
    %v687 = vpow.pop %v686
    %v688 = vmul.f32 %v682, 1.442695
    %v689 = vpow.pop %v688
    %v690 = vmul.f32 %v683, 1.442695
    %v691 = vpow.pop %v690
    %v692 = vsel %vm591, %v685, 0.0
    %693 = vadd.xlane.f32.xlu0 %v692
    %v694 = vpop.xlane.xlu0 %693
    %v695 = vsel %vm591, %v687, 0.0
    %696 = vadd.xlane.f32.xlu0 %v695
    %v697 = vpop.xlane.xlu0 %696
    %v698 = vsel %vm591, %v689, 0.0
    %699 = vadd.xlane.f32.xlu0 %v698
    %v700 = vpop.xlane.xlu0 %699
    %v701 = vsel %vm591, %v691, 0.0
    %702 = vadd.xlane.f32.xlu0 %v701
    %v703 = vpop.xlane.xlu0 %702
    %v704 = vrcp.pop %v694
    %v705 = vrcp.pop %v697
    %v706 = vrcp.pop %v700
    %v707 = vrcp.pop %v703
    %v708 = vmul.f32 %v685, %v704
    %v709 = vmul.f32 %v687, %v705
    %v710 = vmul.f32 %v689, %v706
    %v711 = vmul.f32 %v691, %v707
    %v712 = vpack.c.bf16 %v708, %v708
    %v713 = vpack.c.bf16 %v709, %v709
    %v714 = vpack.c.bf16 %v710, %v710
    %v715 = vpack.c.bf16 %v711, %v711
    %v716 = vpack.c.bf16 %v505, %v505
    %v717 = vpack.c.bf16 %v530, %v530
    %v718 = vpack.c.bf16 %v555, %v555
    %v719 = vpack.c.bf16 %v580, %v580
    %v721 = vsel %vm591, %v712, 0
    %vm723 = vcmask 1043456
    %v725 = vsel %vm723, %v716, 0
    %727 = vmatpush.bf16.msra.mxu0 0
    %728 = vmatpush.bf16.msra.mxu0 0
    %729 = vmatpush.bf16.msra.mxu0 0
    %730 = vmatpush.bf16.msra.mxu0 0
    %731 = vmatpush.bf16.msra.mxu0 0
    %732 = vmatpush.bf16.msra.mxu0 0
    %733 = vmatpush.bf16.msra.mxu0 0
    %734 = vmatpush.bf16.msra.mxu0 %v725
    %735 = vmatmul.bf16.gmra.mxu0 %v721
    %v736 = vpop.f32.mrf.mxu0
    %v737 = vadd.f32 0.0, %v736
    %v738 = vpop.f32.mrf.mxu0
    %739 = vdwg.mxu0
    %v741 = vsel %vm591, %v713, 0
    %v744 = vsel %vm723, %v717, 0
    %746 = vmatpush.bf16.msra.mxu0 0
    %747 = vmatpush.bf16.msra.mxu0 0
    %748 = vmatpush.bf16.msra.mxu0 0
    %749 = vmatpush.bf16.msra.mxu0 0
    %750 = vmatpush.bf16.msra.mxu0 0
    %751 = vmatpush.bf16.msra.mxu0 0
    %752 = vmatpush.bf16.msra.mxu0 0
    %753 = vmatpush.bf16.msra.mxu0 %v744
    %754 = vmatmul.bf16.gmra.mxu0 %v741
    %v755 = vpop.f32.mrf.mxu0
    %v756 = vadd.f32 0.0, %v755
    %v757 = vpop.f32.mrf.mxu0
    %758 = vdwg.mxu0
    %v760 = vsel %vm591, %v714, 0
    %v763 = vsel %vm723, %v718, 0
    %765 = vmatpush.bf16.msra.mxu0 0
    %766 = vmatpush.bf16.msra.mxu0 0
    %767 = vmatpush.bf16.msra.mxu0 0
    %768 = vmatpush.bf16.msra.mxu0 0
    %769 = vmatpush.bf16.msra.mxu0 0
    %770 = vmatpush.bf16.msra.mxu0 0
    %771 = vmatpush.bf16.msra.mxu0 0
    %772 = vmatpush.bf16.msra.mxu0 %v763
    %773 = vmatmul.bf16.gmra.mxu0 %v760
    %v774 = vpop.f32.mrf.mxu0
    %v775 = vadd.f32 0.0, %v774
    %v776 = vpop.f32.mrf.mxu0
    %777 = vdwg.mxu0
    %v779 = vsel %vm591, %v715, 0
    %v782 = vsel %vm723, %v719, 0
    %784 = vmatpush.bf16.msra.mxu0 0
    %785 = vmatpush.bf16.msra.mxu0 0
    %786 = vmatpush.bf16.msra.mxu0 0
    %787 = vmatpush.bf16.msra.mxu0 0
    %788 = vmatpush.bf16.msra.mxu0 0
    %789 = vmatpush.bf16.msra.mxu0 0
    %790 = vmatpush.bf16.msra.mxu0 0
    %791 = vmatpush.bf16.msra.mxu0 %v782
    %792 = vmatmul.bf16.gmra.mxu0 %v779
    %v793 = vpop.f32.mrf.mxu0
    %v794 = vadd.f32 0.0, %v793
    %v795 = vpop.f32.mrf.mxu0
    %796 = vdwg.mxu0
    %v797 = vpack.c.bf16 %v737, %v737
    %v798 = vpack.c.bf16 %v756, %v756
    %v799 = vpack.c.bf16 %v775, %v775
    %v800 = vpack.c.bf16 %v794, %v794
    %v802 = vsel %vm591, %v797, 0
    %v805 = vsel %vm723, %v239, 0
    %807 = vmatpush.bf16.msra.mxu0 0
    %808 = vmatpush.bf16.msra.mxu0 0
    %809 = vmatpush.bf16.msra.mxu0 0
    %810 = vmatpush.bf16.msra.mxu0 0
    %811 = vmatpush.bf16.msra.mxu0 0
    %812 = vmatpush.bf16.msra.mxu0 0
    %813 = vmatpush.bf16.msra.mxu0 0
    %814 = vmatpush.bf16.msra.mxu0 %v805
    %815 = vmatmul.bf16.gmra.mxu0 %v802
    %v816 = vpop.f32.mrf.mxu0
    %v817 = vadd.f32 0.0, %v816
    %v818 = vpop.f32.mrf.mxu0
    %819 = vdwg.mxu0
    %v821 = vsel %vm591, %v798, 0
    %v824 = vsel %vm723, %v240, 0
    %826 = vmatpush.bf16.msra.mxu0 0
    %827 = vmatpush.bf16.msra.mxu0 0
    %828 = vmatpush.bf16.msra.mxu0 0
    %829 = vmatpush.bf16.msra.mxu0 0
    %830 = vmatpush.bf16.msra.mxu0 0
    %831 = vmatpush.bf16.msra.mxu0 0
    %832 = vmatpush.bf16.msra.mxu0 0
    %833 = vmatpush.bf16.msra.mxu0 %v824
    %834 = vmatmul.bf16.gmra.mxu0 %v821
    %v835 = vpop.f32.mrf.mxu0
    %v836 = vadd.f32 0.0, %v835
    %v837 = vpop.f32.mrf.mxu0
    %838 = vdwg.mxu0
    %v840 = vsel %vm591, %v799, 0
    %v843 = vsel %vm723, %v241, 0
    %845 = vmatpush.bf16.msra.mxu0 0
    %846 = vmatpush.bf16.msra.mxu0 0
    %847 = vmatpush.bf16.msra.mxu0 0
    %848 = vmatpush.bf16.msra.mxu0 0
    %849 = vmatpush.bf16.msra.mxu0 0
    %850 = vmatpush.bf16.msra.mxu0 0
    %851 = vmatpush.bf16.msra.mxu0 0
    %852 = vmatpush.bf16.msra.mxu0 %v843
    %853 = vmatmul.bf16.gmra.mxu0 %v840
    %v854 = vpop.f32.mrf.mxu0
    %v855 = vadd.f32 0.0, %v854
    %v856 = vpop.f32.mrf.mxu0
    %857 = vdwg.mxu0
    %v859 = vsel %vm591, %v800, 0
    %v862 = vsel %vm723, %v242, 0
    %864 = vmatpush.bf16.msra.mxu0 0
    %865 = vmatpush.bf16.msra.mxu0 0
    %866 = vmatpush.bf16.msra.mxu0 0
    %867 = vmatpush.bf16.msra.mxu0 0
    %868 = vmatpush.bf16.msra.mxu0 0
    %869 = vmatpush.bf16.msra.mxu0 0
    %870 = vmatpush.bf16.msra.mxu0 0
    %871 = vmatpush.bf16.msra.mxu0 %v862
    %872 = vmatmul.bf16.gmra.mxu0 %v859
    %v873 = vpop.f32.mrf.mxu0
    %v874 = vadd.f32 0.0, %v873
    %v875 = vpop.f32.mrf.mxu0
    %876 = vdwg.mxu0
    %v877 = vsel %vm117, %v817, 0.0
    %v878 = vsel %vm117, %v836, 0.0
    %v879 = vadd.f32 %v877, %v878
    %v880 = vsel %vm117, %v855, 0.0
    %v881 = vadd.f32 %v879, %v880
    %v882 = vsel %vm117, %v874, 0.0
    %v883 = vadd.f32 %v881, %v882
    %v884 = vpack.c.bf16 %v178, %v178
    %v886 = vsel %vm117, %v884, 0
    %888 = vmatpush.bf16.msra.mxu0 0
    %889 = vmatpush.bf16.msra.mxu0 0
    %890 = vmatpush.bf16.msra.mxu0 0
    %891 = vmatpush.bf16.msra.mxu0 0
    %892 = vmatpush.bf16.msra.mxu0 0
    %893 = vmatpush.bf16.msra.mxu0 0
    %894 = vmatpush.bf16.msra.mxu0 %v289
    %895 = vmatpush.bf16.msra.mxu0 %v288
    %896 = vmatmul.bf16.gmra.mxu0 %v886
    %v897 = vpop.f32.mrf.mxu0
    %v898 = vadd.f32 %v256, %v897
    %v899 = vpop.f32.mrf.mxu0
    %900 = vdwg.mxu0
    %901 = vmatpush.bf16.msra.mxu0 0
    %902 = vmatpush.bf16.msra.mxu0 0
    %903 = vmatpush.bf16.msra.mxu0 0
    %904 = vmatpush.bf16.msra.mxu0 0
    %905 = vmatpush.bf16.msra.mxu0 0
    %906 = vmatpush.bf16.msra.mxu0 0
    %907 = vmatpush.bf16.msra.mxu0 %v317
    %908 = vmatpush.bf16.msra.mxu0 %v316
    %909 = vmatmul.bf16.gmra.mxu0 %v886
    %v910 = vpop.f32.mrf.mxu0
    %v911 = vadd.f32 %v257, %v910
    %v912 = vpop.f32.mrf.mxu0
    %913 = vdwg.mxu0
    %914 = vmatpush.bf16.msra.mxu0 0
    %915 = vmatpush.bf16.msra.mxu0 0
    %916 = vmatpush.bf16.msra.mxu0 0
    %917 = vmatpush.bf16.msra.mxu0 0
    %918 = vmatpush.bf16.msra.mxu0 0
    %919 = vmatpush.bf16.msra.mxu0 0
    %920 = vmatpush.bf16.msra.mxu0 %v342
    %921 = vmatpush.bf16.msra.mxu0 %v341
    %922 = vmatmul.bf16.gmra.mxu0 %v886
    %v923 = vpop.f32.mrf.mxu0
    %v924 = vadd.f32 %v258, %v923
    %v925 = vpop.f32.mrf.mxu0
    %926 = vdwg.mxu0
    %927 = vmatpush.bf16.msra.mxu0 0
    %928 = vmatpush.bf16.msra.mxu0 0
    %929 = vmatpush.bf16.msra.mxu0 0
    %930 = vmatpush.bf16.msra.mxu0 0
    %931 = vmatpush.bf16.msra.mxu0 0
    %932 = vmatpush.bf16.msra.mxu0 0
    %933 = vmatpush.bf16.msra.mxu0 %v367
    %934 = vmatpush.bf16.msra.mxu0 %v366
    %935 = vmatmul.bf16.gmra.mxu0 %v886
    %v936 = vpop.f32.mrf.mxu0
    %v937 = vadd.f32 %v259, %v936
    %v938 = vpop.f32.mrf.mxu0
    %939 = vdwg.mxu0
    %940 = vmatpush.bf16.msra.mxu0 0
    %941 = vmatpush.bf16.msra.mxu0 0
    %942 = vmatpush.bf16.msra.mxu0 0
    %943 = vmatpush.bf16.msra.mxu0 0
    %944 = vmatpush.bf16.msra.mxu0 0
    %945 = vmatpush.bf16.msra.mxu0 0
    %946 = vmatpush.bf16.msra.mxu0 %v392
    %947 = vmatpush.bf16.msra.mxu0 %v391
    %948 = vmatmul.bf16.gmra.mxu0 %v886
    %v949 = vpop.f32.mrf.mxu0
    %v950 = vadd.f32 %v260, %v949
    %v951 = vpop.f32.mrf.mxu0
    %952 = vdwg.mxu0
    %953 = vmatpush.bf16.msra.mxu0 0
    %954 = vmatpush.bf16.msra.mxu0 0
    %955 = vmatpush.bf16.msra.mxu0 0
    %956 = vmatpush.bf16.msra.mxu0 0
    %957 = vmatpush.bf16.msra.mxu0 0
    %958 = vmatpush.bf16.msra.mxu0 0
    %959 = vmatpush.bf16.msra.mxu0 %v417
    %960 = vmatpush.bf16.msra.mxu0 %v416
    %961 = vmatmul.bf16.gmra.mxu0 %v886
    %v962 = vpop.f32.mrf.mxu0
    %v963 = vadd.f32 %v261, %v962
    %v964 = vpop.f32.mrf.mxu0
    %965 = vdwg.mxu0
    %966 = vmatpush.bf16.msra.mxu0 0
    %967 = vmatpush.bf16.msra.mxu0 0
    %968 = vmatpush.bf16.msra.mxu0 0
    %969 = vmatpush.bf16.msra.mxu0 0
    %970 = vmatpush.bf16.msra.mxu0 0
    %971 = vmatpush.bf16.msra.mxu0 0
    %972 = vmatpush.bf16.msra.mxu0 %v442
    %973 = vmatpush.bf16.msra.mxu0 %v441
    %974 = vmatmul.bf16.gmra.mxu0 %v886
    %v975 = vpop.f32.mrf.mxu0
    %v976 = vadd.f32 %v262, %v975
    %v977 = vpop.f32.mrf.mxu0
    %978 = vdwg.mxu0
    %979 = vmatpush.bf16.msra.mxu0 0
    %980 = vmatpush.bf16.msra.mxu0 0
    %981 = vmatpush.bf16.msra.mxu0 0
    %982 = vmatpush.bf16.msra.mxu0 0
    %983 = vmatpush.bf16.msra.mxu0 0
    %984 = vmatpush.bf16.msra.mxu0 0
    %985 = vmatpush.bf16.msra.mxu0 %v467
    %986 = vmatpush.bf16.msra.mxu0 %v466
    %987 = vmatmul.bf16.gmra.mxu0 %v886
    %v988 = vpop.f32.mrf.mxu0
    %v989 = vadd.f32 %v263, %v988
    %v990 = vpop.f32.mrf.mxu0
    %991 = vdwg.mxu0
    %992 = vmatpush.bf16.msra.mxu0 0
    %993 = vmatpush.bf16.msra.mxu0 0
    %994 = vmatpush.bf16.msra.mxu0 0
    %995 = vmatpush.bf16.msra.mxu0 0
    %996 = vmatpush.bf16.msra.mxu0 0
    %997 = vmatpush.bf16.msra.mxu0 0
    %998 = vmatpush.bf16.msra.mxu0 %v492
    %999 = vmatpush.bf16.msra.mxu0 %v491
    %1000 = vmatmul.bf16.gmra.mxu0 %v886
    %v1001 = vpop.f32.mrf.mxu0
    %v1002 = vadd.f32 %v264, %v1001
    %v1003 = vpop.f32.mrf.mxu0
    %1004 = vdwg.mxu0
    %1005 = vmatpush.bf16.msra.mxu0 0
    %1006 = vmatpush.bf16.msra.mxu0 0
    %1007 = vmatpush.bf16.msra.mxu0 0
    %1008 = vmatpush.bf16.msra.mxu0 0
    %1009 = vmatpush.bf16.msra.mxu0 0
    %1010 = vmatpush.bf16.msra.mxu0 0
    %1011 = vmatpush.bf16.msra.mxu0 %v517
    %1012 = vmatpush.bf16.msra.mxu0 %v516
    %1013 = vmatmul.bf16.gmra.mxu0 %v886
    %v1014 = vpop.f32.mrf.mxu0
    %v1015 = vadd.f32 %v265, %v1014
    %v1016 = vpop.f32.mrf.mxu0
    %1017 = vdwg.mxu0
    %1018 = vmatpush.bf16.msra.mxu0 0
    %1019 = vmatpush.bf16.msra.mxu0 0
    %1020 = vmatpush.bf16.msra.mxu0 0
    %1021 = vmatpush.bf16.msra.mxu0 0
    %1022 = vmatpush.bf16.msra.mxu0 0
    %1023 = vmatpush.bf16.msra.mxu0 0
    %1024 = vmatpush.bf16.msra.mxu0 %v542
    %1025 = vmatpush.bf16.msra.mxu0 %v541
    %1026 = vmatmul.bf16.gmra.mxu0 %v886
    %v1027 = vpop.f32.mrf.mxu0
    %v1028 = vadd.f32 %v266, %v1027
    %v1029 = vpop.f32.mrf.mxu0
    %1030 = vdwg.mxu0
    %1031 = vmatpush.bf16.msra.mxu0 0
    %1032 = vmatpush.bf16.msra.mxu0 0
    %1033 = vmatpush.bf16.msra.mxu0 0
    %1034 = vmatpush.bf16.msra.mxu0 0
    %1035 = vmatpush.bf16.msra.mxu0 0
    %1036 = vmatpush.bf16.msra.mxu0 0
    %1037 = vmatpush.bf16.msra.mxu0 %v567
    %1038 = vmatpush.bf16.msra.mxu0 %v566
    %1039 = vmatmul.bf16.gmra.mxu0 %v886
    %v1040 = vpop.f32.mrf.mxu0
    %v1041 = vadd.f32 %v267, %v1040
    %v1042 = vpop.f32.mrf.mxu0
    %1043 = vdwg.mxu0
    %v1044 = vpack.c.bf16 %v898, %v898
    %v1045 = vpack.c.bf16 %v911, %v911
    %v1046 = vpack.c.bf16 %v924, %v924
    %v1047 = vpack.c.bf16 %v937, %v937
    %v1048 = vpack.c.bf16 %v950, %v950
    %v1049 = vpack.c.bf16 %v963, %v963
    %v1050 = vpack.c.bf16 %v976, %v976
    %v1051 = vpack.c.bf16 %v989, %v989
    %v1053 = vsel %vm591, %v1044, 0
    %v1056 = vsel %vm591, %v1048, 0
    %1058 = vmatpush.bf16.xpose.msra.mxu0 0
    %1059 = vmatpush.bf16.xpose.msra.mxu0 0
    %1060 = vmatpush.bf16.xpose.msra.mxu0 0
    %1061 = vmatpush.bf16.xpose.msra.mxu0 0
    %1062 = vmatpush.bf16.xpose.msra.mxu0 0
    %1063 = vmatpush.bf16.xpose.msra.mxu0 0
    %1064 = vmatpush.bf16.xpose.msra.mxu0 0
    %1065 = vmatpush.bf16.xpose.msra.mxu0 %v1056
    %1066 = vmatmul.bf16.gmra.mxu0 %v1053
    %v1067 = vpop.f32.mrf.mxu0
    %v1068 = vadd.f32 0.0, %v1067
    %v1069 = vpop.f32.mrf.mxu0
    %1070 = vdwg.mxu0
    %v1072 = vsel %vm591, %v1045, 0
    %v1075 = vsel %vm591, %v1049, 0
    %1077 = vmatpush.bf16.xpose.msra.mxu0 0
    %1078 = vmatpush.bf16.xpose.msra.mxu0 0
    %1079 = vmatpush.bf16.xpose.msra.mxu0 0
    %1080 = vmatpush.bf16.xpose.msra.mxu0 0
    %1081 = vmatpush.bf16.xpose.msra.mxu0 0
    %1082 = vmatpush.bf16.xpose.msra.mxu0 0
    %1083 = vmatpush.bf16.xpose.msra.mxu0 0
    %1084 = vmatpush.bf16.xpose.msra.mxu0 %v1075
    %1085 = vmatmul.bf16.gmra.mxu0 %v1072
    %v1086 = vpop.f32.mrf.mxu0
    %v1087 = vadd.f32 0.0, %v1086
    %v1088 = vpop.f32.mrf.mxu0
    %1089 = vdwg.mxu0
    %v1091 = vsel %vm591, %v1046, 0
    %v1094 = vsel %vm591, %v1050, 0
    %1096 = vmatpush.bf16.xpose.msra.mxu0 0
    %1097 = vmatpush.bf16.xpose.msra.mxu0 0
    %1098 = vmatpush.bf16.xpose.msra.mxu0 0
    %1099 = vmatpush.bf16.xpose.msra.mxu0 0
    %1100 = vmatpush.bf16.xpose.msra.mxu0 0
    %1101 = vmatpush.bf16.xpose.msra.mxu0 0
    %1102 = vmatpush.bf16.xpose.msra.mxu0 0
    %1103 = vmatpush.bf16.xpose.msra.mxu0 %v1094
    %1104 = vmatmul.bf16.gmra.mxu0 %v1091
    %v1105 = vpop.f32.mrf.mxu0
    %v1106 = vadd.f32 0.0, %v1105
    %v1107 = vpop.f32.mrf.mxu0
    %1108 = vdwg.mxu0
    %v1110 = vsel %vm591, %v1047, 0
    %v1113 = vsel %vm591, %v1051, 0
    %1115 = vmatpush.bf16.xpose.msra.mxu0 0
    %1116 = vmatpush.bf16.xpose.msra.mxu0 0
    %1117 = vmatpush.bf16.xpose.msra.mxu0 0
    %1118 = vmatpush.bf16.xpose.msra.mxu0 0
    %1119 = vmatpush.bf16.xpose.msra.mxu0 0
    %1120 = vmatpush.bf16.xpose.msra.mxu0 0
    %1121 = vmatpush.bf16.xpose.msra.mxu0 0
    %1122 = vmatpush.bf16.xpose.msra.mxu0 %v1113
    %1123 = vmatmul.bf16.gmra.mxu0 %v1110
    %v1124 = vpop.f32.mrf.mxu0
    %v1125 = vadd.f32 0.0, %v1124
    %v1126 = vpop.f32.mrf.mxu0
    %1127 = vdwg.mxu0
    %v1128 = vsel %vm591, %v1068, -inf
    %1129 = vmax.xlane.f32.xlu0 %v1128
    %v1130 = vpop.xlane.xlu0 %1129
    %v1131 = vsel %vm591, %v1087, -inf
    %1132 = vmax.xlane.f32.xlu0 %v1131
    %v1133 = vpop.xlane.xlu0 %1132
    %v1134 = vsel %vm591, %v1106, -inf
    %1135 = vmax.xlane.f32.xlu0 %v1134
    %v1136 = vpop.xlane.xlu0 %1135
    %v1137 = vsel %vm591, %v1125, -inf
    %1138 = vmax.xlane.f32.xlu0 %v1137
    %v1139 = vpop.xlane.xlu0 %1138
    %v1140 = vsub.f32 %v1068, %v1130
    %v1141 = vsub.f32 %v1087, %v1133
    %v1142 = vsub.f32 %v1106, %v1136
    %v1143 = vsub.f32 %v1125, %v1139
    %v1144 = vmul.f32 %v1140, 1.442695
    %v1145 = vpow.pop %v1144
    %v1146 = vmul.f32 %v1141, 1.442695
    %v1147 = vpow.pop %v1146
    %v1148 = vmul.f32 %v1142, 1.442695
    %v1149 = vpow.pop %v1148
    %v1150 = vmul.f32 %v1143, 1.442695
    %v1151 = vpow.pop %v1150
    %v1152 = vsel %vm591, %v1145, 0.0
    %1153 = vadd.xlane.f32.xlu0 %v1152
    %v1154 = vpop.xlane.xlu0 %1153
    %v1155 = vsel %vm591, %v1147, 0.0
    %1156 = vadd.xlane.f32.xlu0 %v1155
    %v1157 = vpop.xlane.xlu0 %1156
    %v1158 = vsel %vm591, %v1149, 0.0
    %1159 = vadd.xlane.f32.xlu0 %v1158
    %v1160 = vpop.xlane.xlu0 %1159
    %v1161 = vsel %vm591, %v1151, 0.0
    %1162 = vadd.xlane.f32.xlu0 %v1161
    %v1163 = vpop.xlane.xlu0 %1162
    %v1164 = vrcp.pop %v1154
    %v1165 = vrcp.pop %v1157
    %v1166 = vrcp.pop %v1160
    %v1167 = vrcp.pop %v1163
    %v1168 = vmul.f32 %v1145, %v1164
    %v1169 = vmul.f32 %v1147, %v1165
    %v1170 = vmul.f32 %v1149, %v1166
    %v1171 = vmul.f32 %v1151, %v1167
    %v1172 = vpack.c.bf16 %v1168, %v1168
    %v1173 = vpack.c.bf16 %v1169, %v1169
    %v1174 = vpack.c.bf16 %v1170, %v1170
    %v1175 = vpack.c.bf16 %v1171, %v1171
    %v1176 = vpack.c.bf16 %v1002, %v1002
    %v1177 = vpack.c.bf16 %v1015, %v1015
    %v1178 = vpack.c.bf16 %v1028, %v1028
    %v1179 = vpack.c.bf16 %v1041, %v1041
    %v1181 = vsel %vm591, %v1172, 0
    %v1184 = vsel %vm723, %v1176, 0
    %1186 = vmatpush.bf16.msra.mxu0 0
    %1187 = vmatpush.bf16.msra.mxu0 0
    %1188 = vmatpush.bf16.msra.mxu0 0
    %1189 = vmatpush.bf16.msra.mxu0 0
    %1190 = vmatpush.bf16.msra.mxu0 0
    %1191 = vmatpush.bf16.msra.mxu0 0
    %1192 = vmatpush.bf16.msra.mxu0 0
    %1193 = vmatpush.bf16.msra.mxu0 %v1184
    %1194 = vmatmul.bf16.gmra.mxu0 %v1181
    %v1195 = vpop.f32.mrf.mxu0
    %v1196 = vadd.f32 0.0, %v1195
    %v1197 = vpop.f32.mrf.mxu0
    %1198 = vdwg.mxu0
    %v1200 = vsel %vm591, %v1173, 0
    %v1203 = vsel %vm723, %v1177, 0
    %1205 = vmatpush.bf16.msra.mxu0 0
    %1206 = vmatpush.bf16.msra.mxu0 0
    %1207 = vmatpush.bf16.msra.mxu0 0
    %1208 = vmatpush.bf16.msra.mxu0 0
    %1209 = vmatpush.bf16.msra.mxu0 0
    %1210 = vmatpush.bf16.msra.mxu0 0
    %1211 = vmatpush.bf16.msra.mxu0 0
    %1212 = vmatpush.bf16.msra.mxu0 %v1203
    %1213 = vmatmul.bf16.gmra.mxu0 %v1200
    %v1214 = vpop.f32.mrf.mxu0
    %v1215 = vadd.f32 0.0, %v1214
    %v1216 = vpop.f32.mrf.mxu0
    %1217 = vdwg.mxu0
    %v1219 = vsel %vm591, %v1174, 0
    %v1222 = vsel %vm723, %v1178, 0
    %1224 = vmatpush.bf16.msra.mxu0 0
    %1225 = vmatpush.bf16.msra.mxu0 0
    %1226 = vmatpush.bf16.msra.mxu0 0
    %1227 = vmatpush.bf16.msra.mxu0 0
    %1228 = vmatpush.bf16.msra.mxu0 0
    %1229 = vmatpush.bf16.msra.mxu0 0
    %1230 = vmatpush.bf16.msra.mxu0 0
    %1231 = vmatpush.bf16.msra.mxu0 %v1222
    %1232 = vmatmul.bf16.gmra.mxu0 %v1219
    %v1233 = vpop.f32.mrf.mxu0
    %v1234 = vadd.f32 0.0, %v1233
    %v1235 = vpop.f32.mrf.mxu0
    %1236 = vdwg.mxu0
    %v1238 = vsel %vm591, %v1175, 0
    %v1241 = vsel %vm723, %v1179, 0
    %1243 = vmatpush.bf16.msra.mxu0 0
    %1244 = vmatpush.bf16.msra.mxu0 0
    %1245 = vmatpush.bf16.msra.mxu0 0
    %1246 = vmatpush.bf16.msra.mxu0 0
    %1247 = vmatpush.bf16.msra.mxu0 0
    %1248 = vmatpush.bf16.msra.mxu0 0
    %1249 = vmatpush.bf16.msra.mxu0 0
    %1250 = vmatpush.bf16.msra.mxu0 %v1241
    %1251 = vmatmul.bf16.gmra.mxu0 %v1238
    %v1252 = vpop.f32.mrf.mxu0
    %v1253 = vadd.f32 0.0, %v1252
    %v1254 = vpop.f32.mrf.mxu0
    %1255 = vdwg.mxu0
    %v1256 = vpack.c.bf16 %v1196, %v1196
    %v1257 = vpack.c.bf16 %v1215, %v1215
    %v1258 = vpack.c.bf16 %v1234, %v1234
    %v1259 = vpack.c.bf16 %v1253, %v1253
    %v1261 = vsel %vm591, %v1256, 0
    %1263 = vmatpush.bf16.msra.mxu0 0
    %1264 = vmatpush.bf16.msra.mxu0 0
    %1265 = vmatpush.bf16.msra.mxu0 0
    %1266 = vmatpush.bf16.msra.mxu0 0
    %1267 = vmatpush.bf16.msra.mxu0 0
    %1268 = vmatpush.bf16.msra.mxu0 0
    %1269 = vmatpush.bf16.msra.mxu0 0
    %1270 = vmatpush.bf16.msra.mxu0 %v805
    %1271 = vmatmul.bf16.gmra.mxu0 %v1261
    %v1272 = vpop.f32.mrf.mxu0
    %v1273 = vadd.f32 0.0, %v1272
    %v1274 = vpop.f32.mrf.mxu0
    %1275 = vdwg.mxu0
    %v1277 = vsel %vm591, %v1257, 0
    %1279 = vmatpush.bf16.msra.mxu0 0
    %1280 = vmatpush.bf16.msra.mxu0 0
    %1281 = vmatpush.bf16.msra.mxu0 0
    %1282 = vmatpush.bf16.msra.mxu0 0
    %1283 = vmatpush.bf16.msra.mxu0 0
    %1284 = vmatpush.bf16.msra.mxu0 0
    %1285 = vmatpush.bf16.msra.mxu0 0
    %1286 = vmatpush.bf16.msra.mxu0 %v824
    %1287 = vmatmul.bf16.gmra.mxu0 %v1277
    %v1288 = vpop.f32.mrf.mxu0
    %v1289 = vadd.f32 0.0, %v1288
    %v1290 = vpop.f32.mrf.mxu0
    %1291 = vdwg.mxu0
    %v1293 = vsel %vm591, %v1258, 0
    %1295 = vmatpush.bf16.msra.mxu0 0
    %1296 = vmatpush.bf16.msra.mxu0 0
    %1297 = vmatpush.bf16.msra.mxu0 0
    %1298 = vmatpush.bf16.msra.mxu0 0
    %1299 = vmatpush.bf16.msra.mxu0 0
    %1300 = vmatpush.bf16.msra.mxu0 0
    %1301 = vmatpush.bf16.msra.mxu0 0
    %1302 = vmatpush.bf16.msra.mxu0 %v843
    %1303 = vmatmul.bf16.gmra.mxu0 %v1293
    %v1304 = vpop.f32.mrf.mxu0
    %v1305 = vadd.f32 0.0, %v1304
    %v1306 = vpop.f32.mrf.mxu0
    %1307 = vdwg.mxu0
    %v1309 = vsel %vm591, %v1259, 0
    %1311 = vmatpush.bf16.msra.mxu0 0
    %1312 = vmatpush.bf16.msra.mxu0 0
    %1313 = vmatpush.bf16.msra.mxu0 0
    %1314 = vmatpush.bf16.msra.mxu0 0
    %1315 = vmatpush.bf16.msra.mxu0 0
    %1316 = vmatpush.bf16.msra.mxu0 0
    %1317 = vmatpush.bf16.msra.mxu0 0
    %1318 = vmatpush.bf16.msra.mxu0 %v862
    %1319 = vmatmul.bf16.gmra.mxu0 %v1309
    %v1320 = vpop.f32.mrf.mxu0
    %v1321 = vadd.f32 0.0, %v1320
    %v1322 = vpop.f32.mrf.mxu0
    %1323 = vdwg.mxu0
    %v1324 = vsel %vm117, %v1273, 0.0
    %v1325 = vsel %vm117, %v1289, 0.0
    %v1326 = vadd.f32 %v1324, %v1325
    %v1327 = vsel %vm117, %v1305, 0.0
    %v1328 = vadd.f32 %v1326, %v1327
    %v1329 = vsel %vm117, %v1321, 0.0
    %v1330 = vadd.f32 %v1328, %v1329
    %v1331 = vld [vmem:[%s8] sm:$0x1]
    %v1333 = vperm.slane %v1331, 0
    %v1335 = vadd.f32 %v883, %v1333
    %v1336 = vadd.f32 %v1330, %v1333
    %v1337 = vadd.f32 %v177, %v1335
    %v1338 = vadd.f32 %v178, %v1336
    %v1339 = vld [vmem:[%s9] sm:$0x1]
    %v1340 = vld [vmem:[%s10] sm:$0x1]
    %v1341 = vsel %vm117, %v1337, 0.0
    %1342 = vadd.xlane.f32.xlu0 %v1341
    %v1343 = vpop.xlane.xlu0 %1342
    %v1344 = vsel %vm117, %v1338, 0.0
    %1345 = vadd.xlane.f32.xlu0 %v1344
    %v1346 = vpop.xlane.xlu0 %1345
    %v1347 = vmul.f32 %v1343, %v130
    %v1348 = vmul.f32 %v1346, %v130
    %v1349 = vsub.f32 %v1337, %v1347
    %v1350 = vsub.f32 %v1338, %v1348
    %v1351 = vmul.f32 %v1349, %v1349
    %v1352 = vmul.f32 %v1350, %v1350
    %v1353 = vsel %vm117, %v1351, 0.0
    %1354 = vadd.xlane.f32.xlu0 %v1353
    %v1355 = vpop.xlane.xlu0 %1354
    %v1356 = vsel %vm117, %v1352, 0.0
    %1357 = vadd.xlane.f32.xlu0 %v1356
    %v1358 = vpop.xlane.xlu0 %1357
    %v1359 = vmul.f32 %v1355, %v130
    %v1360 = vmul.f32 %v1358, %v130
    %v1361 = vadd.f32 %v1359, 1e-12
    %v1362 = vadd.f32 %v1360, 1e-12
    %v1363 = vrsqrt.pop %v1361
    %v1364 = vmul.f32 %v1363, %v1361
    %v1365 = vmul.f32 %v1364, %v1363
    %v1366 = vmul.f32 0.5, %v1365
    %v1367 = vsub.f32 1.5, %v1366
    %v1368 = vmul.f32 %v1363, %v1367
    %vm1369 = vweird.f32 %v1361
    %vm1370 = vweird.f32 %v1363
    %vm1371 = vmor %vm1369, %vm1370
    %v1372 = vsel %vm1371, %v1363, %v1368
    %v1373 = vrsqrt.pop %v1362
    %v1374 = vmul.f32 %v1373, %v1362
    %v1375 = vmul.f32 %v1374, %v1373
    %v1376 = vmul.f32 0.5, %v1375
    %v1377 = vsub.f32 1.5, %v1376
    %v1378 = vmul.f32 %v1373, %v1377
    %vm1379 = vweird.f32 %v1362
    %vm1380 = vweird.f32 %v1373
    %vm1381 = vmor %vm1379, %vm1380
    %v1382 = vsel %vm1381, %v1373, %v1378
    %v1383 = vmul.f32 %v1349, %v1372
    %v1384 = vmul.f32 %v1350, %v1382
    %v1386 = vperm.slane %v1339, 0
    %v1388 = vmul.f32 %v1383, %v1386
    %v1389 = vmul.f32 %v1384, %v1386
    %v1391 = vperm.slane %v1340, 0
    %v1393 = vadd.f32 %v1388, %v1391
    %v1394 = vadd.f32 %v1389, %v1391
    %v1395 = vpack.c.bf16 %v1394, %v1393
    %v1396 = vld [vmem:[%s11] sm:$0xf]
    %v1397 = vld [vmem:[%s11 + $0x4] sm:$0xf]
    %v1398 = vld [vmem:[%s11 + $0x8] sm:$0xf]
    %v1399 = vld [vmem:[%s11 + $0xc] sm:$0xf]
    %v1400 = vld [vmem:[%s12] sm:$0x1]
    %v1402 = vperm.slane %v1400, 0
    %v1408 = vunpack.c.l.b16 %v1396
    %v1409 = vunpack.c.l.b16 %v1397
    %v1410 = vunpack.c.l.b16 %v1398
    %v1411 = vunpack.c.l.b16 %v1399
    %v1412 = vpack.c.b16 %v1409, %v1408
    %v1413 = vpack.c.b16 %v1411, %v1410
    %v1417 = vsel %vm117, %v1395, 0
    %1419 = vmatpush.bf16.msra.mxu0 0
    %1420 = vmatpush.bf16.msra.mxu0 0
    %1421 = vmatpush.bf16.msra.mxu0 0
    %1422 = vmatpush.bf16.msra.mxu0 0
    %1423 = vmatpush.bf16.msra.mxu0 0
    %1424 = vmatpush.bf16.msra.mxu0 0
    %1425 = vmatpush.bf16.msra.mxu0 %v1413
    %1426 = vmatpush.bf16.msra.mxu0 %v1412
    %1427 = vmatmul.bf16.gmra.mxu0 %v1417
    %v1428 = vpop.f32.mrf.mxu0
    %v1429 = vadd.f32 %v1402, %v1428
    %v1430 = vpop.f32.mrf.mxu0
    %v1431 = vadd.f32 %v1402, %v1430
    %1432 = vdwg.mxu0
    %v1433 = vmul.f32 %v1429, %v1429
    %v1434 = vmul.f32 %v1431, %v1431
    %v1435 = vmul.f32 %v1429, %v1433
    %v1436 = vmul.f32 %v1431, %v1434
    %v1437 = vmul.f32 %v1435, 0.044715
    %v1438 = vmul.f32 %v1436, 0.044715
    %v1439 = vadd.f32 %v1429, %v1437
    %v1440 = vadd.f32 %v1431, %v1438
    %v1441 = vmul.f32 %v1439, 0.7978846
    %v1442 = vmul.f32 %v1440, 0.7978846
    %v1443 = vtanh.pop %v1441
    %v1444 = vtanh.pop %v1442
    %v1445 = vadd.f32 %v1443, 1.0
    %v1446 = vadd.f32 %v1444, 1.0
    %v1447 = vmul.f32 %v1445, 0.5
    %v1448 = vmul.f32 %v1446, 0.5
    %v1449 = vmul.f32 %v1429, %v1447
    %v1450 = vmul.f32 %v1431, %v1448
    %v1451 = vpack.c.bf16 %v1450, %v1449
    %v1452 = vld [vmem:[%s13] sm:$0xf]
    %v1453 = vld [vmem:[%s13 + $0x4] sm:$0xf]
    %v1454 = vld [vmem:[%s13 + $0x8] sm:$0xf]
    %v1455 = vld [vmem:[%s13 + $0xc] sm:$0xf]
    %v1456 = vld [vmem:[%s13 + $0x10] sm:$0xf]
    %v1457 = vld [vmem:[%s13 + $0x14] sm:$0xf]
    %v1458 = vld [vmem:[%s13 + $0x18] sm:$0xf]
    %v1459 = vld [vmem:[%s13 + $0x1c] sm:$0xf]
    %v1460 = vld [vmem:[%s14] sm:$0x1]
    %v1462 = vperm.slane %v1460, 0
    %v1472 = vunpack.c.l.b16 %v1452
    %v1473 = vunpack.c.l.b16 %v1453
    %v1474 = vunpack.c.l.b16 %v1454
    %v1475 = vunpack.c.l.b16 %v1455
    %v1476 = vunpack.c.l.b16 %v1456
    %v1477 = vunpack.c.l.b16 %v1457
    %v1478 = vunpack.c.l.b16 %v1458
    %v1479 = vunpack.c.l.b16 %v1459
    %v1480 = vpack.c.b16 %v1473, %v1472
    %v1481 = vpack.c.b16 %v1475, %v1474
    %v1482 = vpack.c.b16 %v1477, %v1476
    %v1483 = vpack.c.b16 %v1479, %v1478
    %vm1488 = vcmask 523264
    %v1490 = vsel %vm1488, %v1451, 0
    %1492 = vmatpush.bf16.msra.mxu0 0
    %1493 = vmatpush.bf16.msra.mxu0 0
    %1494 = vmatpush.bf16.msra.mxu0 0
    %1495 = vmatpush.bf16.msra.mxu0 0
    %1496 = vmatpush.bf16.msra.mxu0 %v1483
    %1497 = vmatpush.bf16.msra.mxu0 %v1482
    %1498 = vmatpush.bf16.msra.mxu0 %v1481
    %1499 = vmatpush.bf16.msra.mxu0 %v1480
    %1500 = vmatmul.bf16.gmra.mxu0 %v1490
    %v1501 = vpop.f32.mrf.mxu0
    %v1502 = vadd.f32 %v1462, %v1501
    %v1503 = vpop.f32.mrf.mxu0
    %v1504 = vadd.f32 %v1462, %v1503
    %1505 = vdwg.mxu0
    %v1506 = vadd.f32 %v1393, %v1502
    %v1507 = vadd.f32 %v1394, %v1504
    %v1508 = vld [vmem:[%s15] sm:$0x1]
    %v1509 = vld [vmem:[%s16] sm:$0x1]
    %v1510 = vsel %vm117, %v1506, 0.0
    %1511 = vadd.xlane.f32.xlu0 %v1510
    %v1512 = vpop.xlane.xlu0 %1511
    %v1513 = vsel %vm117, %v1507, 0.0
    %1514 = vadd.xlane.f32.xlu0 %v1513
    %v1515 = vpop.xlane.xlu0 %1514
    %v1516 = vmul.f32 %v1512, %v130
    %v1517 = vmul.f32 %v1515, %v130
    %v1518 = vsub.f32 %v1506, %v1516
    %v1519 = vsub.f32 %v1507, %v1517
    %v1520 = vmul.f32 %v1518, %v1518
    %v1521 = vmul.f32 %v1519, %v1519
    %v1522 = vsel %vm117, %v1520, 0.0
    %1523 = vadd.xlane.f32.xlu0 %v1522
    %v1524 = vpop.xlane.xlu0 %1523
    %v1525 = vsel %vm117, %v1521, 0.0
    %1526 = vadd.xlane.f32.xlu0 %v1525
    %v1527 = vpop.xlane.xlu0 %1526
    %v1528 = vmul.f32 %v1524, %v130
    %v1529 = vmul.f32 %v1527, %v130
    %v1530 = vadd.f32 %v1528, 1e-12
    %v1531 = vadd.f32 %v1529, 1e-12
    %v1532 = vrsqrt.pop %v1530
    %v1533 = vmul.f32 %v1532, %v1530
    %v1534 = vmul.f32 %v1533, %v1532
    %v1535 = vmul.f32 0.5, %v1534
    %v1536 = vsub.f32 1.5, %v1535
    %v1537 = vmul.f32 %v1532, %v1536
    %vm1538 = vweird.f32 %v1530
    %vm1539 = vweird.f32 %v1532
    %vm1540 = vmor %vm1538, %vm1539
    %v1541 = vsel %vm1540, %v1532, %v1537
    %v1542 = vrsqrt.pop %v1531
    %v1543 = vmul.f32 %v1542, %v1531
    %v1544 = vmul.f32 %v1543, %v1542
    %v1545 = vmul.f32 0.5, %v1544
    %v1546 = vsub.f32 1.5, %v1545
    %v1547 = vmul.f32 %v1542, %v1546
    %vm1548 = vweird.f32 %v1531
    %vm1549 = vweird.f32 %v1542
    %vm1550 = vmor %vm1548, %vm1549
    %v1551 = vsel %vm1550, %v1542, %v1547
    %v1552 = vmul.f32 %v1518, %v1541
    %v1553 = vmul.f32 %v1519, %v1551
    %v1555 = vperm.slane %v1508, 0
    %v1557 = vmul.f32 %v1552, %v1555
    %v1558 = vmul.f32 %v1553, %v1555
    %v1560 = vperm.slane %v1509, 0
    %v1562 = vadd.f32 %v1557, %v1560
    %v1563 = vadd.f32 %v1558, %v1560
    %s1564 = scalar_lea.vmem %s5, 192
    %v1565 = vld [vmem:[%s1564] sm:$0xf]
    %v1566 = vld [vmem:[%s1564 + $0x4] sm:$0xf]
    %v1567 = vld [vmem:[%s1564 + $0x8] sm:$0xf]
    %v1568 = vld [vmem:[%s1564 + $0xc] sm:$0xf]
    %v1569 = vld [vmem:[%s1564 + $0x10] sm:$0xf]
    %v1570 = vld [vmem:[%s1564 + $0x14] sm:$0xf]
    %v1571 = vld [vmem:[%s1564 + $0x18] sm:$0xf]
    %v1572 = vld [vmem:[%s1564 + $0x1c] sm:$0xf]
    %v1573 = vld [vmem:[%s1564 + $0x20] sm:$0xf]
    %v1574 = vld [vmem:[%s1564 + $0x24] sm:$0xf]
    %v1575 = vld [vmem:[%s1564 + $0x28] sm:$0xf]
    %v1576 = vld [vmem:[%s1564 + $0x2c] sm:$0xf]
    %v1577 = vld [vmem:[%s1564 + $0x30] sm:$0xf]
    %v1578 = vld [vmem:[%s1564 + $0x34] sm:$0xf]
    %v1579 = vld [vmem:[%s1564 + $0x38] sm:$0xf]
    %v1580 = vld [vmem:[%s1564 + $0x3c] sm:$0xf]
    %v1581 = vld [vmem:[%s1564 + $0x40] sm:$0xf]
    %v1582 = vld [vmem:[%s1564 + $0x44] sm:$0xf]
    %v1583 = vld [vmem:[%s1564 + $0x48] sm:$0xf]
    %v1584 = vld [vmem:[%s1564 + $0x4c] sm:$0xf]
    %v1585 = vld [vmem:[%s1564 + $0x50] sm:$0xf]
    %v1586 = vld [vmem:[%s1564 + $0x54] sm:$0xf]
    %v1587 = vld [vmem:[%s1564 + $0x58] sm:$0xf]
    %v1588 = vld [vmem:[%s1564 + $0x5c] sm:$0xf]
    %v1589 = vld [vmem:[%s1564 + $0x60] sm:$0xf]
    %v1590 = vld [vmem:[%s1564 + $0x64] sm:$0xf]
    %v1591 = vld [vmem:[%s1564 + $0x68] sm:$0xf]
    %v1592 = vld [vmem:[%s1564 + $0x6c] sm:$0xf]
    %v1593 = vld [vmem:[%s1564 + $0x70] sm:$0xf]
    %v1594 = vld [vmem:[%s1564 + $0x74] sm:$0xf]
    %v1595 = vld [vmem:[%s1564 + $0x78] sm:$0xf]
    %v1596 = vld [vmem:[%s1564 + $0x7c] sm:$0xf]
    %v1597 = vld [vmem:[%s1564 + $0x80] sm:$0xf]
    %v1598 = vld [vmem:[%s1564 + $0x84] sm:$0xf]
    %v1599 = vld [vmem:[%s1564 + $0x88] sm:$0xf]
    %v1600 = vld [vmem:[%s1564 + $0x8c] sm:$0xf]
    %v1601 = vld [vmem:[%s1564 + $0x90] sm:$0xf]
    %v1602 = vld [vmem:[%s1564 + $0x94] sm:$0xf]
    %v1603 = vld [vmem:[%s1564 + $0x98] sm:$0xf]
    %v1604 = vld [vmem:[%s1564 + $0x9c] sm:$0xf]
    %v1605 = vld [vmem:[%s1564 + $0xa0] sm:$0xf]
    %v1606 = vld [vmem:[%s1564 + $0xa4] sm:$0xf]
    %v1607 = vld [vmem:[%s1564 + $0xa8] sm:$0xf]
    %v1608 = vld [vmem:[%s1564 + $0xac] sm:$0xf]
    %v1609 = vld [vmem:[%s1564 + $0xb0] sm:$0xf]
    %v1610 = vld [vmem:[%s1564 + $0xb4] sm:$0xf]
    %v1611 = vld [vmem:[%s1564 + $0xb8] sm:$0xf]
    %v1612 = vld [vmem:[%s1564 + $0xbc] sm:$0xf]
    %s1613 = scalar_lea.vmem %s6, 12
    %v1614 = vld [vmem:[%s1613] sm:$0x1]
    %v1615 = vld [vmem:[%s1613 + $0x1] sm:$0x1]
    %v1616 = vld [vmem:[%s1613 + $0x2] sm:$0x1]
    %v1617 = vld [vmem:[%s1613 + $0x3] sm:$0x1]
    %v1618 = vld [vmem:[%s1613 + $0x4] sm:$0x1]
    %v1619 = vld [vmem:[%s1613 + $0x5] sm:$0x1]
    %v1620 = vld [vmem:[%s1613 + $0x6] sm:$0x1]
    %v1621 = vld [vmem:[%s1613 + $0x7] sm:$0x1]
    %v1622 = vld [vmem:[%s1613 + $0x8] sm:$0x1]
    %v1623 = vld [vmem:[%s1613 + $0x9] sm:$0x1]
    %v1624 = vld [vmem:[%s1613 + $0xa] sm:$0x1]
    %v1625 = vld [vmem:[%s1613 + $0xb] sm:$0x1]
    %s1626 = scalar_lea.vmem %s7, 16
    %v1627 = vld [vmem:[%s1626] sm:$0xf]
    %v1628 = vld [vmem:[%s1626 + $0x4] sm:$0xf]
    %v1629 = vld [vmem:[%s1626 + $0x8] sm:$0xf]
    %v1630 = vld [vmem:[%s1626 + $0xc] sm:$0xf]
    %v1631 = vpack.c.bf16 %v1562, %v1562
    %v1644 = vperm.slane %v1614, 0
    %v1645 = vperm.slane %v1615, 0
    %v1646 = vperm.slane %v1616, 0
    %v1647 = vperm.slane %v1617, 0
    %v1648 = vperm.slane %v1618, 0
    %v1649 = vperm.slane %v1619, 0
    %v1650 = vperm.slane %v1620, 0
    %v1651 = vperm.slane %v1621, 0
    %v1652 = vperm.slane %v1622, 0
    %v1653 = vperm.slane %v1623, 0
    %v1654 = vperm.slane %v1624, 0
    %v1655 = vperm.slane %v1625, 0
    %v1672 = vunpack.c.l.b16 %v1565
    %v1673 = vunpack.c.l.b16 %v1566
    %v1674 = vunpack.c.l.b16 %v1567
    %v1675 = vunpack.c.l.b16 %v1568
    %v1676 = vpack.c.b16 %v1673, %v1672
    %v1677 = vpack.c.b16 %v1675, %v1674
    %v1681 = vsel %vm117, %v1631, 0
    %1683 = vmatpush.bf16.msra.mxu0 0
    %1684 = vmatpush.bf16.msra.mxu0 0
    %1685 = vmatpush.bf16.msra.mxu0 0
    %1686 = vmatpush.bf16.msra.mxu0 0
    %1687 = vmatpush.bf16.msra.mxu0 0
    %1688 = vmatpush.bf16.msra.mxu0 0
    %1689 = vmatpush.bf16.msra.mxu0 %v1677
    %1690 = vmatpush.bf16.msra.mxu0 %v1676
    %1691 = vmatmul.bf16.gmra.mxu0 %v1681
    %v1692 = vpop.f32.mrf.mxu0
    %v1693 = vadd.f32 %v1644, %v1692
    %v1694 = vpop.f32.mrf.mxu0
    %1695 = vdwg.mxu0
    %v1700 = vunpack.c.l.b16 %v1569
    %v1701 = vunpack.c.l.b16 %v1570
    %v1702 = vunpack.c.l.b16 %v1571
    %v1703 = vunpack.c.l.b16 %v1572
    %v1704 = vpack.c.b16 %v1701, %v1700
    %v1705 = vpack.c.b16 %v1703, %v1702
    %1708 = vmatpush.bf16.msra.mxu0 0
    %1709 = vmatpush.bf16.msra.mxu0 0
    %1710 = vmatpush.bf16.msra.mxu0 0
    %1711 = vmatpush.bf16.msra.mxu0 0
    %1712 = vmatpush.bf16.msra.mxu0 0
    %1713 = vmatpush.bf16.msra.mxu0 0
    %1714 = vmatpush.bf16.msra.mxu0 %v1705
    %1715 = vmatpush.bf16.msra.mxu0 %v1704
    %1716 = vmatmul.bf16.gmra.mxu0 %v1681
    %v1717 = vpop.f32.mrf.mxu0
    %v1718 = vadd.f32 %v1645, %v1717
    %v1719 = vpop.f32.mrf.mxu0
    %1720 = vdwg.mxu0
    %v1725 = vunpack.c.l.b16 %v1573
    %v1726 = vunpack.c.l.b16 %v1574
    %v1727 = vunpack.c.l.b16 %v1575
    %v1728 = vunpack.c.l.b16 %v1576
    %v1729 = vpack.c.b16 %v1726, %v1725
    %v1730 = vpack.c.b16 %v1728, %v1727
    %1733 = vmatpush.bf16.msra.mxu0 0
    %1734 = vmatpush.bf16.msra.mxu0 0
    %1735 = vmatpush.bf16.msra.mxu0 0
    %1736 = vmatpush.bf16.msra.mxu0 0
    %1737 = vmatpush.bf16.msra.mxu0 0
    %1738 = vmatpush.bf16.msra.mxu0 0
    %1739 = vmatpush.bf16.msra.mxu0 %v1730
    %1740 = vmatpush.bf16.msra.mxu0 %v1729
    %1741 = vmatmul.bf16.gmra.mxu0 %v1681
    %v1742 = vpop.f32.mrf.mxu0
    %v1743 = vadd.f32 %v1646, %v1742
    %v1744 = vpop.f32.mrf.mxu0
    %1745 = vdwg.mxu0
    %v1750 = vunpack.c.l.b16 %v1577
    %v1751 = vunpack.c.l.b16 %v1578
    %v1752 = vunpack.c.l.b16 %v1579
    %v1753 = vunpack.c.l.b16 %v1580
    %v1754 = vpack.c.b16 %v1751, %v1750
    %v1755 = vpack.c.b16 %v1753, %v1752
    %1758 = vmatpush.bf16.msra.mxu0 0
    %1759 = vmatpush.bf16.msra.mxu0 0
    %1760 = vmatpush.bf16.msra.mxu0 0
    %1761 = vmatpush.bf16.msra.mxu0 0
    %1762 = vmatpush.bf16.msra.mxu0 0
    %1763 = vmatpush.bf16.msra.mxu0 0
    %1764 = vmatpush.bf16.msra.mxu0 %v1755
    %1765 = vmatpush.bf16.msra.mxu0 %v1754
    %1766 = vmatmul.bf16.gmra.mxu0 %v1681
    %v1767 = vpop.f32.mrf.mxu0
    %v1768 = vadd.f32 %v1647, %v1767
    %v1769 = vpop.f32.mrf.mxu0
    %1770 = vdwg.mxu0
    %v1775 = vunpack.c.l.b16 %v1581
    %v1776 = vunpack.c.l.b16 %v1582
    %v1777 = vunpack.c.l.b16 %v1583
    %v1778 = vunpack.c.l.b16 %v1584
    %v1779 = vpack.c.b16 %v1776, %v1775
    %v1780 = vpack.c.b16 %v1778, %v1777
    %1783 = vmatpush.bf16.msra.mxu0 0
    %1784 = vmatpush.bf16.msra.mxu0 0
    %1785 = vmatpush.bf16.msra.mxu0 0
    %1786 = vmatpush.bf16.msra.mxu0 0
    %1787 = vmatpush.bf16.msra.mxu0 0
    %1788 = vmatpush.bf16.msra.mxu0 0
    %1789 = vmatpush.bf16.msra.mxu0 %v1780
    %1790 = vmatpush.bf16.msra.mxu0 %v1779
    %1791 = vmatmul.bf16.gmra.mxu0 %v1681
    %v1792 = vpop.f32.mrf.mxu0
    %v1793 = vadd.f32 %v1648, %v1792
    %v1794 = vpop.f32.mrf.mxu0
    %1795 = vdwg.mxu0
    %v1800 = vunpack.c.l.b16 %v1585
    %v1801 = vunpack.c.l.b16 %v1586
    %v1802 = vunpack.c.l.b16 %v1587
    %v1803 = vunpack.c.l.b16 %v1588
    %v1804 = vpack.c.b16 %v1801, %v1800
    %v1805 = vpack.c.b16 %v1803, %v1802
    %1808 = vmatpush.bf16.msra.mxu0 0
    %1809 = vmatpush.bf16.msra.mxu0 0
    %1810 = vmatpush.bf16.msra.mxu0 0
    %1811 = vmatpush.bf16.msra.mxu0 0
    %1812 = vmatpush.bf16.msra.mxu0 0
    %1813 = vmatpush.bf16.msra.mxu0 0
    %1814 = vmatpush.bf16.msra.mxu0 %v1805
    %1815 = vmatpush.bf16.msra.mxu0 %v1804
    %1816 = vmatmul.bf16.gmra.mxu0 %v1681
    %v1817 = vpop.f32.mrf.mxu0
    %v1818 = vadd.f32 %v1649, %v1817
    %v1819 = vpop.f32.mrf.mxu0
    %1820 = vdwg.mxu0
    %v1825 = vunpack.c.l.b16 %v1589
    %v1826 = vunpack.c.l.b16 %v1590
    %v1827 = vunpack.c.l.b16 %v1591
    %v1828 = vunpack.c.l.b16 %v1592
    %v1829 = vpack.c.b16 %v1826, %v1825
    %v1830 = vpack.c.b16 %v1828, %v1827
    %1833 = vmatpush.bf16.msra.mxu0 0
    %1834 = vmatpush.bf16.msra.mxu0 0
    %1835 = vmatpush.bf16.msra.mxu0 0
    %1836 = vmatpush.bf16.msra.mxu0 0
    %1837 = vmatpush.bf16.msra.mxu0 0
    %1838 = vmatpush.bf16.msra.mxu0 0
    %1839 = vmatpush.bf16.msra.mxu0 %v1830
    %1840 = vmatpush.bf16.msra.mxu0 %v1829
    %1841 = vmatmul.bf16.gmra.mxu0 %v1681
    %v1842 = vpop.f32.mrf.mxu0
    %v1843 = vadd.f32 %v1650, %v1842
    %v1844 = vpop.f32.mrf.mxu0
    %1845 = vdwg.mxu0
    %v1850 = vunpack.c.l.b16 %v1593
    %v1851 = vunpack.c.l.b16 %v1594
    %v1852 = vunpack.c.l.b16 %v1595
    %v1853 = vunpack.c.l.b16 %v1596
    %v1854 = vpack.c.b16 %v1851, %v1850
    %v1855 = vpack.c.b16 %v1853, %v1852
    %1858 = vmatpush.bf16.msra.mxu0 0
    %1859 = vmatpush.bf16.msra.mxu0 0
    %1860 = vmatpush.bf16.msra.mxu0 0
    %1861 = vmatpush.bf16.msra.mxu0 0
    %1862 = vmatpush.bf16.msra.mxu0 0
    %1863 = vmatpush.bf16.msra.mxu0 0
    %1864 = vmatpush.bf16.msra.mxu0 %v1855
    %1865 = vmatpush.bf16.msra.mxu0 %v1854
    %1866 = vmatmul.bf16.gmra.mxu0 %v1681
    %v1867 = vpop.f32.mrf.mxu0
    %v1868 = vadd.f32 %v1651, %v1867
    %v1869 = vpop.f32.mrf.mxu0
    %1870 = vdwg.mxu0
    %v1875 = vunpack.c.l.b16 %v1597
    %v1876 = vunpack.c.l.b16 %v1598
    %v1877 = vunpack.c.l.b16 %v1599
    %v1878 = vunpack.c.l.b16 %v1600
    %v1879 = vpack.c.b16 %v1876, %v1875
    %v1880 = vpack.c.b16 %v1878, %v1877
    %1883 = vmatpush.bf16.msra.mxu0 0
    %1884 = vmatpush.bf16.msra.mxu0 0
    %1885 = vmatpush.bf16.msra.mxu0 0
    %1886 = vmatpush.bf16.msra.mxu0 0
    %1887 = vmatpush.bf16.msra.mxu0 0
    %1888 = vmatpush.bf16.msra.mxu0 0
    %1889 = vmatpush.bf16.msra.mxu0 %v1880
    %1890 = vmatpush.bf16.msra.mxu0 %v1879
    %1891 = vmatmul.bf16.gmra.mxu0 %v1681
    %v1892 = vpop.f32.mrf.mxu0
    %v1893 = vadd.f32 %v1652, %v1892
    %v1894 = vpop.f32.mrf.mxu0
    %1895 = vdwg.mxu0
    %v1900 = vunpack.c.l.b16 %v1601
    %v1901 = vunpack.c.l.b16 %v1602
    %v1902 = vunpack.c.l.b16 %v1603
    %v1903 = vunpack.c.l.b16 %v1604
    %v1904 = vpack.c.b16 %v1901, %v1900
    %v1905 = vpack.c.b16 %v1903, %v1902
    %1908 = vmatpush.bf16.msra.mxu0 0
    %1909 = vmatpush.bf16.msra.mxu0 0
    %1910 = vmatpush.bf16.msra.mxu0 0
    %1911 = vmatpush.bf16.msra.mxu0 0
    %1912 = vmatpush.bf16.msra.mxu0 0
    %1913 = vmatpush.bf16.msra.mxu0 0
    %1914 = vmatpush.bf16.msra.mxu0 %v1905
    %1915 = vmatpush.bf16.msra.mxu0 %v1904
    %1916 = vmatmul.bf16.gmra.mxu0 %v1681
    %v1917 = vpop.f32.mrf.mxu0
    %v1918 = vadd.f32 %v1653, %v1917
    %v1919 = vpop.f32.mrf.mxu0
    %1920 = vdwg.mxu0
    %v1925 = vunpack.c.l.b16 %v1605
    %v1926 = vunpack.c.l.b16 %v1606
    %v1927 = vunpack.c.l.b16 %v1607
    %v1928 = vunpack.c.l.b16 %v1608
    %v1929 = vpack.c.b16 %v1926, %v1925
    %v1930 = vpack.c.b16 %v1928, %v1927
    %1933 = vmatpush.bf16.msra.mxu0 0
    %1934 = vmatpush.bf16.msra.mxu0 0
    %1935 = vmatpush.bf16.msra.mxu0 0
    %1936 = vmatpush.bf16.msra.mxu0 0
    %1937 = vmatpush.bf16.msra.mxu0 0
    %1938 = vmatpush.bf16.msra.mxu0 0
    %1939 = vmatpush.bf16.msra.mxu0 %v1930
    %1940 = vmatpush.bf16.msra.mxu0 %v1929
    %1941 = vmatmul.bf16.gmra.mxu0 %v1681
    %v1942 = vpop.f32.mrf.mxu0
    %v1943 = vadd.f32 %v1654, %v1942
    %v1944 = vpop.f32.mrf.mxu0
    %1945 = vdwg.mxu0
    %v1950 = vunpack.c.l.b16 %v1609
    %v1951 = vunpack.c.l.b16 %v1610
    %v1952 = vunpack.c.l.b16 %v1611
    %v1953 = vunpack.c.l.b16 %v1612
    %v1954 = vpack.c.b16 %v1951, %v1950
    %v1955 = vpack.c.b16 %v1953, %v1952
    %1958 = vmatpush.bf16.msra.mxu0 0
    %1959 = vmatpush.bf16.msra.mxu0 0
    %1960 = vmatpush.bf16.msra.mxu0 0
    %1961 = vmatpush.bf16.msra.mxu0 0
    %1962 = vmatpush.bf16.msra.mxu0 0
    %1963 = vmatpush.bf16.msra.mxu0 0
    %1964 = vmatpush.bf16.msra.mxu0 %v1955
    %1965 = vmatpush.bf16.msra.mxu0 %v1954
    %1966 = vmatmul.bf16.gmra.mxu0 %v1681
    %v1967 = vpop.f32.mrf.mxu0
    %v1968 = vadd.f32 %v1655, %v1967
    %v1969 = vpop.f32.mrf.mxu0
    %1970 = vdwg.mxu0
    %v1971 = vpack.c.bf16 %v1693, %v1693
    %v1972 = vpack.c.bf16 %v1718, %v1718
    %v1973 = vpack.c.bf16 %v1743, %v1743
    %v1974 = vpack.c.bf16 %v1768, %v1768
    %v1975 = vpack.c.bf16 %v1793, %v1793
    %v1976 = vpack.c.bf16 %v1818, %v1818
    %v1977 = vpack.c.bf16 %v1843, %v1843
    %v1978 = vpack.c.bf16 %v1868, %v1868
    %v1980 = vsel %vm591, %v1971, 0
    %v1983 = vsel %vm591, %v1975, 0
    %1985 = vmatpush.bf16.xpose.msra.mxu0 0
    %1986 = vmatpush.bf16.xpose.msra.mxu0 0
    %1987 = vmatpush.bf16.xpose.msra.mxu0 0
    %1988 = vmatpush.bf16.xpose.msra.mxu0 0
    %1989 = vmatpush.bf16.xpose.msra.mxu0 0
    %1990 = vmatpush.bf16.xpose.msra.mxu0 0
    %1991 = vmatpush.bf16.xpose.msra.mxu0 0
    %1992 = vmatpush.bf16.xpose.msra.mxu0 %v1983
    %1993 = vmatmul.bf16.gmra.mxu0 %v1980
    %v1994 = vpop.f32.mrf.mxu0
    %v1995 = vadd.f32 0.0, %v1994
    %v1996 = vpop.f32.mrf.mxu0
    %1997 = vdwg.mxu0
    %v1999 = vsel %vm591, %v1972, 0
    %v2002 = vsel %vm591, %v1976, 0
    %2004 = vmatpush.bf16.xpose.msra.mxu0 0
    %2005 = vmatpush.bf16.xpose.msra.mxu0 0
    %2006 = vmatpush.bf16.xpose.msra.mxu0 0
    %2007 = vmatpush.bf16.xpose.msra.mxu0 0
    %2008 = vmatpush.bf16.xpose.msra.mxu0 0
    %2009 = vmatpush.bf16.xpose.msra.mxu0 0
    %2010 = vmatpush.bf16.xpose.msra.mxu0 0
    %2011 = vmatpush.bf16.xpose.msra.mxu0 %v2002
    %2012 = vmatmul.bf16.gmra.mxu0 %v1999
    %v2013 = vpop.f32.mrf.mxu0
    %v2014 = vadd.f32 0.0, %v2013
    %v2015 = vpop.f32.mrf.mxu0
    %2016 = vdwg.mxu0
    %v2018 = vsel %vm591, %v1973, 0
    %v2021 = vsel %vm591, %v1977, 0
    %2023 = vmatpush.bf16.xpose.msra.mxu0 0
    %2024 = vmatpush.bf16.xpose.msra.mxu0 0
    %2025 = vmatpush.bf16.xpose.msra.mxu0 0
    %2026 = vmatpush.bf16.xpose.msra.mxu0 0
    %2027 = vmatpush.bf16.xpose.msra.mxu0 0
    %2028 = vmatpush.bf16.xpose.msra.mxu0 0
    %2029 = vmatpush.bf16.xpose.msra.mxu0 0
    %2030 = vmatpush.bf16.xpose.msra.mxu0 %v2021
    %2031 = vmatmul.bf16.gmra.mxu0 %v2018
    %v2032 = vpop.f32.mrf.mxu0
    %v2033 = vadd.f32 0.0, %v2032
    %v2034 = vpop.f32.mrf.mxu0
    %2035 = vdwg.mxu0
    %v2037 = vsel %vm591, %v1974, 0
    %v2040 = vsel %vm591, %v1978, 0
    %2042 = vmatpush.bf16.xpose.msra.mxu0 0
    %2043 = vmatpush.bf16.xpose.msra.mxu0 0
    %2044 = vmatpush.bf16.xpose.msra.mxu0 0
    %2045 = vmatpush.bf16.xpose.msra.mxu0 0
    %2046 = vmatpush.bf16.xpose.msra.mxu0 0
    %2047 = vmatpush.bf16.xpose.msra.mxu0 0
    %2048 = vmatpush.bf16.xpose.msra.mxu0 0
    %2049 = vmatpush.bf16.xpose.msra.mxu0 %v2040
    %2050 = vmatmul.bf16.gmra.mxu0 %v2037
    %v2051 = vpop.f32.mrf.mxu0
    %v2052 = vadd.f32 0.0, %v2051
    %v2053 = vpop.f32.mrf.mxu0
    %2054 = vdwg.mxu0
    %v2055 = vsel %vm591, %v1995, -inf
    %2056 = vmax.xlane.f32.xlu0 %v2055
    %v2057 = vpop.xlane.xlu0 %2056
    %v2058 = vsel %vm591, %v2014, -inf
    %2059 = vmax.xlane.f32.xlu0 %v2058
    %v2060 = vpop.xlane.xlu0 %2059
    %v2061 = vsel %vm591, %v2033, -inf
    %2062 = vmax.xlane.f32.xlu0 %v2061
    %v2063 = vpop.xlane.xlu0 %2062
    %v2064 = vsel %vm591, %v2052, -inf
    %2065 = vmax.xlane.f32.xlu0 %v2064
    %v2066 = vpop.xlane.xlu0 %2065
    %v2067 = vsub.f32 %v1995, %v2057
    %v2068 = vsub.f32 %v2014, %v2060
    %v2069 = vsub.f32 %v2033, %v2063
    %v2070 = vsub.f32 %v2052, %v2066
    %v2071 = vmul.f32 %v2067, 1.442695
    %v2072 = vpow.pop %v2071
    %v2073 = vmul.f32 %v2068, 1.442695
    %v2074 = vpow.pop %v2073
    %v2075 = vmul.f32 %v2069, 1.442695
    %v2076 = vpow.pop %v2075
    %v2077 = vmul.f32 %v2070, 1.442695
    %v2078 = vpow.pop %v2077
    %v2079 = vsel %vm591, %v2072, 0.0
    %2080 = vadd.xlane.f32.xlu0 %v2079
    %v2081 = vpop.xlane.xlu0 %2080
    %v2082 = vsel %vm591, %v2074, 0.0
    %2083 = vadd.xlane.f32.xlu0 %v2082
    %v2084 = vpop.xlane.xlu0 %2083
    %v2085 = vsel %vm591, %v2076, 0.0
    %2086 = vadd.xlane.f32.xlu0 %v2085
    %v2087 = vpop.xlane.xlu0 %2086
    %v2088 = vsel %vm591, %v2078, 0.0
    %2089 = vadd.xlane.f32.xlu0 %v2088
    %v2090 = vpop.xlane.xlu0 %2089
    %v2091 = vrcp.pop %v2081
    %v2092 = vrcp.pop %v2084
    %v2093 = vrcp.pop %v2087
    %v2094 = vrcp.pop %v2090
    %v2095 = vmul.f32 %v2072, %v2091
    %v2096 = vmul.f32 %v2074, %v2092
    %v2097 = vmul.f32 %v2076, %v2093
    %v2098 = vmul.f32 %v2078, %v2094
    %v2099 = vpack.c.bf16 %v2095, %v2095
    %v2100 = vpack.c.bf16 %v2096, %v2096
    %v2101 = vpack.c.bf16 %v2097, %v2097
    %v2102 = vpack.c.bf16 %v2098, %v2098
    %v2103 = vpack.c.bf16 %v1893, %v1893
    %v2104 = vpack.c.bf16 %v1918, %v1918
    %v2105 = vpack.c.bf16 %v1943, %v1943
    %v2106 = vpack.c.bf16 %v1968, %v1968
    %v2108 = vsel %vm591, %v2099, 0
    %v2111 = vsel %vm723, %v2103, 0
    %2113 = vmatpush.bf16.msra.mxu0 0
    %2114 = vmatpush.bf16.msra.mxu0 0
    %2115 = vmatpush.bf16.msra.mxu0 0
    %2116 = vmatpush.bf16.msra.mxu0 0
    %2117 = vmatpush.bf16.msra.mxu0 0
    %2118 = vmatpush.bf16.msra.mxu0 0
    %2119 = vmatpush.bf16.msra.mxu0 0
    %2120 = vmatpush.bf16.msra.mxu0 %v2111
    %2121 = vmatmul.bf16.gmra.mxu0 %v2108
    %v2122 = vpop.f32.mrf.mxu0
    %v2123 = vadd.f32 0.0, %v2122
    %v2124 = vpop.f32.mrf.mxu0
    %2125 = vdwg.mxu0
    %v2127 = vsel %vm591, %v2100, 0
    %v2130 = vsel %vm723, %v2104, 0
    %2132 = vmatpush.bf16.msra.mxu0 0
    %2133 = vmatpush.bf16.msra.mxu0 0
    %2134 = vmatpush.bf16.msra.mxu0 0
    %2135 = vmatpush.bf16.msra.mxu0 0
    %2136 = vmatpush.bf16.msra.mxu0 0
    %2137 = vmatpush.bf16.msra.mxu0 0
    %2138 = vmatpush.bf16.msra.mxu0 0
    %2139 = vmatpush.bf16.msra.mxu0 %v2130
    %2140 = vmatmul.bf16.gmra.mxu0 %v2127
    %v2141 = vpop.f32.mrf.mxu0
    %v2142 = vadd.f32 0.0, %v2141
    %v2143 = vpop.f32.mrf.mxu0
    %2144 = vdwg.mxu0
    %v2146 = vsel %vm591, %v2101, 0
    %v2149 = vsel %vm723, %v2105, 0
    %2151 = vmatpush.bf16.msra.mxu0 0
    %2152 = vmatpush.bf16.msra.mxu0 0
    %2153 = vmatpush.bf16.msra.mxu0 0
    %2154 = vmatpush.bf16.msra.mxu0 0
    %2155 = vmatpush.bf16.msra.mxu0 0
    %2156 = vmatpush.bf16.msra.mxu0 0
    %2157 = vmatpush.bf16.msra.mxu0 0
    %2158 = vmatpush.bf16.msra.mxu0 %v2149
    %2159 = vmatmul.bf16.gmra.mxu0 %v2146
    %v2160 = vpop.f32.mrf.mxu0
    %v2161 = vadd.f32 0.0, %v2160
    %v2162 = vpop.f32.mrf.mxu0
    %2163 = vdwg.mxu0
    %v2165 = vsel %vm591, %v2102, 0
    %v2168 = vsel %vm723, %v2106, 0
    %2170 = vmatpush.bf16.msra.mxu0 0
    %2171 = vmatpush.bf16.msra.mxu0 0
    %2172 = vmatpush.bf16.msra.mxu0 0
    %2173 = vmatpush.bf16.msra.mxu0 0
    %2174 = vmatpush.bf16.msra.mxu0 0
    %2175 = vmatpush.bf16.msra.mxu0 0
    %2176 = vmatpush.bf16.msra.mxu0 0
    %2177 = vmatpush.bf16.msra.mxu0 %v2168
    %2178 = vmatmul.bf16.gmra.mxu0 %v2165
    %v2179 = vpop.f32.mrf.mxu0
    %v2180 = vadd.f32 0.0, %v2179
    %v2181 = vpop.f32.mrf.mxu0
    %2182 = vdwg.mxu0
    %v2183 = vpack.c.bf16 %v2123, %v2123
    %v2184 = vpack.c.bf16 %v2142, %v2142
    %v2185 = vpack.c.bf16 %v2161, %v2161
    %v2186 = vpack.c.bf16 %v2180, %v2180
    %v2188 = vsel %vm591, %v2183, 0
    %v2191 = vsel %vm723, %v1627, 0
    %2193 = vmatpush.bf16.msra.mxu0 0
    %2194 = vmatpush.bf16.msra.mxu0 0
    %2195 = vmatpush.bf16.msra.mxu0 0
    %2196 = vmatpush.bf16.msra.mxu0 0
    %2197 = vmatpush.bf16.msra.mxu0 0
    %2198 = vmatpush.bf16.msra.mxu0 0
    %2199 = vmatpush.bf16.msra.mxu0 0
    %2200 = vmatpush.bf16.msra.mxu0 %v2191
    %2201 = vmatmul.bf16.gmra.mxu0 %v2188
    %v2202 = vpop.f32.mrf.mxu0
    %v2203 = vadd.f32 0.0, %v2202
    %v2204 = vpop.f32.mrf.mxu0
    %2205 = vdwg.mxu0
    %v2207 = vsel %vm591, %v2184, 0
    %v2210 = vsel %vm723, %v1628, 0
    %2212 = vmatpush.bf16.msra.mxu0 0
    %2213 = vmatpush.bf16.msra.mxu0 0
    %2214 = vmatpush.bf16.msra.mxu0 0
    %2215 = vmatpush.bf16.msra.mxu0 0
    %2216 = vmatpush.bf16.msra.mxu0 0
    %2217 = vmatpush.bf16.msra.mxu0 0
    %2218 = vmatpush.bf16.msra.mxu0 0
    %2219 = vmatpush.bf16.msra.mxu0 %v2210
    %2220 = vmatmul.bf16.gmra.mxu0 %v2207
    %v2221 = vpop.f32.mrf.mxu0
    %v2222 = vadd.f32 0.0, %v2221
    %v2223 = vpop.f32.mrf.mxu0
    %2224 = vdwg.mxu0
    %v2226 = vsel %vm591, %v2185, 0
    %v2229 = vsel %vm723, %v1629, 0
    %2231 = vmatpush.bf16.msra.mxu0 0
    %2232 = vmatpush.bf16.msra.mxu0 0
    %2233 = vmatpush.bf16.msra.mxu0 0
    %2234 = vmatpush.bf16.msra.mxu0 0
    %2235 = vmatpush.bf16.msra.mxu0 0
    %2236 = vmatpush.bf16.msra.mxu0 0
    %2237 = vmatpush.bf16.msra.mxu0 0
    %2238 = vmatpush.bf16.msra.mxu0 %v2229
    %2239 = vmatmul.bf16.gmra.mxu0 %v2226
    %v2240 = vpop.f32.mrf.mxu0
    %v2241 = vadd.f32 0.0, %v2240
    %v2242 = vpop.f32.mrf.mxu0
    %2243 = vdwg.mxu0
    %v2245 = vsel %vm591, %v2186, 0
    %v2248 = vsel %vm723, %v1630, 0
    %2250 = vmatpush.bf16.msra.mxu0 0
    %2251 = vmatpush.bf16.msra.mxu0 0
    %2252 = vmatpush.bf16.msra.mxu0 0
    %2253 = vmatpush.bf16.msra.mxu0 0
    %2254 = vmatpush.bf16.msra.mxu0 0
    %2255 = vmatpush.bf16.msra.mxu0 0
    %2256 = vmatpush.bf16.msra.mxu0 0
    %2257 = vmatpush.bf16.msra.mxu0 %v2248
    %2258 = vmatmul.bf16.gmra.mxu0 %v2245
    %v2259 = vpop.f32.mrf.mxu0
    %v2260 = vadd.f32 0.0, %v2259
    %v2261 = vpop.f32.mrf.mxu0
    %2262 = vdwg.mxu0
    %v2263 = vsel %vm117, %v2203, 0.0
    %v2264 = vsel %vm117, %v2222, 0.0
    %v2265 = vadd.f32 %v2263, %v2264
    %v2266 = vsel %vm117, %v2241, 0.0
    %v2267 = vadd.f32 %v2265, %v2266
    %v2268 = vsel %vm117, %v2260, 0.0
    %v2269 = vadd.f32 %v2267, %v2268
    %v2270 = vpack.c.bf16 %v1563, %v1563
    %v2272 = vsel %vm117, %v2270, 0
    %2274 = vmatpush.bf16.msra.mxu0 0
    %2275 = vmatpush.bf16.msra.mxu0 0
    %2276 = vmatpush.bf16.msra.mxu0 0
    %2277 = vmatpush.bf16.msra.mxu0 0
    %2278 = vmatpush.bf16.msra.mxu0 0
    %2279 = vmatpush.bf16.msra.mxu0 0
    %2280 = vmatpush.bf16.msra.mxu0 %v1677
    %2281 = vmatpush.bf16.msra.mxu0 %v1676
    %2282 = vmatmul.bf16.gmra.mxu0 %v2272
    %v2283 = vpop.f32.mrf.mxu0
    %v2284 = vadd.f32 %v1644, %v2283
    %v2285 = vpop.f32.mrf.mxu0
    %2286 = vdwg.mxu0
    %2287 = vmatpush.bf16.msra.mxu0 0
    %2288 = vmatpush.bf16.msra.mxu0 0
    %2289 = vmatpush.bf16.msra.mxu0 0
    %2290 = vmatpush.bf16.msra.mxu0 0
    %2291 = vmatpush.bf16.msra.mxu0 0
    %2292 = vmatpush.bf16.msra.mxu0 0
    %2293 = vmatpush.bf16.msra.mxu0 %v1705
    %2294 = vmatpush.bf16.msra.mxu0 %v1704
    %2295 = vmatmul.bf16.gmra.mxu0 %v2272
    %v2296 = vpop.f32.mrf.mxu0
    %v2297 = vadd.f32 %v1645, %v2296
    %v2298 = vpop.f32.mrf.mxu0
    %2299 = vdwg.mxu0
    %2300 = vmatpush.bf16.msra.mxu0 0
    %2301 = vmatpush.bf16.msra.mxu0 0
    %2302 = vmatpush.bf16.msra.mxu0 0
    %2303 = vmatpush.bf16.msra.mxu0 0
    %2304 = vmatpush.bf16.msra.mxu0 0
    %2305 = vmatpush.bf16.msra.mxu0 0
    %2306 = vmatpush.bf16.msra.mxu0 %v1730
    %2307 = vmatpush.bf16.msra.mxu0 %v1729
    %2308 = vmatmul.bf16.gmra.mxu0 %v2272
    %v2309 = vpop.f32.mrf.mxu0
    %v2310 = vadd.f32 %v1646, %v2309
    %v2311 = vpop.f32.mrf.mxu0
    %2312 = vdwg.mxu0
    %2313 = vmatpush.bf16.msra.mxu0 0
    %2314 = vmatpush.bf16.msra.mxu0 0
    %2315 = vmatpush.bf16.msra.mxu0 0
    %2316 = vmatpush.bf16.msra.mxu0 0
    %2317 = vmatpush.bf16.msra.mxu0 0
    %2318 = vmatpush.bf16.msra.mxu0 0
    %2319 = vmatpush.bf16.msra.mxu0 %v1755
    %2320 = vmatpush.bf16.msra.mxu0 %v1754
    %2321 = vmatmul.bf16.gmra.mxu0 %v2272
    %v2322 = vpop.f32.mrf.mxu0
    %v2323 = vadd.f32 %v1647, %v2322
    %v2324 = vpop.f32.mrf.mxu0
    %2325 = vdwg.mxu0
    %2326 = vmatpush.bf16.msra.mxu0 0
    %2327 = vmatpush.bf16.msra.mxu0 0
    %2328 = vmatpush.bf16.msra.mxu0 0
    %2329 = vmatpush.bf16.msra.mxu0 0
    %2330 = vmatpush.bf16.msra.mxu0 0
    %2331 = vmatpush.bf16.msra.mxu0 0
    %2332 = vmatpush.bf16.msra.mxu0 %v1780
    %2333 = vmatpush.bf16.msra.mxu0 %v1779
    %2334 = vmatmul.bf16.gmra.mxu0 %v2272
    %v2335 = vpop.f32.mrf.mxu0
    %v2336 = vadd.f32 %v1648, %v2335
    %v2337 = vpop.f32.mrf.mxu0
    %2338 = vdwg.mxu0
    %2339 = vmatpush.bf16.msra.mxu0 0
    %2340 = vmatpush.bf16.msra.mxu0 0
    %2341 = vmatpush.bf16.msra.mxu0 0
    %2342 = vmatpush.bf16.msra.mxu0 0
    %2343 = vmatpush.bf16.msra.mxu0 0
    %2344 = vmatpush.bf16.msra.mxu0 0
    %2345 = vmatpush.bf16.msra.mxu0 %v1805
    %2346 = vmatpush.bf16.msra.mxu0 %v1804
    %2347 = vmatmul.bf16.gmra.mxu0 %v2272
    %v2348 = vpop.f32.mrf.mxu0
    %v2349 = vadd.f32 %v1649, %v2348
    %v2350 = vpop.f32.mrf.mxu0
    %2351 = vdwg.mxu0
    %2352 = vmatpush.bf16.msra.mxu0 0
    %2353 = vmatpush.bf16.msra.mxu0 0
    %2354 = vmatpush.bf16.msra.mxu0 0
    %2355 = vmatpush.bf16.msra.mxu0 0
    %2356 = vmatpush.bf16.msra.mxu0 0
    %2357 = vmatpush.bf16.msra.mxu0 0
    %2358 = vmatpush.bf16.msra.mxu0 %v1830
    %2359 = vmatpush.bf16.msra.mxu0 %v1829
    %2360 = vmatmul.bf16.gmra.mxu0 %v2272
    %v2361 = vpop.f32.mrf.mxu0
    %v2362 = vadd.f32 %v1650, %v2361
    %v2363 = vpop.f32.mrf.mxu0
    %2364 = vdwg.mxu0
    %2365 = vmatpush.bf16.msra.mxu0 0
    %2366 = vmatpush.bf16.msra.mxu0 0
    %2367 = vmatpush.bf16.msra.mxu0 0
    %2368 = vmatpush.bf16.msra.mxu0 0
    %2369 = vmatpush.bf16.msra.mxu0 0
    %2370 = vmatpush.bf16.msra.mxu0 0
    %2371 = vmatpush.bf16.msra.mxu0 %v1855
    %2372 = vmatpush.bf16.msra.mxu0 %v1854
    %2373 = vmatmul.bf16.gmra.mxu0 %v2272
    %v2374 = vpop.f32.mrf.mxu0
    %v2375 = vadd.f32 %v1651, %v2374
    %v2376 = vpop.f32.mrf.mxu0
    %2377 = vdwg.mxu0
    %2378 = vmatpush.bf16.msra.mxu0 0
    %2379 = vmatpush.bf16.msra.mxu0 0
    %2380 = vmatpush.bf16.msra.mxu0 0
    %2381 = vmatpush.bf16.msra.mxu0 0
    %2382 = vmatpush.bf16.msra.mxu0 0
    %2383 = vmatpush.bf16.msra.mxu0 0
    %2384 = vmatpush.bf16.msra.mxu0 %v1880
    %2385 = vmatpush.bf16.msra.mxu0 %v1879
    %2386 = vmatmul.bf16.gmra.mxu0 %v2272
    %v2387 = vpop.f32.mrf.mxu0
    %v2388 = vadd.f32 %v1652, %v2387
    %v2389 = vpop.f32.mrf.mxu0
    %2390 = vdwg.mxu0
    %2391 = vmatpush.bf16.msra.mxu0 0
    %2392 = vmatpush.bf16.msra.mxu0 0
    %2393 = vmatpush.bf16.msra.mxu0 0
    %2394 = vmatpush.bf16.msra.mxu0 0
    %2395 = vmatpush.bf16.msra.mxu0 0
    %2396 = vmatpush.bf16.msra.mxu0 0
    %2397 = vmatpush.bf16.msra.mxu0 %v1905
    %2398 = vmatpush.bf16.msra.mxu0 %v1904
    %2399 = vmatmul.bf16.gmra.mxu0 %v2272
    %v2400 = vpop.f32.mrf.mxu0
    %v2401 = vadd.f32 %v1653, %v2400
    %v2402 = vpop.f32.mrf.mxu0
    %2403 = vdwg.mxu0
    %2404 = vmatpush.bf16.msra.mxu0 0
    %2405 = vmatpush.bf16.msra.mxu0 0
    %2406 = vmatpush.bf16.msra.mxu0 0
    %2407 = vmatpush.bf16.msra.mxu0 0
    %2408 = vmatpush.bf16.msra.mxu0 0
    %2409 = vmatpush.bf16.msra.mxu0 0
    %2410 = vmatpush.bf16.msra.mxu0 %v1930
    %2411 = vmatpush.bf16.msra.mxu0 %v1929
    %2412 = vmatmul.bf16.gmra.mxu0 %v2272
    %v2413 = vpop.f32.mrf.mxu0
    %v2414 = vadd.f32 %v1654, %v2413
    %v2415 = vpop.f32.mrf.mxu0
    %2416 = vdwg.mxu0
    %2417 = vmatpush.bf16.msra.mxu0 0
    %2418 = vmatpush.bf16.msra.mxu0 0
    %2419 = vmatpush.bf16.msra.mxu0 0
    %2420 = vmatpush.bf16.msra.mxu0 0
    %2421 = vmatpush.bf16.msra.mxu0 0
    %2422 = vmatpush.bf16.msra.mxu0 0
    %2423 = vmatpush.bf16.msra.mxu0 %v1955
    %2424 = vmatpush.bf16.msra.mxu0 %v1954
    %2425 = vmatmul.bf16.gmra.mxu0 %v2272
    %v2426 = vpop.f32.mrf.mxu0
    %v2427 = vadd.f32 %v1655, %v2426
    %v2428 = vpop.f32.mrf.mxu0
    %2429 = vdwg.mxu0
    %v2430 = vpack.c.bf16 %v2284, %v2284
    %v2431 = vpack.c.bf16 %v2297, %v2297
    %v2432 = vpack.c.bf16 %v2310, %v2310
    %v2433 = vpack.c.bf16 %v2323, %v2323
    %v2434 = vpack.c.bf16 %v2336, %v2336
    %v2435 = vpack.c.bf16 %v2349, %v2349
    %v2436 = vpack.c.bf16 %v2362, %v2362
    %v2437 = vpack.c.bf16 %v2375, %v2375
    %v2439 = vsel %vm591, %v2430, 0
    %v2442 = vsel %vm591, %v2434, 0
    %2444 = vmatpush.bf16.xpose.msra.mxu0 0
    %2445 = vmatpush.bf16.xpose.msra.mxu0 0
    %2446 = vmatpush.bf16.xpose.msra.mxu0 0
    %2447 = vmatpush.bf16.xpose.msra.mxu0 0
    %2448 = vmatpush.bf16.xpose.msra.mxu0 0
    %2449 = vmatpush.bf16.xpose.msra.mxu0 0
    %2450 = vmatpush.bf16.xpose.msra.mxu0 0
    %2451 = vmatpush.bf16.xpose.msra.mxu0 %v2442
    %2452 = vmatmul.bf16.gmra.mxu0 %v2439
    %v2453 = vpop.f32.mrf.mxu0
    %v2454 = vadd.f32 0.0, %v2453
    %v2455 = vpop.f32.mrf.mxu0
    %2456 = vdwg.mxu0
    %v2458 = vsel %vm591, %v2431, 0
    %v2461 = vsel %vm591, %v2435, 0
    %2463 = vmatpush.bf16.xpose.msra.mxu0 0
    %2464 = vmatpush.bf16.xpose.msra.mxu0 0
    %2465 = vmatpush.bf16.xpose.msra.mxu0 0
    %2466 = vmatpush.bf16.xpose.msra.mxu0 0
    %2467 = vmatpush.bf16.xpose.msra.mxu0 0
    %2468 = vmatpush.bf16.xpose.msra.mxu0 0
    %2469 = vmatpush.bf16.xpose.msra.mxu0 0
    %2470 = vmatpush.bf16.xpose.msra.mxu0 %v2461
    %2471 = vmatmul.bf16.gmra.mxu0 %v2458
    %v2472 = vpop.f32.mrf.mxu0
    %v2473 = vadd.f32 0.0, %v2472
    %v2474 = vpop.f32.mrf.mxu0
    %2475 = vdwg.mxu0
    %v2477 = vsel %vm591, %v2432, 0
    %v2480 = vsel %vm591, %v2436, 0
    %2482 = vmatpush.bf16.xpose.msra.mxu0 0
    %2483 = vmatpush.bf16.xpose.msra.mxu0 0
    %2484 = vmatpush.bf16.xpose.msra.mxu0 0
    %2485 = vmatpush.bf16.xpose.msra.mxu0 0
    %2486 = vmatpush.bf16.xpose.msra.mxu0 0
    %2487 = vmatpush.bf16.xpose.msra.mxu0 0
    %2488 = vmatpush.bf16.xpose.msra.mxu0 0
    %2489 = vmatpush.bf16.xpose.msra.mxu0 %v2480
    %2490 = vmatmul.bf16.gmra.mxu0 %v2477
    %v2491 = vpop.f32.mrf.mxu0
    %v2492 = vadd.f32 0.0, %v2491
    %v2493 = vpop.f32.mrf.mxu0
    %2494 = vdwg.mxu0
    %v2496 = vsel %vm591, %v2433, 0
    %v2499 = vsel %vm591, %v2437, 0
    %2501 = vmatpush.bf16.xpose.msra.mxu0 0
    %2502 = vmatpush.bf16.xpose.msra.mxu0 0
    %2503 = vmatpush.bf16.xpose.msra.mxu0 0
    %2504 = vmatpush.bf16.xpose.msra.mxu0 0
    %2505 = vmatpush.bf16.xpose.msra.mxu0 0
    %2506 = vmatpush.bf16.xpose.msra.mxu0 0
    %2507 = vmatpush.bf16.xpose.msra.mxu0 0
    %2508 = vmatpush.bf16.xpose.msra.mxu0 %v2499
    %2509 = vmatmul.bf16.gmra.mxu0 %v2496
    %v2510 = vpop.f32.mrf.mxu0
    %v2511 = vadd.f32 0.0, %v2510
    %v2512 = vpop.f32.mrf.mxu0
    %2513 = vdwg.mxu0
    %v2514 = vsel %vm591, %v2454, -inf
    %2515 = vmax.xlane.f32.xlu0 %v2514
    %v2516 = vpop.xlane.xlu0 %2515
    %v2517 = vsel %vm591, %v2473, -inf
    %2518 = vmax.xlane.f32.xlu0 %v2517
    %v2519 = vpop.xlane.xlu0 %2518
    %v2520 = vsel %vm591, %v2492, -inf
    %2521 = vmax.xlane.f32.xlu0 %v2520
    %v2522 = vpop.xlane.xlu0 %2521
    %v2523 = vsel %vm591, %v2511, -inf
    %2524 = vmax.xlane.f32.xlu0 %v2523
    %v2525 = vpop.xlane.xlu0 %2524
    %v2526 = vsub.f32 %v2454, %v2516
    %v2527 = vsub.f32 %v2473, %v2519
    %v2528 = vsub.f32 %v2492, %v2522
    %v2529 = vsub.f32 %v2511, %v2525
    %v2530 = vmul.f32 %v2526, 1.442695
    %v2531 = vpow.pop %v2530
    %v2532 = vmul.f32 %v2527, 1.442695
    %v2533 = vpow.pop %v2532
    %v2534 = vmul.f32 %v2528, 1.442695
    %v2535 = vpow.pop %v2534
    %v2536 = vmul.f32 %v2529, 1.442695
    %v2537 = vpow.pop %v2536
    %v2538 = vsel %vm591, %v2531, 0.0
    %2539 = vadd.xlane.f32.xlu0 %v2538
    %v2540 = vpop.xlane.xlu0 %2539
    %v2541 = vsel %vm591, %v2533, 0.0
    %2542 = vadd.xlane.f32.xlu0 %v2541
    %v2543 = vpop.xlane.xlu0 %2542
    %v2544 = vsel %vm591, %v2535, 0.0
    %2545 = vadd.xlane.f32.xlu0 %v2544
    %v2546 = vpop.xlane.xlu0 %2545
    %v2547 = vsel %vm591, %v2537, 0.0
    %2548 = vadd.xlane.f32.xlu0 %v2547
    %v2549 = vpop.xlane.xlu0 %2548
    %v2550 = vrcp.pop %v2540
    %v2551 = vrcp.pop %v2543
    %v2552 = vrcp.pop %v2546
    %v2553 = vrcp.pop %v2549
    %v2554 = vmul.f32 %v2531, %v2550
    %v2555 = vmul.f32 %v2533, %v2551
    %v2556 = vmul.f32 %v2535, %v2552
    %v2557 = vmul.f32 %v2537, %v2553
    %v2558 = vpack.c.bf16 %v2554, %v2554
    %v2559 = vpack.c.bf16 %v2555, %v2555
    %v2560 = vpack.c.bf16 %v2556, %v2556
    %v2561 = vpack.c.bf16 %v2557, %v2557
    %v2562 = vpack.c.bf16 %v2388, %v2388
    %v2563 = vpack.c.bf16 %v2401, %v2401
    %v2564 = vpack.c.bf16 %v2414, %v2414
    %v2565 = vpack.c.bf16 %v2427, %v2427
    %v2567 = vsel %vm591, %v2558, 0
    %v2570 = vsel %vm723, %v2562, 0
    %2572 = vmatpush.bf16.msra.mxu0 0
    %2573 = vmatpush.bf16.msra.mxu0 0
    %2574 = vmatpush.bf16.msra.mxu0 0
    %2575 = vmatpush.bf16.msra.mxu0 0
    %2576 = vmatpush.bf16.msra.mxu0 0
    %2577 = vmatpush.bf16.msra.mxu0 0
    %2578 = vmatpush.bf16.msra.mxu0 0
    %2579 = vmatpush.bf16.msra.mxu0 %v2570
    %2580 = vmatmul.bf16.gmra.mxu0 %v2567
    %v2581 = vpop.f32.mrf.mxu0
    %v2582 = vadd.f32 0.0, %v2581
    %v2583 = vpop.f32.mrf.mxu0
    %2584 = vdwg.mxu0
    %v2586 = vsel %vm591, %v2559, 0
    %v2589 = vsel %vm723, %v2563, 0
    %2591 = vmatpush.bf16.msra.mxu0 0
    %2592 = vmatpush.bf16.msra.mxu0 0
    %2593 = vmatpush.bf16.msra.mxu0 0
    %2594 = vmatpush.bf16.msra.mxu0 0
    %2595 = vmatpush.bf16.msra.mxu0 0
    %2596 = vmatpush.bf16.msra.mxu0 0
    %2597 = vmatpush.bf16.msra.mxu0 0
    %2598 = vmatpush.bf16.msra.mxu0 %v2589
    %2599 = vmatmul.bf16.gmra.mxu0 %v2586
    %v2600 = vpop.f32.mrf.mxu0
    %v2601 = vadd.f32 0.0, %v2600
    %v2602 = vpop.f32.mrf.mxu0
    %2603 = vdwg.mxu0
    %v2605 = vsel %vm591, %v2560, 0
    %v2608 = vsel %vm723, %v2564, 0
    %2610 = vmatpush.bf16.msra.mxu0 0
    %2611 = vmatpush.bf16.msra.mxu0 0
    %2612 = vmatpush.bf16.msra.mxu0 0
    %2613 = vmatpush.bf16.msra.mxu0 0
    %2614 = vmatpush.bf16.msra.mxu0 0
    %2615 = vmatpush.bf16.msra.mxu0 0
    %2616 = vmatpush.bf16.msra.mxu0 0
    %2617 = vmatpush.bf16.msra.mxu0 %v2608
    %2618 = vmatmul.bf16.gmra.mxu0 %v2605
    %v2619 = vpop.f32.mrf.mxu0
    %v2620 = vadd.f32 0.0, %v2619
    %v2621 = vpop.f32.mrf.mxu0
    %2622 = vdwg.mxu0
    %v2624 = vsel %vm591, %v2561, 0
    %v2627 = vsel %vm723, %v2565, 0
    %2629 = vmatpush.bf16.msra.mxu0 0
    %2630 = vmatpush.bf16.msra.mxu0 0
    %2631 = vmatpush.bf16.msra.mxu0 0
    %2632 = vmatpush.bf16.msra.mxu0 0
    %2633 = vmatpush.bf16.msra.mxu0 0
    %2634 = vmatpush.bf16.msra.mxu0 0
    %2635 = vmatpush.bf16.msra.mxu0 0
    %2636 = vmatpush.bf16.msra.mxu0 %v2627
    %2637 = vmatmul.bf16.gmra.mxu0 %v2624
    %v2638 = vpop.f32.mrf.mxu0
    %v2639 = vadd.f32 0.0, %v2638
    %v2640 = vpop.f32.mrf.mxu0
    %2641 = vdwg.mxu0
    %v2642 = vpack.c.bf16 %v2582, %v2582
    %v2643 = vpack.c.bf16 %v2601, %v2601
    %v2644 = vpack.c.bf16 %v2620, %v2620
    %v2645 = vpack.c.bf16 %v2639, %v2639
    %v2647 = vsel %vm591, %v2642, 0
    %2649 = vmatpush.bf16.msra.mxu0 0
    %2650 = vmatpush.bf16.msra.mxu0 0
    %2651 = vmatpush.bf16.msra.mxu0 0
    %2652 = vmatpush.bf16.msra.mxu0 0
    %2653 = vmatpush.bf16.msra.mxu0 0
    %2654 = vmatpush.bf16.msra.mxu0 0
    %2655 = vmatpush.bf16.msra.mxu0 0
    %2656 = vmatpush.bf16.msra.mxu0 %v2191
    %2657 = vmatmul.bf16.gmra.mxu0 %v2647
    %v2658 = vpop.f32.mrf.mxu0
    %v2659 = vadd.f32 0.0, %v2658
    %v2660 = vpop.f32.mrf.mxu0
    %2661 = vdwg.mxu0
    %v2663 = vsel %vm591, %v2643, 0
    %2665 = vmatpush.bf16.msra.mxu0 0
    %2666 = vmatpush.bf16.msra.mxu0 0
    %2667 = vmatpush.bf16.msra.mxu0 0
    %2668 = vmatpush.bf16.msra.mxu0 0
    %2669 = vmatpush.bf16.msra.mxu0 0
    %2670 = vmatpush.bf16.msra.mxu0 0
    %2671 = vmatpush.bf16.msra.mxu0 0
    %2672 = vmatpush.bf16.msra.mxu0 %v2210
    %2673 = vmatmul.bf16.gmra.mxu0 %v2663
    %v2674 = vpop.f32.mrf.mxu0
    %v2675 = vadd.f32 0.0, %v2674
    %v2676 = vpop.f32.mrf.mxu0
    %2677 = vdwg.mxu0
    %v2679 = vsel %vm591, %v2644, 0
    %2681 = vmatpush.bf16.msra.mxu0 0
    %2682 = vmatpush.bf16.msra.mxu0 0
    %2683 = vmatpush.bf16.msra.mxu0 0
    %2684 = vmatpush.bf16.msra.mxu0 0
    %2685 = vmatpush.bf16.msra.mxu0 0
    %2686 = vmatpush.bf16.msra.mxu0 0
    %2687 = vmatpush.bf16.msra.mxu0 0
    %2688 = vmatpush.bf16.msra.mxu0 %v2229
    %2689 = vmatmul.bf16.gmra.mxu0 %v2679
    %v2690 = vpop.f32.mrf.mxu0
    %v2691 = vadd.f32 0.0, %v2690
    %v2692 = vpop.f32.mrf.mxu0
    %2693 = vdwg.mxu0
    %v2695 = vsel %vm591, %v2645, 0
    %2697 = vmatpush.bf16.msra.mxu0 0
    %2698 = vmatpush.bf16.msra.mxu0 0
    %2699 = vmatpush.bf16.msra.mxu0 0
    %2700 = vmatpush.bf16.msra.mxu0 0
    %2701 = vmatpush.bf16.msra.mxu0 0
    %2702 = vmatpush.bf16.msra.mxu0 0
    %2703 = vmatpush.bf16.msra.mxu0 0
    %2704 = vmatpush.bf16.msra.mxu0 %v2248
    %2705 = vmatmul.bf16.gmra.mxu0 %v2695
    %v2706 = vpop.f32.mrf.mxu0
    %v2707 = vadd.f32 0.0, %v2706
    %v2708 = vpop.f32.mrf.mxu0
    %2709 = vdwg.mxu0
    %v2710 = vsel %vm117, %v2659, 0.0
    %v2711 = vsel %vm117, %v2675, 0.0
    %v2712 = vadd.f32 %v2710, %v2711
    %v2713 = vsel %vm117, %v2691, 0.0
    %v2714 = vadd.f32 %v2712, %v2713
    %v2715 = vsel %vm117, %v2707, 0.0
    %v2716 = vadd.f32 %v2714, %v2715
    %s2717 = scalar_lea.vmem %s8, 1
    %v2718 = vld [vmem:[%s2717] sm:$0x1]
    %v2720 = vperm.slane %v2718, 0
    %v2722 = vadd.f32 %v2269, %v2720
    %v2723 = vadd.f32 %v2716, %v2720
    %v2724 = vadd.f32 %v1562, %v2722
    %v2725 = vadd.f32 %v1563, %v2723
    %s2726 = scalar_lea.vmem %s9, 1
    %v2727 = vld [vmem:[%s2726] sm:$0x1]
    %s2728 = scalar_lea.vmem %s10, 1
    %v2729 = vld [vmem:[%s2728] sm:$0x1]
    %v2730 = vsel %vm117, %v2724, 0.0
    %2731 = vadd.xlane.f32.xlu0 %v2730
    %v2732 = vpop.xlane.xlu0 %2731
    %v2733 = vsel %vm117, %v2725, 0.0
    %2734 = vadd.xlane.f32.xlu0 %v2733
    %v2735 = vpop.xlane.xlu0 %2734
    %v2736 = vmul.f32 %v2732, %v130
    %v2737 = vmul.f32 %v2735, %v130
    %v2738 = vsub.f32 %v2724, %v2736
    %v2739 = vsub.f32 %v2725, %v2737
    %v2740 = vmul.f32 %v2738, %v2738
    %v2741 = vmul.f32 %v2739, %v2739
    %v2742 = vsel %vm117, %v2740, 0.0
    %2743 = vadd.xlane.f32.xlu0 %v2742
    %v2744 = vpop.xlane.xlu0 %2743
    %v2745 = vsel %vm117, %v2741, 0.0
    %2746 = vadd.xlane.f32.xlu0 %v2745
    %v2747 = vpop.xlane.xlu0 %2746
    %v2748 = vmul.f32 %v2744, %v130
    %v2749 = vmul.f32 %v2747, %v130
    %v2750 = vadd.f32 %v2748, 1e-12
    %v2751 = vadd.f32 %v2749, 1e-12
    %v2752 = vrsqrt.pop %v2750
    %v2753 = vmul.f32 %v2752, %v2750
    %v2754 = vmul.f32 %v2753, %v2752
    %v2755 = vmul.f32 0.5, %v2754
    %v2756 = vsub.f32 1.5, %v2755
    %v2757 = vmul.f32 %v2752, %v2756
    %vm2758 = vweird.f32 %v2750
    %vm2759 = vweird.f32 %v2752
    %vm2760 = vmor %vm2758, %vm2759
    %v2761 = vsel %vm2760, %v2752, %v2757
    %v2762 = vrsqrt.pop %v2751
    %v2763 = vmul.f32 %v2762, %v2751
    %v2764 = vmul.f32 %v2763, %v2762
    %v2765 = vmul.f32 0.5, %v2764
    %v2766 = vsub.f32 1.5, %v2765
    %v2767 = vmul.f32 %v2762, %v2766
    %vm2768 = vweird.f32 %v2751
    %vm2769 = vweird.f32 %v2762
    %vm2770 = vmor %vm2768, %vm2769
    %v2771 = vsel %vm2770, %v2762, %v2767
    %v2772 = vmul.f32 %v2738, %v2761
    %v2773 = vmul.f32 %v2739, %v2771
    %v2775 = vperm.slane %v2727, 0
    %v2777 = vmul.f32 %v2772, %v2775
    %v2778 = vmul.f32 %v2773, %v2775
    %v2780 = vperm.slane %v2729, 0
    %v2782 = vadd.f32 %v2777, %v2780
    %v2783 = vadd.f32 %v2778, %v2780
    %v2784 = vpack.c.bf16 %v2783, %v2782
    %s2785 = scalar_lea.vmem %s11, 16
    %v2786 = vld [vmem:[%s2785] sm:$0xf]
    %v2787 = vld [vmem:[%s2785 + $0x4] sm:$0xf]
    %v2788 = vld [vmem:[%s2785 + $0x8] sm:$0xf]
    %v2789 = vld [vmem:[%s2785 + $0xc] sm:$0xf]
    %s2790 = scalar_lea.vmem %s12, 1
    %v2791 = vld [vmem:[%s2790] sm:$0x1]
    %v2793 = vperm.slane %v2791, 0
    %v2799 = vunpack.c.l.b16 %v2786
    %v2800 = vunpack.c.l.b16 %v2787
    %v2801 = vunpack.c.l.b16 %v2788
    %v2802 = vunpack.c.l.b16 %v2789
    %v2803 = vpack.c.b16 %v2800, %v2799
    %v2804 = vpack.c.b16 %v2802, %v2801
    %v2808 = vsel %vm117, %v2784, 0
    %2810 = vmatpush.bf16.msra.mxu0 0
    %2811 = vmatpush.bf16.msra.mxu0 0
    %2812 = vmatpush.bf16.msra.mxu0 0
    %2813 = vmatpush.bf16.msra.mxu0 0
    %2814 = vmatpush.bf16.msra.mxu0 0
    %2815 = vmatpush.bf16.msra.mxu0 0
    %2816 = vmatpush.bf16.msra.mxu0 %v2804
    %2817 = vmatpush.bf16.msra.mxu0 %v2803
    %2818 = vmatmul.bf16.gmra.mxu0 %v2808
    %v2819 = vpop.f32.mrf.mxu0
    %v2820 = vadd.f32 %v2793, %v2819
    %v2821 = vpop.f32.mrf.mxu0
    %v2822 = vadd.f32 %v2793, %v2821
    %2823 = vdwg.mxu0
    %v2824 = vmul.f32 %v2820, %v2820
    %v2825 = vmul.f32 %v2822, %v2822
    %v2826 = vmul.f32 %v2820, %v2824
    %v2827 = vmul.f32 %v2822, %v2825
    %v2828 = vmul.f32 %v2826, 0.044715
    %v2829 = vmul.f32 %v2827, 0.044715
    %v2830 = vadd.f32 %v2820, %v2828
    %v2831 = vadd.f32 %v2822, %v2829
    %v2832 = vmul.f32 %v2830, 0.7978846
    %v2833 = vmul.f32 %v2831, 0.7978846
    %v2834 = vtanh.pop %v2832
    %v2835 = vtanh.pop %v2833
    %v2836 = vadd.f32 %v2834, 1.0
    %v2837 = vadd.f32 %v2835, 1.0
    %v2838 = vmul.f32 %v2836, 0.5
    %v2839 = vmul.f32 %v2837, 0.5
    %v2840 = vmul.f32 %v2820, %v2838
    %v2841 = vmul.f32 %v2822, %v2839
    %v2842 = vpack.c.bf16 %v2841, %v2840
    %s2843 = scalar_lea.vmem %s13, 32
    %v2844 = vld [vmem:[%s2843] sm:$0xf]
    %v2845 = vld [vmem:[%s2843 + $0x4] sm:$0xf]
    %v2846 = vld [vmem:[%s2843 + $0x8] sm:$0xf]
    %v2847 = vld [vmem:[%s2843 + $0xc] sm:$0xf]
    %v2848 = vld [vmem:[%s2843 + $0x10] sm:$0xf]
    %v2849 = vld [vmem:[%s2843 + $0x14] sm:$0xf]
    %v2850 = vld [vmem:[%s2843 + $0x18] sm:$0xf]
    %v2851 = vld [vmem:[%s2843 + $0x1c] sm:$0xf]
    %s2852 = scalar_lea.vmem %s14, 1
    %v2853 = vld [vmem:[%s2852] sm:$0x1]
    %v2855 = vperm.slane %v2853, 0
    %v2865 = vunpack.c.l.b16 %v2844
    %v2866 = vunpack.c.l.b16 %v2845
    %v2867 = vunpack.c.l.b16 %v2846
    %v2868 = vunpack.c.l.b16 %v2847
    %v2869 = vunpack.c.l.b16 %v2848
    %v2870 = vunpack.c.l.b16 %v2849
    %v2871 = vunpack.c.l.b16 %v2850
    %v2872 = vunpack.c.l.b16 %v2851
    %v2873 = vpack.c.b16 %v2866, %v2865
    %v2874 = vpack.c.b16 %v2868, %v2867
    %v2875 = vpack.c.b16 %v2870, %v2869
    %v2876 = vpack.c.b16 %v2872, %v2871
    %v2882 = vsel %vm1488, %v2842, 0
    %2884 = vmatpush.bf16.msra.mxu0 0
    %2885 = vmatpush.bf16.msra.mxu0 0
    %2886 = vmatpush.bf16.msra.mxu0 0
    %2887 = vmatpush.bf16.msra.mxu0 0
    %2888 = vmatpush.bf16.msra.mxu0 %v2876
    %2889 = vmatpush.bf16.msra.mxu0 %v2875
    %2890 = vmatpush.bf16.msra.mxu0 %v2874
    %2891 = vmatpush.bf16.msra.mxu0 %v2873
    %2892 = vmatmul.bf16.gmra.mxu0 %v2882
    %v2893 = vpop.f32.mrf.mxu0
    %v2894 = vadd.f32 %v2855, %v2893
    %v2895 = vpop.f32.mrf.mxu0
    %v2896 = vadd.f32 %v2855, %v2895
    %2897 = vdwg.mxu0
    %v2898 = vadd.f32 %v2782, %v2894
    %v2899 = vadd.f32 %v2783, %v2896
    %s2900 = scalar_lea.vmem %s15, 1
    %v2901 = vld [vmem:[%s2900] sm:$0x1]
    %s2902 = scalar_lea.vmem %s16, 1
    %v2903 = vld [vmem:[%s2902] sm:$0x1]
    %v2904 = vsel %vm117, %v2898, 0.0
    %2905 = vadd.xlane.f32.xlu0 %v2904
    %v2906 = vpop.xlane.xlu0 %2905
    %v2907 = vsel %vm117, %v2899, 0.0
    %2908 = vadd.xlane.f32.xlu0 %v2907
    %v2909 = vpop.xlane.xlu0 %2908
    %v2910 = vmul.f32 %v2906, %v130
    %v2911 = vmul.f32 %v2909, %v130
    %v2912 = vsub.f32 %v2898, %v2910
    %v2913 = vsub.f32 %v2899, %v2911
    %v2914 = vmul.f32 %v2912, %v2912
    %v2915 = vmul.f32 %v2913, %v2913
    %v2916 = vsel %vm117, %v2914, 0.0
    %2917 = vadd.xlane.f32.xlu0 %v2916
    %v2918 = vpop.xlane.xlu0 %2917
    %v2919 = vsel %vm117, %v2915, 0.0
    %2920 = vadd.xlane.f32.xlu0 %v2919
    %v2921 = vpop.xlane.xlu0 %2920
    %v2922 = vmul.f32 %v2918, %v130
    %v2923 = vmul.f32 %v2921, %v130
    %v2924 = vadd.f32 %v2922, 1e-12
    %v2925 = vadd.f32 %v2923, 1e-12
    %v2926 = vrsqrt.pop %v2924
    %v2927 = vmul.f32 %v2926, %v2924
    %v2928 = vmul.f32 %v2927, %v2926
    %v2929 = vmul.f32 0.5, %v2928
    %v2930 = vsub.f32 1.5, %v2929
    %v2931 = vmul.f32 %v2926, %v2930
    %vm2932 = vweird.f32 %v2924
    %vm2933 = vweird.f32 %v2926
    %vm2934 = vmor %vm2932, %vm2933
    %v2935 = vsel %vm2934, %v2926, %v2931
    %v2936 = vrsqrt.pop %v2925
    %v2937 = vmul.f32 %v2936, %v2925
    %v2938 = vmul.f32 %v2937, %v2936
    %v2939 = vmul.f32 0.5, %v2938
    %v2940 = vsub.f32 1.5, %v2939
    %v2941 = vmul.f32 %v2936, %v2940
    %vm2942 = vweird.f32 %v2925
    %vm2943 = vweird.f32 %v2936
    %vm2944 = vmor %vm2942, %vm2943
    %v2945 = vsel %vm2944, %v2936, %v2941
    %v2946 = vmul.f32 %v2912, %v2935
    %v2947 = vmul.f32 %v2913, %v2945
    %v2949 = vperm.slane %v2901, 0
    %v2951 = vmul.f32 %v2946, %v2949
    %v2952 = vmul.f32 %v2947, %v2949
    %v2954 = vperm.slane %v2903, 0
    %v2956 = vadd.f32 %v2951, %v2954
    %v2957 = vadd.f32 %v2952, %v2954
    %2958 = vst.msk [vmem:[#allocation2] sm:$0xff] %vm117, %v2956
    %2959 = vst.msk [vmem:[#allocation2 + $0x8] sm:$0xff] %vm117, %v2957
    // Predicated region
    $region70: #{bert_embedder_forward.1} parent=1 // pred_check
      _
    $region71: #{bert_embedder_forward.1} parent=1 // pred_check_branch
      %2961 = sbr.rel (0) target = $region73
    $region72: #{bert_embedder_forward.1} parent=1 // pred_region
      %2963 = vsyncadd [#allocation3], 0
      %s2964 = sshll.u32 [#allocation2], 4
      %s2965 = int_to_ptr.vmem [resolvable:$true] %s2964
      %s2966 = sshll.u32 %s17, 4
      %s2967 = int_to_ptr.hbm [resolvable:$true] %s2966
      %2972 = dma.vmem_to_hbm [thread:$0]  %s2965, 256, %s2967, [#allocation3], 128, 128, 8
    $region73: #{bert_embedder_forward.1} parent=1 // pred_fallthru
      _
    // Predicated region
    $region74: #{bert_embedder_forward.1} parent=1 // pred_check
      _
    $region75: #{bert_embedder_forward.1} parent=1 // pred_check_branch
      %2974 = sbr.rel (0) target = $region77
    $region76: #{bert_embedder_forward.1} parent=1 // pred_region
      %2976 = dma.done [#allocation3], 256
    $region77: #{bert_embedder_forward.1} parent=1 // pred_fallthru
      _
    %2977 = vsyncpa [#allocation3], 1

</llo_original>
